<compile_context>
chip_gen: v6e
topology: v6e:2x2x1
jax: 0.10.0
libtpu: 0.0.40
codegen_flags: <defaults>
</compile_context>

<pallas_src>
import functools
import math

import jax
import jax.numpy as jnp
from jax import lax
from jax.experimental import pallas as pl
from jax.experimental.pallas import tpu as pltpu


# ------------------------------ fused kernel ------------------------------- #

def _fused_bert_kernel(
    emb_ref, mask_ref, eg_ref, eb_ref,
    qkvw_ref, qkvb_ref, wo_ref, bo_ref, g1_ref, b1_ref,
    wi_ref, bi_ref, wo2_ref, bo2_ref, g2_ref, b2_ref,
    pw_ref, pb_ref, iw_ref, ib_ref, sw_ref, sb_ref,
    intent_ref, slot_ref,
    *, batch, seq, hidden, num_layers, num_heads, eps):
  """Single grid step: full (B*S, H) forward pass, everything stays in VMEM/vregs."""
  dH = hidden // num_heads

  def layernorm(x, g, b):
    mu = jnp.mean(x, axis=-1, keepdims=True)
    var = jnp.mean((x - mu) ** 2, axis=-1, keepdims=True)
    return (x - mu) * lax.rsqrt(var + eps) * g + b

  def softmax_approx(y):
    # attention softmax: EUP approx reciprocal keeps the divide off the VALU chain
    m = jnp.max(y, axis=-1, keepdims=True)
    e = jnp.exp(y - m)
    return e * pl.reciprocal(jnp.sum(e, axis=-1, keepdims=True), approx=True)

  def softmax_exact(y):
    m = jnp.max(y, axis=-1, keepdims=True)
    e = jnp.exp(y - m)
    return e / jnp.sum(e, axis=-1, keepdims=True)

  def gelu(y):
    # TODO(synk): reference HF BERT uses exact erf-GELU; the tanh approximation
    # (max ~1e-3 deviation) is used for guaranteed Mosaic lowering.
    return 0.5 * y * (1.0 + jnp.tanh(0.7978845608028654 * (y + 0.044715 * y * y * y)))

  def sigmoid(y):
    # overflow-safe sigmoid routed through EUP tanh
    return 0.5 * (1.0 + jnp.tanh(0.5 * y))

  x = emb_ref[...].astype(jnp.float32)          # (B*S, H) summed embeddings
  amask = mask_ref[...].astype(jnp.float32)     # (B, S)  additive key mask

  # --- embedding LayerNorm ---
  h = layernorm(x, eg_ref[...], eb_ref[...])

  # --- transformer encoder (static, fully unrolled) ---
  for l in range(num_layers):
    # fused QKV projection: one (B*S, H) @ (H, 3H) MXU push per layer.
    # The 1/sqrt(dH) scale is already folded into the packed Q weights/bias.
    qkv = jnp.dot(h, qkvw_ref[l], preferred_element_type=jnp.float32) + qkvb_ref[l]

    ctx_rows = []
    for b in range(batch):
      r0 = b * seq
      mask_b = amask[b:b + 1, :]                                  # (1, S) over keys
      head_ctx = []
      for hd in range(num_heads):
        q_h = qkv[r0:r0 + seq, hd * dH:(hd + 1) * dH]
        k_h = qkv[r0:r0 + seq, hidden + hd * dH:hidden + (hd + 1) * dH]
        v_h = qkv[r0:r0 + seq, 2 * hidden + hd * dH:2 * hidden + (hd + 1) * dH]
        # scores = q @ k^T without materializing a transpose (NT contraction)
        s = lax.dot_general(q_h, k_h, (((1,), (1,)), ((), ())),
                            preferred_element_type=jnp.float32)   # (S, S)
        p = softmax_approx(s + mask_b)
        head_ctx.append(jnp.dot(p, v_h, preferred_element_type=jnp.float32))  # (S, dH)
      ctx_rows.append(jnp.concatenate(head_ctx, axis=-1))         # (S, H), heads on lanes
    ctx = jnp.concatenate(ctx_rows, axis=0)                       # (B*S, H)

    # fused head merge: one (B*S, H) @ (H, H) output projection per layer
    attn = jnp.dot(ctx, wo_ref[l], preferred_element_type=jnp.float32) + bo_ref[l]
    h = layernorm(attn + h, g1_ref[l], b1_ref[l])

    ffn = gelu(jnp.dot(h, wi_ref[l], preferred_element_type=jnp.float32) + bi_ref[l])
    ffn = jnp.dot(ffn, wo2_ref[l], preferred_element_type=jnp.float32) + bo2_ref[l]
    h = layernorm(ffn + h, g2_ref[l], b2_ref[l])

  # --- pooler + intent head on the [CLS] rows only (B rows, not B*S) ---
  h_cls = jnp.concatenate([h[b * seq:b * seq + 1, :] for b in range(batch)], axis=0)  # (B, H)
  pooled = jnp.tanh(jnp.dot(h_cls, pw_ref[...], preferred_element_type=jnp.float32)
                    + pb_ref[...])
  intent_logits = jnp.dot(pooled, iw_ref[...], preferred_element_type=jnp.float32) + ib_ref[...]
  intent_ref[...] = sigmoid(intent_logits)                        # (B, nI_pad) lane-dense

  # --- slot head: lane-dense padded logits; padded lanes carry -1e30 bias so the
  #     softmax assigns them ~0 probability and the valid lanes are exact. ---
  slot_logits = jnp.dot(h, sw_ref[...], preferred_element_type=jnp.float32) + sb_ref[...]
  slot_ref[...] = softmax_exact(slot_logits)                      # (B*S, nSl_pad)


# ------------------------------ Model config ------------------------------- #

class Config:
  vocab_size = 100
  hidden_size = 32
  num_layers = 2
  num_heads = 2
  intermediate_size = 64
  max_position = 32
  type_vocab_size = 2
  layer_norm_eps = 1e-12


LANE_PAD = 128  # lane-dense padding for the intent/slot head outputs


def init_params(key, cfg, num_intents, num_slots):
  """Conventional (PyTorch-like) parameter layout."""
  def nrm(k, shape, std=0.02):
    return std * jax.random.normal(k, shape, jnp.float32)

  keys = iter(jax.random.split(key, 64))
  H, I = cfg.hidden_size, cfg.intermediate_size
  p = {
      "word_emb": nrm(next(keys), (cfg.vocab_size, H)),
      "pos_emb": nrm(next(keys), (cfg.max_position, H)),
      "type_emb": nrm(next(keys), (cfg.type_vocab_size, H)),
      "emb_ln_g": jnp.ones((H,), jnp.float32),
      "emb_ln_b": jnp.zeros((H,), jnp.float32),
      "layers": [],
  }
  for _ in range(cfg.num_layers):
    p["layers"].append(dict(
        wq=nrm(next(keys), (H, H)), bq=jnp.zeros((H,), jnp.float32),
        wk=nrm(next(keys), (H, H)), bk=jnp.zeros((H,), jnp.float32),
        wv=nrm(next(keys), (H, H)), bv=jnp.zeros((H,), jnp.float32),
        wo=nrm(next(keys), (H, H)), bo=jnp.zeros((H,), jnp.float32),
        ln1_g=jnp.ones((H,), jnp.float32), ln1_b=jnp.zeros((H,), jnp.float32),
        wi=nrm(next(keys), (H, I)), bi=jnp.zeros((I,), jnp.float32),
        wo2=nrm(next(keys), (I, H)), bo2=jnp.zeros((H,), jnp.float32),
        ln2_g=jnp.ones((H,), jnp.float32), ln2_b=jnp.zeros((H,), jnp.float32),
    ))
  p["pool_w"] = nrm(next(keys), (H, H))
  p["pool_b"] = jnp.zeros((H,), jnp.float32)
  p["intent_w"] = nrm(next(keys), (H, num_intents))
  p["intent_b"] = jnp.zeros((num_intents,), jnp.float32)
  p["slot_w"] = nrm(next(keys), (H, num_slots))
  p["slot_b"] = jnp.zeros((num_slots,), jnp.float32)
  return p


def pack_params(params, cfg):
  """Repack weights into the fused-kernel layout.

  * Q/K/V fused per layer into a lane-dense (H, 3H) slab; the 1/sqrt(dH)
    attention scale is folded into the Q columns/bias at pack time.
  * Output projection / FFN / LayerNorm params stacked per layer.
  * Intent/slot head weights padded to 128 lanes (slot pad bias = -1e30 so the
    in-kernel softmax gives padded lanes zero probability).
  """
  H, nH = cfg.hidden_size, cfg.num_heads
  dH = H // nH
  scale = 1.0 / math.sqrt(dH)
  layers = params["layers"]

  qkv_w = jnp.stack([jnp.concatenate([l["wq"] * scale, l["wk"], l["wv"]], axis=1)
                     for l in layers])                                        # (L, H, 3H)
  qkv_b = jnp.stack([jnp.concatenate([l["bq"] * scale, l["bk"], l["bv"]])[None, :]
                     for l in layers])                                        # (L, 1, 3H)

  stack = lambda name: jnp.stack([l[name] for l in layers])                   # (L, ...)
  stack_row = lambda name: jnp.stack([l[name][None, :] for l in layers])      # (L, 1, N)

  def pad_head(w, b, pad_bias):
    n = w.shape[1]
    assert n <= LANE_PAD
    w_p = jnp.zeros((w.shape[0], LANE_PAD), w.dtype).at[:, :n].set(w)
    b_p = jnp.full((LANE_PAD,), pad_bias, w.dtype).at[:n].set(b)[None, :]
    return w_p, b_p

  iw, ib = pad_head(params["intent_w"], params["intent_b"], 0.0)
  sw, sb = pad_head(params["slot_w"], params["slot_b"], -1e30)

  return {
      "word_emb": params["word_emb"],
      "pos_emb": params["pos_emb"],
      "type_emb": params["type_emb"],
      "emb_ln_g": params["emb_ln_g"][None, :],
      "emb_ln_b": params["emb_ln_b"][None, :],
      "qkv_w": qkv_w, "qkv_b": qkv_b,
      "wo": stack("wo"), "bo": stack_row("bo"),
      "ln1_g": stack_row("ln1_g"), "ln1_b": stack_row("ln1_b"),
      "wi": stack("wi"), "bi": stack_row("bi"),
      "wo2": stack("wo2"), "bo2": stack_row("bo2"),
      "ln2_g": stack_row("ln2_g"), "ln2_b": stack_row("ln2_b"),
      "pool_w": params["pool_w"], "pool_b": params["pool_b"][None, :],
      "intent_w": iw, "intent_b": ib,
      "slot_w": sw, "slot_b": sb,
  }


# ------------------------------ Forward pass ------------------------------- #

_WEIGHT_ORDER = ("emb_ln_g", "emb_ln_b",
                 "qkv_w", "qkv_b", "wo", "bo", "ln1_g", "ln1_b",
                 "wi", "bi", "wo2", "bo2", "ln2_g", "ln2_b",
                 "pool_w", "pool_b", "intent_w", "intent_b",
                 "slot_w", "slot_b")


@functools.partial(jax.jit, static_argnums=(1, 4, 5))
def muti_joint_forward(packed, cfg, input_ids, attention_mask, num_intents, num_slots):
  B, S = input_ids.shape
  H = cfg.hidden_size
  nH = cfg.num_heads
  L = cfg.num_layers
  nI_pad = packed["intent_w"].shape[1]
  nSl_pad = packed["slot_w"].shape[1]

  # --- embedding gather (glue, stays in JAX); token_type_ids assumed all-zero ---
  we = jnp.take(packed["word_emb"], input_ids, axis=0)                  # (B, S, H)
  pe = packed["pos_emb"][:S][None, :, :]
  te = packed["type_emb"][0][None, None, :]
  emb = (we + pe + te).astype(jnp.float32).reshape(B * S, H)            # (B*S, H)

  # HF-style additive attention mask over keys: (1 - mask) * -10000
  add_mask = (1.0 - attention_mask.astype(jnp.float32)) * -10000.0      # (B, S)

  kernel = functools.partial(_fused_bert_kernel, batch=B, seq=S, hidden=H,
                             num_layers=L, num_heads=nH, eps=cfg.layer_norm_eps)

  def full_spec(arr):
    # whole array as one block -> fetched once, stays VMEM-resident
    return pl.BlockSpec(arr.shape, lambda i, n=arr.ndim: (0,) * n)

  weights = [packed[name] for name in _WEIGHT_ORDER]

  # Whole batch folded into one grid step (best for single-TC v5e/v6e; at this toy
  # size the per-step overhead and tiny MXU pushes dominate).  On v7x with large B,
  # split the folded batch across grid=(2,) with "parallel" semantics instead.
  intent_pad, slot_pad = pl.pallas_call(
      kernel,
      out_shape=(jax.ShapeDtypeStruct((B, nI_pad), jnp.float32),
                 jax.ShapeDtypeStruct((B * S, nSl_pad), jnp.float32)),
      grid=(1,),
      in_specs=[full_spec(emb), full_spec(add_mask)] + [full_spec(w) for w in weights],
      out_specs=(pl.BlockSpec((B, nI_pad), lambda i: (0, 0)),
                 pl.BlockSpec((B * S, nSl_pad), lambda i: (0, 0))),
      compiler_params=pltpu.CompilerParams(dimension_semantics=("arbitrary",)),
  )(emb, add_mask, *weights)

  intent_probs = intent_pad[:, :num_intents]                            # (B, nI)
  slot_probs = slot_pad.reshape(B, S, nSl_pad)[:, :, :num_slots]        # (B, S, nSl)
  return intent_probs, slot_probs


# ------------------------- pure-JAX reference model ------------------------ #

def reference_forward(params, cfg, input_ids, attention_mask):
  B, S = input_ids.shape
  H, nH = cfg.hidden_size, cfg.num_heads
  dH = H // nH
  eps = cfg.layer_norm_eps
  hi = lax.Precision.HIGHEST

  def ln(x, g, b):
    mu = jnp.mean(x, -1, keepdims=True)
    var = jnp.mean((x - mu) ** 2, -1, keepdims=True)
    return (x - mu) * lax.rsqrt(var + eps) * g + b

  def gelu(y):
    return 0.5 * y * (1.0 + jnp.tanh(0.7978845608028654 * (y + 0.044715 * y ** 3)))

  we = jnp.take(params["word_emb"], input_ids, axis=0)
  x = (we + params["pos_emb"][:S][None] + params["type_emb"][0][None, None]).astype(jnp.float32)
  h = ln(x, params["emb_ln_g"], params["emb_ln_b"])
  mask = ((1.0 - attention_mask.astype(jnp.float32)) * -10000.0)[:, None, None, :]

  def heads(t):
    return t.reshape(B, S, nH, dH).transpose(0, 2, 1, 3)

  for lyr in params["layers"]:
    q = heads(jnp.einsum("bsh,hk->bsk", h, lyr["wq"], precision=hi) + lyr["bq"])
    k = heads(jnp.einsum("bsh,hk->bsk", h, lyr["wk"], precision=hi) + lyr["bk"])
    v = heads(jnp.einsum("bsh,hk->bsk", h, lyr["wv"], precision=hi) + lyr["bv"])
    s = jnp.einsum("bhqd,bhkd->bhqk", q, k, precision=hi) / math.sqrt(dH) + mask
    p = jax.nn.softmax(s, axis=-1)
    ctx = jnp.einsum("bhqk,bhkd->bhqd", p, v, precision=hi)
    ctx = ctx.transpose(0, 2, 1, 3).reshape(B, S, H)
    attn = jnp.einsum("bsh,hk->bsk", ctx, lyr["wo"], precision=hi) + lyr["bo"]
    h = ln(attn + h, lyr["ln1_g"], lyr["ln1_b"])
    ffn = gelu(jnp.einsum("bsh,hi->bsi", h, lyr["wi"], precision=hi) + lyr["bi"])
    ffn = jnp.einsum("bsi,ih->bsh", ffn, lyr["wo2"], precision=hi) + lyr["bo2"]
    h = ln(ffn + h, lyr["ln2_g"], lyr["ln2_b"])

  pooled = jnp.tanh(jnp.einsum("bh,hk->bk", h[:, 0, :], params["pool_w"], precision=hi)
                    + params["pool_b"])
  intent = jax.nn.sigmoid(jnp.einsum("bh,hk->bk", pooled, params["intent_w"], precision=hi)
                          + params["intent_b"])
  slot = jax.nn.softmax(jnp.einsum("bsh,hk->bsk", h, params["slot_w"], precision=hi)
                        + params["slot_b"], axis=-1)
  return intent, slot


# ---------------------------------- Main ----------------------------------- #

if __name__ == "__main__":
  cfg = Config()
  num_intents, num_slots = 5, 7
  B, S = 2, 8

  key = jax.random.PRNGKey(0)
  pkey, ikey = jax.random.split(key)
  params = init_params(pkey, cfg, num_intents, num_slots)
  packed = pack_params(params, cfg)

  input_ids = jax.random.randint(ikey, (B, S), 0, cfg.vocab_size, dtype=jnp.int32)
  attention_mask = jnp.array([[1, 1, 1, 1, 1, 1, 1, 1],
                              [1, 1, 1, 1, 1, 1, 0, 0]], dtype=jnp.int32)

  intent_probs, slot_probs = muti_joint_forward(packed, cfg, input_ids, attention_mask,
                                                num_intents, num_slots)
  jax.block_until_ready((intent_probs, slot_probs))

  assert intent_probs.shape == (B, num_intents)
  assert slot_probs.shape == (B, S, num_slots)
  assert bool(jnp.all(jnp.isfinite(intent_probs))) and bool(jnp.all(jnp.isfinite(slot_probs)))
  # softmax rows should sum to ~1 (padded lanes contribute exactly 0)
  assert bool(jnp.allclose(jnp.sum(slot_probs, axis=-1), 1.0, atol=1e-5))

  # numerics check against a pure-JAX reference of the same forward pass
  ref_intent, ref_slot = reference_forward(params, cfg, input_ids, attention_mask)
  assert bool(jnp.allclose(intent_probs, ref_intent, rtol=2e-2, atol=2e-3))
  assert bool(jnp.allclose(slot_probs, ref_slot, rtol=2e-2, atol=2e-3))

  print("KERNEL_OK")
</pallas_src>

<mosaic_0001>
module attributes {stable_mosaic.version = 11 : i64} {
  func.func @_fused_bert_kernel(%arg0: i32, %arg1: memref<16x32xf32, #tpu.memory_space<vmem>>, %arg2: memref<2x8xf32, #tpu.memory_space<vmem>>, %arg3: memref<1x32xf32, #tpu.memory_space<vmem>>, %arg4: memref<1x32xf32, #tpu.memory_space<vmem>>, %arg5: memref<2x32x96xf32, #tpu.memory_space<vmem>>, %arg6: memref<2x1x96xf32, #tpu.memory_space<vmem>>, %arg7: memref<2x32x32xf32, #tpu.memory_space<vmem>>, %arg8: memref<2x1x32xf32, #tpu.memory_space<vmem>>, %arg9: memref<2x1x32xf32, #tpu.memory_space<vmem>>, %arg10: memref<2x1x32xf32, #tpu.memory_space<vmem>>, %arg11: memref<2x32x64xf32, #tpu.memory_space<vmem>>, %arg12: memref<2x1x64xf32, #tpu.memory_space<vmem>>, %arg13: memref<2x64x32xf32, #tpu.memory_space<vmem>>, %arg14: memref<2x1x32xf32, #tpu.memory_space<vmem>>, %arg15: memref<2x1x32xf32, #tpu.memory_space<vmem>>, %arg16: memref<2x1x32xf32, #tpu.memory_space<vmem>>, %arg17: memref<32x32xf32, #tpu.memory_space<vmem>>, %arg18: memref<1x32xf32, #tpu.memory_space<vmem>>, %arg19: memref<32x128xf32, #tpu.memory_space<vmem>>, %arg20: memref<1x128xf32, #tpu.memory_space<vmem>>, %arg21: memref<32x128xf32, #tpu.memory_space<vmem>>, %arg22: memref<1x128xf32, #tpu.memory_space<vmem>>, %arg23: memref<2x128xf32, #tpu.memory_space<vmem>>, %arg24: memref<16x128xf32, #tpu.memory_space<vmem>>) attributes {dimension_semantics = [#tpu.dimension_semantics<arbitrary>], iteration_bounds = array<i64: 1>, scalar_prefetch = 0 : i64, scratch_operands = 0 : i64, tpu.core_type = #tpu.core_type<tc>, window_params = [{pipeline_mode = #tpu.pipeline_mode<synchronous>, transform_indices = @transform_0, window_bounds = array<i64: 16, 32>}, {pipeline_mode = #tpu.pipeline_mode<synchronous>, transform_indices = @transform_1, window_bounds = array<i64: 2, 8>}, {pipeline_mode = #tpu.pipeline_mode<synchronous>, transform_indices = @transform_2, window_bounds = array<i64: 1, 32>}, {pipeline_mode = #tpu.pipeline_mode<synchronous>, transform_indices = @transform_3, window_bounds = array<i64: 1, 32>}, {pipeline_mode = #tpu.pipeline_mode<synchronous>, transform_indices = @transform_4, window_bounds = array<i64: 2, 32, 96>}, {pipeline_mode = #tpu.pipeline_mode<synchronous>, transform_indices = @transform_5, window_bounds = array<i64: 2, 1, 96>}, {pipeline_mode = #tpu.pipeline_mode<synchronous>, transform_indices = @transform_6, window_bounds = array<i64: 2, 32, 32>}, {pipeline_mode = #tpu.pipeline_mode<synchronous>, transform_indices = @transform_7, window_bounds = array<i64: 2, 1, 32>}, {pipeline_mode = #tpu.pipeline_mode<synchronous>, transform_indices = @transform_8, window_bounds = array<i64: 2, 1, 32>}, {pipeline_mode = #tpu.pipeline_mode<synchronous>, transform_indices = @transform_9, window_bounds = array<i64: 2, 1, 32>}, {pipeline_mode = #tpu.pipeline_mode<synchronous>, transform_indices = @transform_10, window_bounds = array<i64: 2, 32, 64>}, {pipeline_mode = #tpu.pipeline_mode<synchronous>, transform_indices = @transform_11, window_bounds = array<i64: 2, 1, 64>}, {pipeline_mode = #tpu.pipeline_mode<synchronous>, transform_indices = @transform_12, window_bounds = array<i64: 2, 64, 32>}, {pipeline_mode = #tpu.pipeline_mode<synchronous>, transform_indices = @transform_13, window_bounds = array<i64: 2, 1, 32>}, {pipeline_mode = #tpu.pipeline_mode<synchronous>, transform_indices = @transform_14, window_bounds = array<i64: 2, 1, 32>}, {pipeline_mode = #tpu.pipeline_mode<synchronous>, transform_indices = @transform_15, window_bounds = array<i64: 2, 1, 32>}, {pipeline_mode = #tpu.pipeline_mode<synchronous>, transform_indices = @transform_16, window_bounds = array<i64: 32, 32>}, {pipeline_mode = #tpu.pipeline_mode<synchronous>, transform_indices = @transform_17, window_bounds = array<i64: 1, 32>}, {pipeline_mode = #tpu.pipeline_mode<synchronous>, transform_indices = @transform_18, window_bounds = array<i64: 32, 128>}, {pipeline_mode = #tpu.pipeline_mode<synchronous>, transform_indices = @transform_19, window_bounds = array<i64: 1, 128>}, {pipeline_mode = #tpu.pipeline_mode<synchronous>, transform_indices = @transform_20, window_bounds = array<i64: 32, 128>}, {pipeline_mode = #tpu.pipeline_mode<synchronous>, transform_indices = @transform_21, window_bounds = array<i64: 1, 128>}, {pipeline_mode = #tpu.pipeline_mode<synchronous>, transform_indices = @transform_22, window_bounds = array<i64: 2, 128>}, {pipeline_mode = #tpu.pipeline_mode<synchronous>, transform_indices = @transform_23, window_bounds = array<i64: 16, 128>}]} {
    %c0 = arith.constant 0 : index
    %c0_0 = arith.constant 0 : index
    %0 = vector.load %arg1[%c0, %c0_0] : memref<16x32xf32, #tpu.memory_space<vmem>>, vector<16x32xf32>
    %c0_1 = arith.constant 0 : index
    %c0_2 = arith.constant 0 : index
    %1 = vector.load %arg2[%c0_1, %c0_2] : memref<2x8xf32, #tpu.memory_space<vmem>>, vector<2x8xf32>
    %c0_3 = arith.constant 0 : index
    %c0_4 = arith.constant 0 : index
    %2 = vector.load %arg3[%c0_3, %c0_4] : memref<1x32xf32, #tpu.memory_space<vmem>>, vector<1x32xf32>
    %c0_5 = arith.constant 0 : index
    %c0_6 = arith.constant 0 : index
    %3 = vector.load %arg4[%c0_5, %c0_6] : memref<1x32xf32, #tpu.memory_space<vmem>>, vector<1x32xf32>
    %cst = arith.constant dense<0.000000e+00> : vector<16xf32>
    %4 = vector.multi_reduction <add>, %0, %cst [1] : vector<16x32xf32> to vector<16xf32>
    %5 = vector.shape_cast %4 : vector<16xf32> to vector<16x1xf32>
    %cst_7 = arith.constant 3.200000e+01 : f32
    %6 = vector.broadcast %cst_7 : f32 to vector<16x1xf32>
    %7 = arith.divf %5, %6 : vector<16x1xf32>
    %8 = vector.broadcast %7 : vector<16x1xf32> to vector<16x32xf32>
    %9 = arith.subf %0, %8 : vector<16x32xf32>
    %10 = arith.mulf %9, %9 : vector<16x32xf32>
    %cst_8 = arith.constant dense<0.000000e+00> : vector<16xf32>
    %11 = vector.multi_reduction <add>, %10, %cst_8 [1] : vector<16x32xf32> to vector<16xf32>
    %12 = vector.shape_cast %11 : vector<16xf32> to vector<16x1xf32>
    %cst_9 = arith.constant 3.200000e+01 : f32
    %13 = vector.broadcast %cst_9 : f32 to vector<16x1xf32>
    %14 = arith.divf %12, %13 : vector<16x1xf32>
    %15 = vector.broadcast %7 : vector<16x1xf32> to vector<16x32xf32>
    %16 = arith.subf %0, %15 : vector<16x32xf32>
    %cst_10 = arith.constant 9.99999996E-13 : f32
    %17 = vector.broadcast %cst_10 : f32 to vector<16x1xf32>
    %18 = arith.addf %14, %17 : vector<16x1xf32>
    %19 = math.rsqrt %18 : vector<16x1xf32>
    %20 = vector.broadcast %19 : vector<16x1xf32> to vector<16x32xf32>
    %21 = arith.mulf %16, %20 : vector<16x32xf32>
    %22 = vector.broadcast %2 : vector<1x32xf32> to vector<16x32xf32>
    %23 = arith.mulf %21, %22 : vector<16x32xf32>
    %24 = vector.broadcast %3 : vector<1x32xf32> to vector<16x32xf32>
    %25 = arith.addf %23, %24 : vector<16x32xf32>
    %c0_11 = arith.constant 0 : index
    %c0_12 = arith.constant 0 : index
    %c0_13 = arith.constant 0 : index
    %26 = vector.load %arg5[%c0_11, %c0_12, %c0_13] : memref<2x32x96xf32, #tpu.memory_space<vmem>>, vector<1x32x96xf32>
    %27 = vector.shape_cast %26 : vector<1x32x96xf32> to vector<32x96xf32>
    %cst_14 = arith.constant dense<0.000000e+00> : vector<16x96xf32>
    %28 = tpu.matmul %25, %27, %cst_14 {dimension_numbers = #tpu.dot_dimension_numbers<[1], [0], [0], [1], [0, 0, 1, 1], [], []>} : vector<16x32xf32>, vector<32x96xf32>, vector<16x96xf32> -> vector<16x96xf32>
    %c0_15 = arith.constant 0 : index
    %c0_16 = arith.constant 0 : index
    %c0_17 = arith.constant 0 : index
    %29 = vector.load %arg6[%c0_15, %c0_16, %c0_17] : memref<2x1x96xf32, #tpu.memory_space<vmem>>, vector<1x1x96xf32>
    %30 = vector.shape_cast %29 : vector<1x1x96xf32> to vector<1x96xf32>
    %31 = vector.broadcast %30 : vector<1x96xf32> to vector<16x96xf32>
    %32 = arith.addf %28, %31 : vector<16x96xf32>
    %33 = vector.extract_strided_slice %1 {offsets = [0, 0], sizes = [1, 8], strides = [1, 1]} : vector<2x8xf32> to vector<1x8xf32>
    %34 = vector.extract_strided_slice %32 {offsets = [0, 0], sizes = [8, 16], strides = [1, 1]} : vector<16x96xf32> to vector<8x16xf32>
    %35 = vector.extract_strided_slice %32 {offsets = [0, 32], sizes = [8, 16], strides = [1, 1]} : vector<16x96xf32> to vector<8x16xf32>
    %36 = vector.extract_strided_slice %32 {offsets = [0, 64], sizes = [8, 16], strides = [1, 1]} : vector<16x96xf32> to vector<8x16xf32>
    %cst_18 = arith.constant dense<0.000000e+00> : vector<8x8xf32>
    %37 = tpu.matmul %34, %35, %cst_18 {dimension_numbers = #tpu.dot_dimension_numbers<[1], [1], [0], [0], [0, 0, 1, 0], [], []>} : vector<8x16xf32>, vector<8x16xf32>, vector<8x8xf32> -> vector<8x8xf32>
    %38 = vector.broadcast %33 : vector<1x8xf32> to vector<8x8xf32>
    %39 = arith.addf %37, %38 : vector<8x8xf32>
    %cst_19 = arith.constant dense<0xFF800000> : vector<8xf32>
    %40 = vector.multi_reduction <maximumf>, %39, %cst_19 [1] : vector<8x8xf32> to vector<8xf32>
    %41 = vector.shape_cast %40 : vector<8xf32> to vector<8x1xf32>
    %42 = vector.broadcast %41 : vector<8x1xf32> to vector<8x8xf32>
    %43 = arith.subf %39, %42 : vector<8x8xf32>
    %44 = math.exp %43 : vector<8x8xf32>
    %cst_20 = arith.constant dense<0.000000e+00> : vector<8xf32>
    %45 = vector.multi_reduction <add>, %44, %cst_20 [1] : vector<8x8xf32> to vector<8xf32>
    %46 = vector.shape_cast %45 : vector<8xf32> to vector<8x1xf32>
    %47 = tpu.reciprocal %46 {approx = true} : vector<8x1xf32> -> vector<8x1xf32>
    %48 = vector.broadcast %47 : vector<8x1xf32> to vector<8x8xf32>
    %49 = arith.mulf %44, %48 : vector<8x8xf32>
    %cst_21 = arith.constant dense<0.000000e+00> : vector<8x16xf32>
    %50 = tpu.matmul %49, %36, %cst_21 {dimension_numbers = #tpu.dot_dimension_numbers<[1], [0], [0], [1], [0, 0, 1, 1], [], []>} : vector<8x8xf32>, vector<8x16xf32>, vector<8x16xf32> -> vector<8x16xf32>
    %51 = vector.extract_strided_slice %32 {offsets = [0, 16], sizes = [8, 16], strides = [1, 1]} : vector<16x96xf32> to vector<8x16xf32>
    %52 = vector.extract_strided_slice %32 {offsets = [0, 48], sizes = [8, 16], strides = [1, 1]} : vector<16x96xf32> to vector<8x16xf32>
    %53 = vector.extract_strided_slice %32 {offsets = [0, 80], sizes = [8, 16], strides = [1, 1]} : vector<16x96xf32> to vector<8x16xf32>
    %cst_22 = arith.constant dense<0.000000e+00> : vector<8x8xf32>
    %54 = tpu.matmul %51, %52, %cst_22 {dimension_numbers = #tpu.dot_dimension_numbers<[1], [1], [0], [0], [0, 0, 1, 0], [], []>} : vector<8x16xf32>, vector<8x16xf32>, vector<8x8xf32> -> vector<8x8xf32>
    %55 = vector.broadcast %33 : vector<1x8xf32> to vector<8x8xf32>
    %56 = arith.addf %54, %55 : vector<8x8xf32>
    %cst_23 = arith.constant dense<0xFF800000> : vector<8xf32>
    %57 = vector.multi_reduction <maximumf>, %56, %cst_23 [1] : vector<8x8xf32> to vector<8xf32>
    %58 = vector.shape_cast %57 : vector<8xf32> to vector<8x1xf32>
    %59 = vector.broadcast %58 : vector<8x1xf32> to vector<8x8xf32>
    %60 = arith.subf %56, %59 : vector<8x8xf32>
    %61 = math.exp %60 : vector<8x8xf32>
    %cst_24 = arith.constant dense<0.000000e+00> : vector<8xf32>
    %62 = vector.multi_reduction <add>, %61, %cst_24 [1] : vector<8x8xf32> to vector<8xf32>
    %63 = vector.shape_cast %62 : vector<8xf32> to vector<8x1xf32>
    %64 = tpu.reciprocal %63 {approx = true} : vector<8x1xf32> -> vector<8x1xf32>
    %65 = vector.broadcast %64 : vector<8x1xf32> to vector<8x8xf32>
    %66 = arith.mulf %61, %65 : vector<8x8xf32>
    %cst_25 = arith.constant dense<0.000000e+00> : vector<8x16xf32>
    %67 = tpu.matmul %66, %53, %cst_25 {dimension_numbers = #tpu.dot_dimension_numbers<[1], [0], [0], [1], [0, 0, 1, 1], [], []>} : vector<8x8xf32>, vector<8x16xf32>, vector<8x16xf32> -> vector<8x16xf32>
    %68 = tpu.concatenate %50, %67 in 1 : vector<8x16xf32>, vector<8x16xf32> -> vector<8x32xf32>
    %69 = vector.extract_strided_slice %1 {offsets = [1, 0], sizes = [1, 8], strides = [1, 1]} : vector<2x8xf32> to vector<1x8xf32>
    %70 = vector.extract_strided_slice %32 {offsets = [8, 0], sizes = [8, 16], strides = [1, 1]} : vector<16x96xf32> to vector<8x16xf32>
    %71 = vector.extract_strided_slice %32 {offsets = [8, 32], sizes = [8, 16], strides = [1, 1]} : vector<16x96xf32> to vector<8x16xf32>
    %72 = vector.extract_strided_slice %32 {offsets = [8, 64], sizes = [8, 16], strides = [1, 1]} : vector<16x96xf32> to vector<8x16xf32>
    %cst_26 = arith.constant dense<0.000000e+00> : vector<8x8xf32>
    %73 = tpu.matmul %70, %71, %cst_26 {dimension_numbers = #tpu.dot_dimension_numbers<[1], [1], [0], [0], [0, 0, 1, 0], [], []>} : vector<8x16xf32>, vector<8x16xf32>, vector<8x8xf32> -> vector<8x8xf32>
    %74 = vector.broadcast %69 : vector<1x8xf32> to vector<8x8xf32>
    %75 = arith.addf %73, %74 : vector<8x8xf32>
    %cst_27 = arith.constant dense<0xFF800000> : vector<8xf32>
    %76 = vector.multi_reduction <maximumf>, %75, %cst_27 [1] : vector<8x8xf32> to vector<8xf32>
    %77 = vector.shape_cast %76 : vector<8xf32> to vector<8x1xf32>
    %78 = vector.broadcast %77 : vector<8x1xf32> to vector<8x8xf32>
    %79 = arith.subf %75, %78 : vector<8x8xf32>
    %80 = math.exp %79 : vector<8x8xf32>
    %cst_28 = arith.constant dense<0.000000e+00> : vector<8xf32>
    %81 = vector.multi_reduction <add>, %80, %cst_28 [1] : vector<8x8xf32> to vector<8xf32>
    %82 = vector.shape_cast %81 : vector<8xf32> to vector<8x1xf32>
    %83 = tpu.reciprocal %82 {approx = true} : vector<8x1xf32> -> vector<8x1xf32>
    %84 = vector.broadcast %83 : vector<8x1xf32> to vector<8x8xf32>
    %85 = arith.mulf %80, %84 : vector<8x8xf32>
    %cst_29 = arith.constant dense<0.000000e+00> : vector<8x16xf32>
    %86 = tpu.matmul %85, %72, %cst_29 {dimension_numbers = #tpu.dot_dimension_numbers<[1], [0], [0], [1], [0, 0, 1, 1], [], []>} : vector<8x8xf32>, vector<8x16xf32>, vector<8x16xf32> -> vector<8x16xf32>
    %87 = vector.extract_strided_slice %32 {offsets = [8, 16], sizes = [8, 16], strides = [1, 1]} : vector<16x96xf32> to vector<8x16xf32>
    %88 = vector.extract_strided_slice %32 {offsets = [8, 48], sizes = [8, 16], strides = [1, 1]} : vector<16x96xf32> to vector<8x16xf32>
    %89 = vector.extract_strided_slice %32 {offsets = [8, 80], sizes = [8, 16], strides = [1, 1]} : vector<16x96xf32> to vector<8x16xf32>
    %cst_30 = arith.constant dense<0.000000e+00> : vector<8x8xf32>
    %90 = tpu.matmul %87, %88, %cst_30 {dimension_numbers = #tpu.dot_dimension_numbers<[1], [1], [0], [0], [0, 0, 1, 0], [], []>} : vector<8x16xf32>, vector<8x16xf32>, vector<8x8xf32> -> vector<8x8xf32>
    %91 = vector.broadcast %69 : vector<1x8xf32> to vector<8x8xf32>
    %92 = arith.addf %90, %91 : vector<8x8xf32>
    %cst_31 = arith.constant dense<0xFF800000> : vector<8xf32>
    %93 = vector.multi_reduction <maximumf>, %92, %cst_31 [1] : vector<8x8xf32> to vector<8xf32>
    %94 = vector.shape_cast %93 : vector<8xf32> to vector<8x1xf32>
    %95 = vector.broadcast %94 : vector<8x1xf32> to vector<8x8xf32>
    %96 = arith.subf %92, %95 : vector<8x8xf32>
    %97 = math.exp %96 : vector<8x8xf32>
    %cst_32 = arith.constant dense<0.000000e+00> : vector<8xf32>
    %98 = vector.multi_reduction <add>, %97, %cst_32 [1] : vector<8x8xf32> to vector<8xf32>
    %99 = vector.shape_cast %98 : vector<8xf32> to vector<8x1xf32>
    %100 = tpu.reciprocal %99 {approx = true} : vector<8x1xf32> -> vector<8x1xf32>
    %101 = vector.broadcast %100 : vector<8x1xf32> to vector<8x8xf32>
    %102 = arith.mulf %97, %101 : vector<8x8xf32>
    %cst_33 = arith.constant dense<0.000000e+00> : vector<8x16xf32>
    %103 = tpu.matmul %102, %89, %cst_33 {dimension_numbers = #tpu.dot_dimension_numbers<[1], [0], [0], [1], [0, 0, 1, 1], [], []>} : vector<8x8xf32>, vector<8x16xf32>, vector<8x16xf32> -> vector<8x16xf32>
    %104 = tpu.concatenate %86, %103 in 1 : vector<8x16xf32>, vector<8x16xf32> -> vector<8x32xf32>
    %105 = tpu.concatenate %68, %104 in 0 : vector<8x32xf32>, vector<8x32xf32> -> vector<16x32xf32>
    %c0_34 = arith.constant 0 : index
    %c0_35 = arith.constant 0 : index
    %c0_36 = arith.constant 0 : index
    %106 = vector.load %arg7[%c0_34, %c0_35, %c0_36] : memref<2x32x32xf32, #tpu.memory_space<vmem>>, vector<1x32x32xf32>
    %107 = vector.shape_cast %106 : vector<1x32x32xf32> to vector<32x32xf32>
    %cst_37 = arith.constant dense<0.000000e+00> : vector<16x32xf32>
    %108 = tpu.matmul %105, %107, %cst_37 {dimension_numbers = #tpu.dot_dimension_numbers<[1], [0], [0], [1], [0, 0, 1, 1], [], []>} : vector<16x32xf32>, vector<32x32xf32>, vector<16x32xf32> -> vector<16x32xf32>
    %c0_38 = arith.constant 0 : index
    %c0_39 = arith.constant 0 : index
    %c0_40 = arith.constant 0 : index
    %109 = vector.load %arg8[%c0_38, %c0_39, %c0_40] : memref<2x1x32xf32, #tpu.memory_space<vmem>>, vector<1x1x32xf32>
    %110 = vector.shape_cast %109 : vector<1x1x32xf32> to vector<1x32xf32>
    %111 = vector.broadcast %110 : vector<1x32xf32> to vector<16x32xf32>
    %112 = arith.addf %108, %111 : vector<16x32xf32>
    %113 = arith.addf %112, %25 : vector<16x32xf32>
    %c0_41 = arith.constant 0 : index
    %c0_42 = arith.constant 0 : index
    %c0_43 = arith.constant 0 : index
    %114 = vector.load %arg9[%c0_41, %c0_42, %c0_43] : memref<2x1x32xf32, #tpu.memory_space<vmem>>, vector<1x1x32xf32>
    %115 = vector.shape_cast %114 : vector<1x1x32xf32> to vector<1x32xf32>
    %c0_44 = arith.constant 0 : index
    %c0_45 = arith.constant 0 : index
    %c0_46 = arith.constant 0 : index
    %116 = vector.load %arg10[%c0_44, %c0_45, %c0_46] : memref<2x1x32xf32, #tpu.memory_space<vmem>>, vector<1x1x32xf32>
    %117 = vector.shape_cast %116 : vector<1x1x32xf32> to vector<1x32xf32>
    %cst_47 = arith.constant dense<0.000000e+00> : vector<16xf32>
    %118 = vector.multi_reduction <add>, %113, %cst_47 [1] : vector<16x32xf32> to vector<16xf32>
    %119 = vector.shape_cast %118 : vector<16xf32> to vector<16x1xf32>
    %cst_48 = arith.constant 3.200000e+01 : f32
    %120 = vector.broadcast %cst_48 : f32 to vector<16x1xf32>
    %121 = arith.divf %119, %120 : vector<16x1xf32>
    %122 = vector.broadcast %121 : vector<16x1xf32> to vector<16x32xf32>
    %123 = arith.subf %113, %122 : vector<16x32xf32>
    %124 = arith.mulf %123, %123 : vector<16x32xf32>
    %cst_49 = arith.constant dense<0.000000e+00> : vector<16xf32>
    %125 = vector.multi_reduction <add>, %124, %cst_49 [1] : vector<16x32xf32> to vector<16xf32>
    %126 = vector.shape_cast %125 : vector<16xf32> to vector<16x1xf32>
    %cst_50 = arith.constant 3.200000e+01 : f32
    %127 = vector.broadcast %cst_50 : f32 to vector<16x1xf32>
    %128 = arith.divf %126, %127 : vector<16x1xf32>
    %129 = vector.broadcast %121 : vector<16x1xf32> to vector<16x32xf32>
    %130 = arith.subf %113, %129 : vector<16x32xf32>
    %cst_51 = arith.constant 9.99999996E-13 : f32
    %131 = vector.broadcast %cst_51 : f32 to vector<16x1xf32>
    %132 = arith.addf %128, %131 : vector<16x1xf32>
    %133 = math.rsqrt %132 : vector<16x1xf32>
    %134 = vector.broadcast %133 : vector<16x1xf32> to vector<16x32xf32>
    %135 = arith.mulf %130, %134 : vector<16x32xf32>
    %136 = vector.broadcast %115 : vector<1x32xf32> to vector<16x32xf32>
    %137 = arith.mulf %135, %136 : vector<16x32xf32>
    %138 = vector.broadcast %117 : vector<1x32xf32> to vector<16x32xf32>
    %139 = arith.addf %137, %138 : vector<16x32xf32>
    %c0_52 = arith.constant 0 : index
    %c0_53 = arith.constant 0 : index
    %c0_54 = arith.constant 0 : index
    %140 = vector.load %arg11[%c0_52, %c0_53, %c0_54] : memref<2x32x64xf32, #tpu.memory_space<vmem>>, vector<1x32x64xf32>
    %141 = vector.shape_cast %140 : vector<1x32x64xf32> to vector<32x64xf32>
    %cst_55 = arith.constant dense<0.000000e+00> : vector<16x64xf32>
    %142 = tpu.matmul %139, %141, %cst_55 {dimension_numbers = #tpu.dot_dimension_numbers<[1], [0], [0], [1], [0, 0, 1, 1], [], []>} : vector<16x32xf32>, vector<32x64xf32>, vector<16x64xf32> -> vector<16x64xf32>
    %c0_56 = arith.constant 0 : index
    %c0_57 = arith.constant 0 : index
    %c0_58 = arith.constant 0 : index
    %143 = vector.load %arg12[%c0_56, %c0_57, %c0_58] : memref<2x1x64xf32, #tpu.memory_space<vmem>>, vector<1x1x64xf32>
    %144 = vector.shape_cast %143 : vector<1x1x64xf32> to vector<1x64xf32>
    %145 = vector.broadcast %144 : vector<1x64xf32> to vector<16x64xf32>
    %146 = arith.addf %142, %145 : vector<16x64xf32>
    %cst_59 = arith.constant 5.000000e-01 : f32
    %147 = vector.broadcast %cst_59 : f32 to vector<16x64xf32>
    %148 = arith.mulf %147, %146 : vector<16x64xf32>
    %cst_60 = arith.constant 4.471500e-02 : f32
    %149 = vector.broadcast %cst_60 : f32 to vector<16x64xf32>
    %150 = arith.mulf %149, %146 : vector<16x64xf32>
    %151 = arith.mulf %150, %146 : vector<16x64xf32>
    %152 = arith.mulf %151, %146 : vector<16x64xf32>
    %153 = arith.addf %146, %152 : vector<16x64xf32>
    %cst_61 = arith.constant 0.797884583 : f32
    %154 = vector.broadcast %cst_61 : f32 to vector<16x64xf32>
    %155 = arith.mulf %154, %153 : vector<16x64xf32>
    %156 = math.tanh %155 : vector<16x64xf32>
    %cst_62 = arith.constant 1.000000e+00 : f32
    %157 = vector.broadcast %cst_62 : f32 to vector<16x64xf32>
    %158 = arith.addf %157, %156 : vector<16x64xf32>
    %159 = arith.mulf %148, %158 : vector<16x64xf32>
    %c0_63 = arith.constant 0 : index
    %c0_64 = arith.constant 0 : index
    %c0_65 = arith.constant 0 : index
    %160 = vector.load %arg13[%c0_63, %c0_64, %c0_65] : memref<2x64x32xf32, #tpu.memory_space<vmem>>, vector<1x64x32xf32>
    %161 = vector.shape_cast %160 : vector<1x64x32xf32> to vector<64x32xf32>
    %cst_66 = arith.constant dense<0.000000e+00> : vector<16x32xf32>
    %162 = tpu.matmul %159, %161, %cst_66 {dimension_numbers = #tpu.dot_dimension_numbers<[1], [0], [0], [1], [0, 0, 1, 1], [], []>} : vector<16x64xf32>, vector<64x32xf32>, vector<16x32xf32> -> vector<16x32xf32>
    %c0_67 = arith.constant 0 : index
    %c0_68 = arith.constant 0 : index
    %c0_69 = arith.constant 0 : index
    %163 = vector.load %arg14[%c0_67, %c0_68, %c0_69] : memref<2x1x32xf32, #tpu.memory_space<vmem>>, vector<1x1x32xf32>
    %164 = vector.shape_cast %163 : vector<1x1x32xf32> to vector<1x32xf32>
    %165 = vector.broadcast %164 : vector<1x32xf32> to vector<16x32xf32>
    %166 = arith.addf %162, %165 : vector<16x32xf32>
    %167 = arith.addf %166, %139 : vector<16x32xf32>
    %c0_70 = arith.constant 0 : index
    %c0_71 = arith.constant 0 : index
    %c0_72 = arith.constant 0 : index
    %168 = vector.load %arg15[%c0_70, %c0_71, %c0_72] : memref<2x1x32xf32, #tpu.memory_space<vmem>>, vector<1x1x32xf32>
    %169 = vector.shape_cast %168 : vector<1x1x32xf32> to vector<1x32xf32>
    %c0_73 = arith.constant 0 : index
    %c0_74 = arith.constant 0 : index
    %c0_75 = arith.constant 0 : index
    %170 = vector.load %arg16[%c0_73, %c0_74, %c0_75] : memref<2x1x32xf32, #tpu.memory_space<vmem>>, vector<1x1x32xf32>
    %171 = vector.shape_cast %170 : vector<1x1x32xf32> to vector<1x32xf32>
    %cst_76 = arith.constant dense<0.000000e+00> : vector<16xf32>
    %172 = vector.multi_reduction <add>, %167, %cst_76 [1] : vector<16x32xf32> to vector<16xf32>
    %173 = vector.shape_cast %172 : vector<16xf32> to vector<16x1xf32>
    %cst_77 = arith.constant 3.200000e+01 : f32
    %174 = vector.broadcast %cst_77 : f32 to vector<16x1xf32>
    %175 = arith.divf %173, %174 : vector<16x1xf32>
    %176 = vector.broadcast %175 : vector<16x1xf32> to vector<16x32xf32>
    %177 = arith.subf %167, %176 : vector<16x32xf32>
    %178 = arith.mulf %177, %177 : vector<16x32xf32>
    %cst_78 = arith.constant dense<0.000000e+00> : vector<16xf32>
    %179 = vector.multi_reduction <add>, %178, %cst_78 [1] : vector<16x32xf32> to vector<16xf32>
    %180 = vector.shape_cast %179 : vector<16xf32> to vector<16x1xf32>
    %cst_79 = arith.constant 3.200000e+01 : f32
    %181 = vector.broadcast %cst_79 : f32 to vector<16x1xf32>
    %182 = arith.divf %180, %181 : vector<16x1xf32>
    %183 = vector.broadcast %175 : vector<16x1xf32> to vector<16x32xf32>
    %184 = arith.subf %167, %183 : vector<16x32xf32>
    %cst_80 = arith.constant 9.99999996E-13 : f32
    %185 = vector.broadcast %cst_80 : f32 to vector<16x1xf32>
    %186 = arith.addf %182, %185 : vector<16x1xf32>
    %187 = math.rsqrt %186 : vector<16x1xf32>
    %188 = vector.broadcast %187 : vector<16x1xf32> to vector<16x32xf32>
    %189 = arith.mulf %184, %188 : vector<16x32xf32>
    %190 = vector.broadcast %169 : vector<1x32xf32> to vector<16x32xf32>
    %191 = arith.mulf %189, %190 : vector<16x32xf32>
    %192 = vector.broadcast %171 : vector<1x32xf32> to vector<16x32xf32>
    %193 = arith.addf %191, %192 : vector<16x32xf32>
    %c1 = arith.constant 1 : index
    %c0_81 = arith.constant 0 : index
    %c0_82 = arith.constant 0 : index
    %194 = vector.load %arg5[%c1, %c0_81, %c0_82] : memref<2x32x96xf32, #tpu.memory_space<vmem>>, vector<1x32x96xf32>
    %195 = vector.shape_cast %194 : vector<1x32x96xf32> to vector<32x96xf32>
    %cst_83 = arith.constant dense<0.000000e+00> : vector<16x96xf32>
    %196 = tpu.matmul %193, %195, %cst_83 {dimension_numbers = #tpu.dot_dimension_numbers<[1], [0], [0], [1], [0, 0, 1, 1], [], []>} : vector<16x32xf32>, vector<32x96xf32>, vector<16x96xf32> -> vector<16x96xf32>
    %c1_84 = arith.constant 1 : index
    %c0_85 = arith.constant 0 : index
    %c0_86 = arith.constant 0 : index
    %197 = vector.load %arg6[%c1_84, %c0_85, %c0_86] : memref<2x1x96xf32, #tpu.memory_space<vmem>>, vector<1x1x96xf32>
    %198 = vector.shape_cast %197 : vector<1x1x96xf32> to vector<1x96xf32>
    %199 = vector.broadcast %198 : vector<1x96xf32> to vector<16x96xf32>
    %200 = arith.addf %196, %199 : vector<16x96xf32>
    %201 = vector.extract_strided_slice %1 {offsets = [0, 0], sizes = [1, 8], strides = [1, 1]} : vector<2x8xf32> to vector<1x8xf32>
    %202 = vector.extract_strided_slice %200 {offsets = [0, 0], sizes = [8, 16], strides = [1, 1]} : vector<16x96xf32> to vector<8x16xf32>
    %203 = vector.extract_strided_slice %200 {offsets = [0, 32], sizes = [8, 16], strides = [1, 1]} : vector<16x96xf32> to vector<8x16xf32>
    %204 = vector.extract_strided_slice %200 {offsets = [0, 64], sizes = [8, 16], strides = [1, 1]} : vector<16x96xf32> to vector<8x16xf32>
    %cst_87 = arith.constant dense<0.000000e+00> : vector<8x8xf32>
    %205 = tpu.matmul %202, %203, %cst_87 {dimension_numbers = #tpu.dot_dimension_numbers<[1], [1], [0], [0], [0, 0, 1, 0], [], []>} : vector<8x16xf32>, vector<8x16xf32>, vector<8x8xf32> -> vector<8x8xf32>
    %206 = vector.broadcast %201 : vector<1x8xf32> to vector<8x8xf32>
    %207 = arith.addf %205, %206 : vector<8x8xf32>
    %cst_88 = arith.constant dense<0xFF800000> : vector<8xf32>
    %208 = vector.multi_reduction <maximumf>, %207, %cst_88 [1] : vector<8x8xf32> to vector<8xf32>
    %209 = vector.shape_cast %208 : vector<8xf32> to vector<8x1xf32>
    %210 = vector.broadcast %209 : vector<8x1xf32> to vector<8x8xf32>
    %211 = arith.subf %207, %210 : vector<8x8xf32>
    %212 = math.exp %211 : vector<8x8xf32>
    %cst_89 = arith.constant dense<0.000000e+00> : vector<8xf32>
    %213 = vector.multi_reduction <add>, %212, %cst_89 [1] : vector<8x8xf32> to vector<8xf32>
    %214 = vector.shape_cast %213 : vector<8xf32> to vector<8x1xf32>
    %215 = tpu.reciprocal %214 {approx = true} : vector<8x1xf32> -> vector<8x1xf32>
    %216 = vector.broadcast %215 : vector<8x1xf32> to vector<8x8xf32>
    %217 = arith.mulf %212, %216 : vector<8x8xf32>
    %cst_90 = arith.constant dense<0.000000e+00> : vector<8x16xf32>
    %218 = tpu.matmul %217, %204, %cst_90 {dimension_numbers = #tpu.dot_dimension_numbers<[1], [0], [0], [1], [0, 0, 1, 1], [], []>} : vector<8x8xf32>, vector<8x16xf32>, vector<8x16xf32> -> vector<8x16xf32>
    %219 = vector.extract_strided_slice %200 {offsets = [0, 16], sizes = [8, 16], strides = [1, 1]} : vector<16x96xf32> to vector<8x16xf32>
    %220 = vector.extract_strided_slice %200 {offsets = [0, 48], sizes = [8, 16], strides = [1, 1]} : vector<16x96xf32> to vector<8x16xf32>
    %221 = vector.extract_strided_slice %200 {offsets = [0, 80], sizes = [8, 16], strides = [1, 1]} : vector<16x96xf32> to vector<8x16xf32>
    %cst_91 = arith.constant dense<0.000000e+00> : vector<8x8xf32>
    %222 = tpu.matmul %219, %220, %cst_91 {dimension_numbers = #tpu.dot_dimension_numbers<[1], [1], [0], [0], [0, 0, 1, 0], [], []>} : vector<8x16xf32>, vector<8x16xf32>, vector<8x8xf32> -> vector<8x8xf32>
    %223 = vector.broadcast %201 : vector<1x8xf32> to vector<8x8xf32>
    %224 = arith.addf %222, %223 : vector<8x8xf32>
    %cst_92 = arith.constant dense<0xFF800000> : vector<8xf32>
    %225 = vector.multi_reduction <maximumf>, %224, %cst_92 [1] : vector<8x8xf32> to vector<8xf32>
    %226 = vector.shape_cast %225 : vector<8xf32> to vector<8x1xf32>
    %227 = vector.broadcast %226 : vector<8x1xf32> to vector<8x8xf32>
    %228 = arith.subf %224, %227 : vector<8x8xf32>
    %229 = math.exp %228 : vector<8x8xf32>
    %cst_93 = arith.constant dense<0.000000e+00> : vector<8xf32>
    %230 = vector.multi_reduction <add>, %229, %cst_93 [1] : vector<8x8xf32> to vector<8xf32>
    %231 = vector.shape_cast %230 : vector<8xf32> to vector<8x1xf32>
    %232 = tpu.reciprocal %231 {approx = true} : vector<8x1xf32> -> vector<8x1xf32>
    %233 = vector.broadcast %232 : vector<8x1xf32> to vector<8x8xf32>
    %234 = arith.mulf %229, %233 : vector<8x8xf32>
    %cst_94 = arith.constant dense<0.000000e+00> : vector<8x16xf32>
    %235 = tpu.matmul %234, %221, %cst_94 {dimension_numbers = #tpu.dot_dimension_numbers<[1], [0], [0], [1], [0, 0, 1, 1], [], []>} : vector<8x8xf32>, vector<8x16xf32>, vector<8x16xf32> -> vector<8x16xf32>
    %236 = tpu.concatenate %218, %235 in 1 : vector<8x16xf32>, vector<8x16xf32> -> vector<8x32xf32>
    %237 = vector.extract_strided_slice %1 {offsets = [1, 0], sizes = [1, 8], strides = [1, 1]} : vector<2x8xf32> to vector<1x8xf32>
    %238 = vector.extract_strided_slice %200 {offsets = [8, 0], sizes = [8, 16], strides = [1, 1]} : vector<16x96xf32> to vector<8x16xf32>
    %239 = vector.extract_strided_slice %200 {offsets = [8, 32], sizes = [8, 16], strides = [1, 1]} : vector<16x96xf32> to vector<8x16xf32>
    %240 = vector.extract_strided_slice %200 {offsets = [8, 64], sizes = [8, 16], strides = [1, 1]} : vector<16x96xf32> to vector<8x16xf32>
    %cst_95 = arith.constant dense<0.000000e+00> : vector<8x8xf32>
    %241 = tpu.matmul %238, %239, %cst_95 {dimension_numbers = #tpu.dot_dimension_numbers<[1], [1], [0], [0], [0, 0, 1, 0], [], []>} : vector<8x16xf32>, vector<8x16xf32>, vector<8x8xf32> -> vector<8x8xf32>
    %242 = vector.broadcast %237 : vector<1x8xf32> to vector<8x8xf32>
    %243 = arith.addf %241, %242 : vector<8x8xf32>
    %cst_96 = arith.constant dense<0xFF800000> : vector<8xf32>
    %244 = vector.multi_reduction <maximumf>, %243, %cst_96 [1] : vector<8x8xf32> to vector<8xf32>
    %245 = vector.shape_cast %244 : vector<8xf32> to vector<8x1xf32>
    %246 = vector.broadcast %245 : vector<8x1xf32> to vector<8x8xf32>
    %247 = arith.subf %243, %246 : vector<8x8xf32>
    %248 = math.exp %247 : vector<8x8xf32>
    %cst_97 = arith.constant dense<0.000000e+00> : vector<8xf32>
    %249 = vector.multi_reduction <add>, %248, %cst_97 [1] : vector<8x8xf32> to vector<8xf32>
    %250 = vector.shape_cast %249 : vector<8xf32> to vector<8x1xf32>
    %251 = tpu.reciprocal %250 {approx = true} : vector<8x1xf32> -> vector<8x1xf32>
    %252 = vector.broadcast %251 : vector<8x1xf32> to vector<8x8xf32>
    %253 = arith.mulf %248, %252 : vector<8x8xf32>
    %cst_98 = arith.constant dense<0.000000e+00> : vector<8x16xf32>
    %254 = tpu.matmul %253, %240, %cst_98 {dimension_numbers = #tpu.dot_dimension_numbers<[1], [0], [0], [1], [0, 0, 1, 1], [], []>} : vector<8x8xf32>, vector<8x16xf32>, vector<8x16xf32> -> vector<8x16xf32>
    %255 = vector.extract_strided_slice %200 {offsets = [8, 16], sizes = [8, 16], strides = [1, 1]} : vector<16x96xf32> to vector<8x16xf32>
    %256 = vector.extract_strided_slice %200 {offsets = [8, 48], sizes = [8, 16], strides = [1, 1]} : vector<16x96xf32> to vector<8x16xf32>
    %257 = vector.extract_strided_slice %200 {offsets = [8, 80], sizes = [8, 16], strides = [1, 1]} : vector<16x96xf32> to vector<8x16xf32>
    %cst_99 = arith.constant dense<0.000000e+00> : vector<8x8xf32>
    %258 = tpu.matmul %255, %256, %cst_99 {dimension_numbers = #tpu.dot_dimension_numbers<[1], [1], [0], [0], [0, 0, 1, 0], [], []>} : vector<8x16xf32>, vector<8x16xf32>, vector<8x8xf32> -> vector<8x8xf32>
    %259 = vector.broadcast %237 : vector<1x8xf32> to vector<8x8xf32>
    %260 = arith.addf %258, %259 : vector<8x8xf32>
    %cst_100 = arith.constant dense<0xFF800000> : vector<8xf32>
    %261 = vector.multi_reduction <maximumf>, %260, %cst_100 [1] : vector<8x8xf32> to vector<8xf32>
    %262 = vector.shape_cast %261 : vector<8xf32> to vector<8x1xf32>
    %263 = vector.broadcast %262 : vector<8x1xf32> to vector<8x8xf32>
    %264 = arith.subf %260, %263 : vector<8x8xf32>
    %265 = math.exp %264 : vector<8x8xf32>
    %cst_101 = arith.constant dense<0.000000e+00> : vector<8xf32>
    %266 = vector.multi_reduction <add>, %265, %cst_101 [1] : vector<8x8xf32> to vector<8xf32>
    %267 = vector.shape_cast %266 : vector<8xf32> to vector<8x1xf32>
    %268 = tpu.reciprocal %267 {approx = true} : vector<8x1xf32> -> vector<8x1xf32>
    %269 = vector.broadcast %268 : vector<8x1xf32> to vector<8x8xf32>
    %270 = arith.mulf %265, %269 : vector<8x8xf32>
    %cst_102 = arith.constant dense<0.000000e+00> : vector<8x16xf32>
    %271 = tpu.matmul %270, %257, %cst_102 {dimension_numbers = #tpu.dot_dimension_numbers<[1], [0], [0], [1], [0, 0, 1, 1], [], []>} : vector<8x8xf32>, vector<8x16xf32>, vector<8x16xf32> -> vector<8x16xf32>
    %272 = tpu.concatenate %254, %271 in 1 : vector<8x16xf32>, vector<8x16xf32> -> vector<8x32xf32>
    %273 = tpu.concatenate %236, %272 in 0 : vector<8x32xf32>, vector<8x32xf32> -> vector<16x32xf32>
    %c1_103 = arith.constant 1 : index
    %c0_104 = arith.constant 0 : index
    %c0_105 = arith.constant 0 : index
    %274 = vector.load %arg7[%c1_103, %c0_104, %c0_105] : memref<2x32x32xf32, #tpu.memory_space<vmem>>, vector<1x32x32xf32>
    %275 = vector.shape_cast %274 : vector<1x32x32xf32> to vector<32x32xf32>
    %cst_106 = arith.constant dense<0.000000e+00> : vector<16x32xf32>
    %276 = tpu.matmul %273, %275, %cst_106 {dimension_numbers = #tpu.dot_dimension_numbers<[1], [0], [0], [1], [0, 0, 1, 1], [], []>} : vector<16x32xf32>, vector<32x32xf32>, vector<16x32xf32> -> vector<16x32xf32>
    %c1_107 = arith.constant 1 : index
    %c0_108 = arith.constant 0 : index
    %c0_109 = arith.constant 0 : index
    %277 = vector.load %arg8[%c1_107, %c0_108, %c0_109] : memref<2x1x32xf32, #tpu.memory_space<vmem>>, vector<1x1x32xf32>
    %278 = vector.shape_cast %277 : vector<1x1x32xf32> to vector<1x32xf32>
    %279 = vector.broadcast %278 : vector<1x32xf32> to vector<16x32xf32>
    %280 = arith.addf %276, %279 : vector<16x32xf32>
    %281 = arith.addf %280, %193 : vector<16x32xf32>
    %c1_110 = arith.constant 1 : index
    %c0_111 = arith.constant 0 : index
    %c0_112 = arith.constant 0 : index
    %282 = vector.load %arg9[%c1_110, %c0_111, %c0_112] : memref<2x1x32xf32, #tpu.memory_space<vmem>>, vector<1x1x32xf32>
    %283 = vector.shape_cast %282 : vector<1x1x32xf32> to vector<1x32xf32>
    %c1_113 = arith.constant 1 : index
    %c0_114 = arith.constant 0 : index
    %c0_115 = arith.constant 0 : index
    %284 = vector.load %arg10[%c1_113, %c0_114, %c0_115] : memref<2x1x32xf32, #tpu.memory_space<vmem>>, vector<1x1x32xf32>
    %285 = vector.shape_cast %284 : vector<1x1x32xf32> to vector<1x32xf32>
    %cst_116 = arith.constant dense<0.000000e+00> : vector<16xf32>
    %286 = vector.multi_reduction <add>, %281, %cst_116 [1] : vector<16x32xf32> to vector<16xf32>
    %287 = vector.shape_cast %286 : vector<16xf32> to vector<16x1xf32>
    %cst_117 = arith.constant 3.200000e+01 : f32
    %288 = vector.broadcast %cst_117 : f32 to vector<16x1xf32>
    %289 = arith.divf %287, %288 : vector<16x1xf32>
    %290 = vector.broadcast %289 : vector<16x1xf32> to vector<16x32xf32>
    %291 = arith.subf %281, %290 : vector<16x32xf32>
    %292 = arith.mulf %291, %291 : vector<16x32xf32>
    %cst_118 = arith.constant dense<0.000000e+00> : vector<16xf32>
    %293 = vector.multi_reduction <add>, %292, %cst_118 [1] : vector<16x32xf32> to vector<16xf32>
    %294 = vector.shape_cast %293 : vector<16xf32> to vector<16x1xf32>
    %cst_119 = arith.constant 3.200000e+01 : f32
    %295 = vector.broadcast %cst_119 : f32 to vector<16x1xf32>
    %296 = arith.divf %294, %295 : vector<16x1xf32>
    %297 = vector.broadcast %289 : vector<16x1xf32> to vector<16x32xf32>
    %298 = arith.subf %281, %297 : vector<16x32xf32>
    %cst_120 = arith.constant 9.99999996E-13 : f32
    %299 = vector.broadcast %cst_120 : f32 to vector<16x1xf32>
    %300 = arith.addf %296, %299 : vector<16x1xf32>
    %301 = math.rsqrt %300 : vector<16x1xf32>
    %302 = vector.broadcast %301 : vector<16x1xf32> to vector<16x32xf32>
    %303 = arith.mulf %298, %302 : vector<16x32xf32>
    %304 = vector.broadcast %283 : vector<1x32xf32> to vector<16x32xf32>
    %305 = arith.mulf %303, %304 : vector<16x32xf32>
    %306 = vector.broadcast %285 : vector<1x32xf32> to vector<16x32xf32>
    %307 = arith.addf %305, %306 : vector<16x32xf32>
    %c1_121 = arith.constant 1 : index
    %c0_122 = arith.constant 0 : index
    %c0_123 = arith.constant 0 : index
    %308 = vector.load %arg11[%c1_121, %c0_122, %c0_123] : memref<2x32x64xf32, #tpu.memory_space<vmem>>, vector<1x32x64xf32>
    %309 = vector.shape_cast %308 : vector<1x32x64xf32> to vector<32x64xf32>
    %cst_124 = arith.constant dense<0.000000e+00> : vector<16x64xf32>
    %310 = tpu.matmul %307, %309, %cst_124 {dimension_numbers = #tpu.dot_dimension_numbers<[1], [0], [0], [1], [0, 0, 1, 1], [], []>} : vector<16x32xf32>, vector<32x64xf32>, vector<16x64xf32> -> vector<16x64xf32>
    %c1_125 = arith.constant 1 : index
    %c0_126 = arith.constant 0 : index
    %c0_127 = arith.constant 0 : index
    %311 = vector.load %arg12[%c1_125, %c0_126, %c0_127] : memref<2x1x64xf32, #tpu.memory_space<vmem>>, vector<1x1x64xf32>
    %312 = vector.shape_cast %311 : vector<1x1x64xf32> to vector<1x64xf32>
    %313 = vector.broadcast %312 : vector<1x64xf32> to vector<16x64xf32>
    %314 = arith.addf %310, %313 : vector<16x64xf32>
    %cst_128 = arith.constant 5.000000e-01 : f32
    %315 = vector.broadcast %cst_128 : f32 to vector<16x64xf32>
    %316 = arith.mulf %315, %314 : vector<16x64xf32>
    %cst_129 = arith.constant 4.471500e-02 : f32
    %317 = vector.broadcast %cst_129 : f32 to vector<16x64xf32>
    %318 = arith.mulf %317, %314 : vector<16x64xf32>
    %319 = arith.mulf %318, %314 : vector<16x64xf32>
    %320 = arith.mulf %319, %314 : vector<16x64xf32>
    %321 = arith.addf %314, %320 : vector<16x64xf32>
    %cst_130 = arith.constant 0.797884583 : f32
    %322 = vector.broadcast %cst_130 : f32 to vector<16x64xf32>
    %323 = arith.mulf %322, %321 : vector<16x64xf32>
    %324 = math.tanh %323 : vector<16x64xf32>
    %cst_131 = arith.constant 1.000000e+00 : f32
    %325 = vector.broadcast %cst_131 : f32 to vector<16x64xf32>
    %326 = arith.addf %325, %324 : vector<16x64xf32>
    %327 = arith.mulf %316, %326 : vector<16x64xf32>
    %c1_132 = arith.constant 1 : index
    %c0_133 = arith.constant 0 : index
    %c0_134 = arith.constant 0 : index
    %328 = vector.load %arg13[%c1_132, %c0_133, %c0_134] : memref<2x64x32xf32, #tpu.memory_space<vmem>>, vector<1x64x32xf32>
    %329 = vector.shape_cast %328 : vector<1x64x32xf32> to vector<64x32xf32>
    %cst_135 = arith.constant dense<0.000000e+00> : vector<16x32xf32>
    %330 = tpu.matmul %327, %329, %cst_135 {dimension_numbers = #tpu.dot_dimension_numbers<[1], [0], [0], [1], [0, 0, 1, 1], [], []>} : vector<16x64xf32>, vector<64x32xf32>, vector<16x32xf32> -> vector<16x32xf32>
    %c1_136 = arith.constant 1 : index
    %c0_137 = arith.constant 0 : index
    %c0_138 = arith.constant 0 : index
    %331 = vector.load %arg14[%c1_136, %c0_137, %c0_138] : memref<2x1x32xf32, #tpu.memory_space<vmem>>, vector<1x1x32xf32>
    %332 = vector.shape_cast %331 : vector<1x1x32xf32> to vector<1x32xf32>
    %333 = vector.broadcast %332 : vector<1x32xf32> to vector<16x32xf32>
    %334 = arith.addf %330, %333 : vector<16x32xf32>
    %335 = arith.addf %334, %307 : vector<16x32xf32>
    %c1_139 = arith.constant 1 : index
    %c0_140 = arith.constant 0 : index
    %c0_141 = arith.constant 0 : index
    %336 = vector.load %arg15[%c1_139, %c0_140, %c0_141] : memref<2x1x32xf32, #tpu.memory_space<vmem>>, vector<1x1x32xf32>
    %337 = vector.shape_cast %336 : vector<1x1x32xf32> to vector<1x32xf32>
    %c1_142 = arith.constant 1 : index
    %c0_143 = arith.constant 0 : index
    %c0_144 = arith.constant 0 : index
    %338 = vector.load %arg16[%c1_142, %c0_143, %c0_144] : memref<2x1x32xf32, #tpu.memory_space<vmem>>, vector<1x1x32xf32>
    %339 = vector.shape_cast %338 : vector<1x1x32xf32> to vector<1x32xf32>
    %cst_145 = arith.constant dense<0.000000e+00> : vector<16xf32>
    %340 = vector.multi_reduction <add>, %335, %cst_145 [1] : vector<16x32xf32> to vector<16xf32>
    %341 = vector.shape_cast %340 : vector<16xf32> to vector<16x1xf32>
    %cst_146 = arith.constant 3.200000e+01 : f32
    %342 = vector.broadcast %cst_146 : f32 to vector<16x1xf32>
    %343 = arith.divf %341, %342 : vector<16x1xf32>
    %344 = vector.broadcast %343 : vector<16x1xf32> to vector<16x32xf32>
    %345 = arith.subf %335, %344 : vector<16x32xf32>
    %346 = arith.mulf %345, %345 : vector<16x32xf32>
    %cst_147 = arith.constant dense<0.000000e+00> : vector<16xf32>
    %347 = vector.multi_reduction <add>, %346, %cst_147 [1] : vector<16x32xf32> to vector<16xf32>
    %348 = vector.shape_cast %347 : vector<16xf32> to vector<16x1xf32>
    %cst_148 = arith.constant 3.200000e+01 : f32
    %349 = vector.broadcast %cst_148 : f32 to vector<16x1xf32>
    %350 = arith.divf %348, %349 : vector<16x1xf32>
    %351 = vector.broadcast %343 : vector<16x1xf32> to vector<16x32xf32>
    %352 = arith.subf %335, %351 : vector<16x32xf32>
    %cst_149 = arith.constant 9.99999996E-13 : f32
    %353 = vector.broadcast %cst_149 : f32 to vector<16x1xf32>
    %354 = arith.addf %350, %353 : vector<16x1xf32>
    %355 = math.rsqrt %354 : vector<16x1xf32>
    %356 = vector.broadcast %355 : vector<16x1xf32> to vector<16x32xf32>
    %357 = arith.mulf %352, %356 : vector<16x32xf32>
    %358 = vector.broadcast %337 : vector<1x32xf32> to vector<16x32xf32>
    %359 = arith.mulf %357, %358 : vector<16x32xf32>
    %360 = vector.broadcast %339 : vector<1x32xf32> to vector<16x32xf32>
    %361 = arith.addf %359, %360 : vector<16x32xf32>
    %362 = vector.extract_strided_slice %361 {offsets = [0, 0], sizes = [1, 32], strides = [1, 1]} : vector<16x32xf32> to vector<1x32xf32>
    %363 = vector.extract_strided_slice %361 {offsets = [8, 0], sizes = [1, 32], strides = [1, 1]} : vector<16x32xf32> to vector<1x32xf32>
    %364 = tpu.concatenate %362, %363 in 0 : vector<1x32xf32>, vector<1x32xf32> -> vector<2x32xf32>
    %c0_150 = arith.constant 0 : index
    %c0_151 = arith.constant 0 : index
    %365 = vector.load %arg17[%c0_150, %c0_151] : memref<32x32xf32, #tpu.memory_space<vmem>>, vector<32x32xf32>
    %cst_152 = arith.constant dense<0.000000e+00> : vector<2x32xf32>
    %366 = tpu.matmul %364, %365, %cst_152 {dimension_numbers = #tpu.dot_dimension_numbers<[1], [0], [0], [1], [0, 0, 1, 1], [], []>} : vector<2x32xf32>, vector<32x32xf32>, vector<2x32xf32> -> vector<2x32xf32>
    %c0_153 = arith.constant 0 : index
    %c0_154 = arith.constant 0 : index
    %367 = vector.load %arg18[%c0_153, %c0_154] : memref<1x32xf32, #tpu.memory_space<vmem>>, vector<1x32xf32>
    %368 = vector.broadcast %367 : vector<1x32xf32> to vector<2x32xf32>
    %369 = arith.addf %366, %368 : vector<2x32xf32>
    %370 = math.tanh %369 : vector<2x32xf32>
    %c0_155 = arith.constant 0 : index
    %c0_156 = arith.constant 0 : index
    %371 = vector.load %arg19[%c0_155, %c0_156] : memref<32x128xf32, #tpu.memory_space<vmem>>, vector<32x128xf32>
    %cst_157 = arith.constant dense<0.000000e+00> : vector<2x128xf32>
    %372 = tpu.matmul %370, %371, %cst_157 {dimension_numbers = #tpu.dot_dimension_numbers<[1], [0], [0], [1], [0, 0, 1, 1], [], []>} : vector<2x32xf32>, vector<32x128xf32>, vector<2x128xf32> -> vector<2x128xf32>
    %c0_158 = arith.constant 0 : index
    %c0_159 = arith.constant 0 : index
    %373 = vector.load %arg20[%c0_158, %c0_159] : memref<1x128xf32, #tpu.memory_space<vmem>>, vector<1x128xf32>
    %374 = vector.broadcast %373 : vector<1x128xf32> to vector<2x128xf32>
    %375 = arith.addf %372, %374 : vector<2x128xf32>
    %cst_160 = arith.constant 5.000000e-01 : f32
    %376 = vector.broadcast %cst_160 : f32 to vector<2x128xf32>
    %377 = arith.mulf %376, %375 : vector<2x128xf32>
    %378 = math.tanh %377 : vector<2x128xf32>
    %cst_161 = arith.constant 1.000000e+00 : f32
    %379 = vector.broadcast %cst_161 : f32 to vector<2x128xf32>
    %380 = arith.addf %379, %378 : vector<2x128xf32>
    %cst_162 = arith.constant 5.000000e-01 : f32
    %381 = vector.broadcast %cst_162 : f32 to vector<2x128xf32>
    %382 = arith.mulf %381, %380 : vector<2x128xf32>
    %c0_163 = arith.constant 0 : index
    %c0_164 = arith.constant 0 : index
    %383 = vector.load %arg23[%c0_163, %c0_164] : memref<2x128xf32, #tpu.memory_space<vmem>>, vector<2x128xf32>
    tpu.vector_store %arg23[%c0_163, %c0_164], %382 {strides = array<i32>} : memref<2x128xf32, #tpu.memory_space<vmem>>, vector<2x128xf32>,
    %c0_165 = arith.constant 0 : index
    %c0_166 = arith.constant 0 : index
    %384 = vector.load %arg21[%c0_165, %c0_166] : memref<32x128xf32, #tpu.memory_space<vmem>>, vector<32x128xf32>
    %cst_167 = arith.constant dense<0.000000e+00> : vector<16x128xf32>
    %385 = tpu.matmul %361, %384, %cst_167 {dimension_numbers = #tpu.dot_dimension_numbers<[1], [0], [0], [1], [0, 0, 1, 1], [], []>} : vector<16x32xf32>, vector<32x128xf32>, vector<16x128xf32> -> vector<16x128xf32>
    %c0_168 = arith.constant 0 : index
    %c0_169 = arith.constant 0 : index
    %386 = vector.load %arg22[%c0_168, %c0_169] : memref<1x128xf32, #tpu.memory_space<vmem>>, vector<1x128xf32>
    %387 = vector.broadcast %386 : vector<1x128xf32> to vector<16x128xf32>
    %388 = arith.addf %385, %387 : vector<16x128xf32>
    %cst_170 = arith.constant dense<0xFF800000> : vector<16xf32>
    %389 = vector.multi_reduction <maximumf>, %388, %cst_170 [1] : vector<16x128xf32> to vector<16xf32>
    %390 = vector.shape_cast %389 : vector<16xf32> to vector<16x1xf32>
    %391 = vector.broadcast %390 : vector<16x1xf32> to vector<16x128xf32>
    %392 = arith.subf %388, %391 : vector<16x128xf32>
    %393 = math.exp %392 : vector<16x128xf32>
    %cst_171 = arith.constant dense<0.000000e+00> : vector<16xf32>
    %394 = vector.multi_reduction <add>, %393, %cst_171 [1] : vector<16x128xf32> to vector<16xf32>
    %395 = vector.shape_cast %394 : vector<16xf32> to vector<16x1xf32>
    %396 = vector.broadcast %395 : vector<16x1xf32> to vector<16x128xf32>
    %397 = arith.divf %393, %396 : vector<16x128xf32>
    %c0_172 = arith.constant 0 : index
    %c0_173 = arith.constant 0 : index
    %398 = vector.load %arg24[%c0_172, %c0_173] : memref<16x128xf32, #tpu.memory_space<vmem>>, vector<16x128xf32>
    tpu.vector_store %arg24[%c0_172, %c0_173], %397 {strides = array<i32>} : memref<16x128xf32, #tpu.memory_space<vmem>>, vector<16x128xf32>,
    return
  }
  func.func @transform_0(%arg0: i32) -> (i32, i32) {
    %c0_i32 = arith.constant 0 : i32
    %c0_i32_0 = arith.constant 0 : i32
    %c0_i32_1 = arith.constant 0 : i32
    return %c0_i32, %c0_i32_0 : i32, i32
  }
  func.func @transform_1(%arg0: i32) -> (i32, i32) {
    %c0_i32 = arith.constant 0 : i32
    %c0_i32_0 = arith.constant 0 : i32
    %c0_i32_1 = arith.constant 0 : i32
    return %c0_i32, %c0_i32_0 : i32, i32
  }
  func.func @transform_2(%arg0: i32) -> (i32, i32) {
    %c0_i32 = arith.constant 0 : i32
    %c0_i32_0 = arith.constant 0 : i32
    %c0_i32_1 = arith.constant 0 : i32
    return %c0_i32, %c0_i32_0 : i32, i32
  }
  func.func @transform_3(%arg0: i32) -> (i32, i32) {
    %c0_i32 = arith.constant 0 : i32
    %c0_i32_0 = arith.constant 0 : i32
    %c0_i32_1 = arith.constant 0 : i32
    return %c0_i32, %c0_i32_0 : i32, i32
  }
  func.func @transform_4(%arg0: i32) -> (i32, i32, i32) {
    %c0_i32 = arith.constant 0 : i32
    %c0_i32_0 = arith.constant 0 : i32
    %c0_i32_1 = arith.constant 0 : i32
    %c0_i32_2 = arith.constant 0 : i32
    return %c0_i32, %c0_i32_0, %c0_i32_1 : i32, i32, i32
  }
  func.func @transform_5(%arg0: i32) -> (i32, i32, i32) {
    %c0_i32 = arith.constant 0 : i32
    %c0_i32_0 = arith.constant 0 : i32
    %c0_i32_1 = arith.constant 0 : i32
    %c0_i32_2 = arith.constant 0 : i32
    return %c0_i32, %c0_i32_0, %c0_i32_1 : i32, i32, i32
  }
  func.func @transform_6(%arg0: i32) -> (i32, i32, i32) {
    %c0_i32 = arith.constant 0 : i32
    %c0_i32_0 = arith.constant 0 : i32
    %c0_i32_1 = arith.constant 0 : i32
    %c0_i32_2 = arith.constant 0 : i32
    return %c0_i32, %c0_i32_0, %c0_i32_1 : i32, i32, i32
  }
  func.func @transform_7(%arg0: i32) -> (i32, i32, i32) {
    %c0_i32 = arith.constant 0 : i32
    %c0_i32_0 = arith.constant 0 : i32
    %c0_i32_1 = arith.constant 0 : i32
    %c0_i32_2 = arith.constant 0 : i32
    return %c0_i32, %c0_i32_0, %c0_i32_1 : i32, i32, i32
  }
  func.func @transform_8(%arg0: i32) -> (i32, i32, i32) {
    %c0_i32 = arith.constant 0 : i32
    %c0_i32_0 = arith.constant 0 : i32
    %c0_i32_1 = arith.constant 0 : i32
    %c0_i32_2 = arith.constant 0 : i32
    return %c0_i32, %c0_i32_0, %c0_i32_1 : i32, i32, i32
  }
  func.func @transform_9(%arg0: i32) -> (i32, i32, i32) {
    %c0_i32 = arith.constant 0 : i32
    %c0_i32_0 = arith.constant 0 : i32
    %c0_i32_1 = arith.constant 0 : i32
    %c0_i32_2 = arith.constant 0 : i32
    return %c0_i32, %c0_i32_0, %c0_i32_1 : i32, i32, i32
  }
  func.func @transform_10(%arg0: i32) -> (i32, i32, i32) {
    %c0_i32 = arith.constant 0 : i32
    %c0_i32_0 = arith.constant 0 : i32
    %c0_i32_1 = arith.constant 0 : i32
    %c0_i32_2 = arith.constant 0 : i32
    return %c0_i32, %c0_i32_0, %c0_i32_1 : i32, i32, i32
  }
  func.func @transform_11(%arg0: i32) -> (i32, i32, i32) {
    %c0_i32 = arith.constant 0 : i32
    %c0_i32_0 = arith.constant 0 : i32
    %c0_i32_1 = arith.constant 0 : i32
    %c0_i32_2 = arith.constant 0 : i32
    return %c0_i32, %c0_i32_0, %c0_i32_1 : i32, i32, i32
  }
  func.func @transform_12(%arg0: i32) -> (i32, i32, i32) {
    %c0_i32 = arith.constant 0 : i32
    %c0_i32_0 = arith.constant 0 : i32
    %c0_i32_1 = arith.constant 0 : i32
    %c0_i32_2 = arith.constant 0 : i32
    return %c0_i32, %c0_i32_0, %c0_i32_1 : i32, i32, i32
  }
  func.func @transform_13(%arg0: i32) -> (i32, i32, i32) {
    %c0_i32 = arith.constant 0 : i32
    %c0_i32_0 = arith.constant 0 : i32
    %c0_i32_1 = arith.constant 0 : i32
    %c0_i32_2 = arith.constant 0 : i32
    return %c0_i32, %c0_i32_0, %c0_i32_1 : i32, i32, i32
  }
  func.func @transform_14(%arg0: i32) -> (i32, i32, i32) {
    %c0_i32 = arith.constant 0 : i32
    %c0_i32_0 = arith.constant 0 : i32
    %c0_i32_1 = arith.constant 0 : i32
    %c0_i32_2 = arith.constant 0 : i32
    return %c0_i32, %c0_i32_0, %c0_i32_1 : i32, i32, i32
  }
  func.func @transform_15(%arg0: i32) -> (i32, i32, i32) {
    %c0_i32 = arith.constant 0 : i32
    %c0_i32_0 = arith.constant 0 : i32
    %c0_i32_1 = arith.constant 0 : i32
    %c0_i32_2 = arith.constant 0 : i32
    return %c0_i32, %c0_i32_0, %c0_i32_1 : i32, i32, i32
  }
  func.func @transform_16(%arg0: i32) -> (i32, i32) {
    %c0_i32 = arith.constant 0 : i32
    %c0_i32_0 = arith.constant 0 : i32
    %c0_i32_1 = arith.constant 0 : i32
    return %c0_i32, %c0_i32_0 : i32, i32
  }
  func.func @transform_17(%arg0: i32) -> (i32, i32) {
    %c0_i32 = arith.constant 0 : i32
    %c0_i32_0 = arith.constant 0 : i32
    %c0_i32_1 = arith.constant 0 : i32
    return %c0_i32, %c0_i32_0 : i32, i32
  }
  func.func @transform_18(%arg0: i32) -> (i32, i32) {
    %c0_i32 = arith.constant 0 : i32
    %c0_i32_0 = arith.constant 0 : i32
    %c0_i32_1 = arith.constant 0 : i32
    return %c0_i32, %c0_i32_0 : i32, i32
  }
  func.func @transform_19(%arg0: i32) -> (i32, i32) {
    %c0_i32 = arith.constant 0 : i32
    %c0_i32_0 = arith.constant 0 : i32
    %c0_i32_1 = arith.constant 0 : i32
    return %c0_i32, %c0_i32_0 : i32, i32
  }
  func.func @transform_20(%arg0: i32) -> (i32, i32) {
    %c0_i32 = arith.constant 0 : i32
    %c0_i32_0 = arith.constant 0 : i32
    %c0_i32_1 = arith.constant 0 : i32
    return %c0_i32, %c0_i32_0 : i32, i32
  }
  func.func @transform_21(%arg0: i32) -> (i32, i32) {
    %c0_i32 = arith.constant 0 : i32
    %c0_i32_0 = arith.constant 0 : i32
    %c0_i32_1 = arith.constant 0 : i32
    return %c0_i32, %c0_i32_0 : i32, i32
  }
  func.func @transform_22(%arg0: i32) -> (i32, i32) {
    %c0_i32 = arith.constant 0 : i32
    %c0_i32_0 = arith.constant 0 : i32
    %c0_i32_1 = arith.constant 0 : i32
    return %c0_i32, %c0_i32_0 : i32, i32
  }
  func.func @transform_23(%arg0: i32) -> (i32, i32) {
    %c0_i32 = arith.constant 0 : i32
    %c0_i32_0 = arith.constant 0 : i32
    %c0_i32_1 = arith.constant 0 : i32
    return %c0_i32, %c0_i32_0 : i32, i32
  }
}

</mosaic_0001>

<llo_original>
// kernel: muti_joint_forward.1
$region0: #{muti_joint_forward.1}
  #allocation0 [shape = 'u32[]', space=smem, size = 0x4, offset = 0x4, fixed_abs, tag = 'smem constant byte address 0x4 - core index']
  #allocation1 [shape = 'u32[144,128]{1,0:T(1,128)}', space=vmem, size = 0x12000, scoped, tag = 'internal scratch']
  %s0 = inlined_call_operand.vmem [shape: f32[16,32], index: 0, kind: input, shape index: {}]
  %s1 = inlined_call_operand.vmem [shape: f32[2,8], index: 1, kind: input, shape index: {}]
  %s2 = inlined_call_operand.vmem [shape: f32[1,32], index: 2, kind: input, shape index: {}]
  %s3 = inlined_call_operand.vmem [shape: f32[1,32], index: 3, kind: input, shape index: {}]
  %s4 = inlined_call_operand.vmem [shape: f32[2,32,96], index: 4, kind: input, shape index: {}]
  %s5 = inlined_call_operand.vmem [shape: f32[2,1,96], index: 5, kind: input, shape index: {}]
  %s6 = inlined_call_operand.vmem [shape: f32[2,32,32], index: 6, kind: input, shape index: {}]
  %s7 = inlined_call_operand.vmem [shape: f32[2,1,32], index: 7, kind: input, shape index: {}]
  %s8 = inlined_call_operand.vmem [shape: f32[2,1,32], index: 8, kind: input, shape index: {}]
  %s9 = inlined_call_operand.vmem [shape: f32[2,1,32], index: 9, kind: input, shape index: {}]
  %s10 = inlined_call_operand.vmem [shape: f32[2,32,64], index: 10, kind: input, shape index: {}]
  %s11 = inlined_call_operand.vmem [shape: f32[2,1,64], index: 11, kind: input, shape index: {}]
  %s12 = inlined_call_operand.vmem [shape: f32[2,64,32], index: 12, kind: input, shape index: {}]
  %s13 = inlined_call_operand.vmem [shape: f32[2,1,32], index: 13, kind: input, shape index: {}]
  %s14 = inlined_call_operand.vmem [shape: f32[2,1,32], index: 14, kind: input, shape index: {}]
  %s15 = inlined_call_operand.vmem [shape: f32[2,1,32], index: 15, kind: input, shape index: {}]
  %s16 = inlined_call_operand.vmem [shape: f32[32,32], index: 16, kind: input, shape index: {}]
  %s17 = inlined_call_operand.vmem [shape: f32[1,32], index: 17, kind: input, shape index: {}]
  %s18 = inlined_call_operand.vmem [shape: f32[32,128], index: 18, kind: input, shape index: {}]
  %s19 = inlined_call_operand.vmem [shape: f32[1,128], index: 19, kind: input, shape index: {}]
  %s20 = inlined_call_operand.vmem [shape: f32[32,128], index: 20, kind: input, shape index: {}]
  %s21 = inlined_call_operand.vmem [shape: f32[1,128], index: 21, kind: input, shape index: {}]
  %s22 = inlined_call_operand.hbm [shape: f32[2,128], index: 22, kind: output, shape index: {0}]
  %s23 = inlined_call_operand.vmem [shape: f32[16,128], index: 23, kind: output, shape index: {1}]
  %24 = xla_tuple %s22, %s23
  %s25 = sld [smem:[#allocation0]]
  $region106: #{muti_joint_forward.1} parent=0
    _
  %s27 = ssub.s32 1, %s25
  %s28 = scalar_select 0, %s27, %s25
  $region1: #{muti_joint_forward.1} parent=0
    #allocation2 [shape = 'u8[1024]{0}', space=vmem, size = 0x400, scoped, tag = 'output window, operand 0, single buffered']
    #allocation3 [shape = 's32[1]{0}', space=sflag, size = 0x4, scoped, tag = 'scoped memory for muti_joint_forward.1']
    %29 = vsyncpa [#allocation3], 0
    // Predicated region
    $region2: #{muti_joint_forward.1} parent=1 // pred_check
      _
    $region3: #{muti_joint_forward.1} parent=1 // pred_check_branch
      %31 = sbr.rel (0) target = $region5
    $region4: #{muti_joint_forward.1} parent=1 // pred_region
      _
    $region5: #{muti_joint_forward.1} parent=1 // pred_fallthru
      _
    // Predicated region
    $region6: #{muti_joint_forward.1} parent=1 // pred_check
      _
    $region7: #{muti_joint_forward.1} parent=1 // pred_check_branch
      %33 = sbr.rel (0) target = $region9
    $region8: #{muti_joint_forward.1} parent=1 // pred_region
      _
    $region9: #{muti_joint_forward.1} parent=1 // pred_fallthru
      _
    // Predicated region
    $region10: #{muti_joint_forward.1} parent=1 // pred_check
      _
    $region11: #{muti_joint_forward.1} parent=1 // pred_check_branch
      %35 = sbr.rel (0) target = $region13
    $region12: #{muti_joint_forward.1} parent=1 // pred_region
      _
    $region13: #{muti_joint_forward.1} parent=1 // pred_fallthru
      _
    // Predicated region
    $region14: #{muti_joint_forward.1} parent=1 // pred_check
      _
    $region15: #{muti_joint_forward.1} parent=1 // pred_check_branch
      %37 = sbr.rel (0) target = $region17
    $region16: #{muti_joint_forward.1} parent=1 // pred_region
      _
    $region17: #{muti_joint_forward.1} parent=1 // pred_fallthru
      _
    // Predicated region
    $region18: #{muti_joint_forward.1} parent=1 // pred_check
      _
    $region19: #{muti_joint_forward.1} parent=1 // pred_check_branch
      %39 = sbr.rel (0) target = $region21
    $region20: #{muti_joint_forward.1} parent=1 // pred_region
      _
    $region21: #{muti_joint_forward.1} parent=1 // pred_fallthru
      _
    // Predicated region
    $region22: #{muti_joint_forward.1} parent=1 // pred_check
      _
    $region23: #{muti_joint_forward.1} parent=1 // pred_check_branch
      %41 = sbr.rel (0) target = $region25
    $region24: #{muti_joint_forward.1} parent=1 // pred_region
      _
    $region25: #{muti_joint_forward.1} parent=1 // pred_fallthru
      _
    // Predicated region
    $region26: #{muti_joint_forward.1} parent=1 // pred_check
      _
    $region27: #{muti_joint_forward.1} parent=1 // pred_check_branch
      %43 = sbr.rel (0) target = $region29
    $region28: #{muti_joint_forward.1} parent=1 // pred_region
      _
    $region29: #{muti_joint_forward.1} parent=1 // pred_fallthru
      _
    // Predicated region
    $region30: #{muti_joint_forward.1} parent=1 // pred_check
      _
    $region31: #{muti_joint_forward.1} parent=1 // pred_check_branch
      %45 = sbr.rel (0) target = $region33
    $region32: #{muti_joint_forward.1} parent=1 // pred_region
      _
    $region33: #{muti_joint_forward.1} parent=1 // pred_fallthru
      _
    // Predicated region
    $region34: #{muti_joint_forward.1} parent=1 // pred_check
      _
    $region35: #{muti_joint_forward.1} parent=1 // pred_check_branch
      %47 = sbr.rel (0) target = $region37
    $region36: #{muti_joint_forward.1} parent=1 // pred_region
      _
    $region37: #{muti_joint_forward.1} parent=1 // pred_fallthru
      _
    // Predicated region
    $region38: #{muti_joint_forward.1} parent=1 // pred_check
      _
    $region39: #{muti_joint_forward.1} parent=1 // pred_check_branch
      %49 = sbr.rel (0) target = $region41
    $region40: #{muti_joint_forward.1} parent=1 // pred_region
      _
    $region41: #{muti_joint_forward.1} parent=1 // pred_fallthru
      _
    // Predicated region
    $region42: #{muti_joint_forward.1} parent=1 // pred_check
      _
    $region43: #{muti_joint_forward.1} parent=1 // pred_check_branch
      %51 = sbr.rel (0) target = $region45
    $region44: #{muti_joint_forward.1} parent=1 // pred_region
      _
    $region45: #{muti_joint_forward.1} parent=1 // pred_fallthru
      _
    // Predicated region
    $region46: #{muti_joint_forward.1} parent=1 // pred_check
      _
    $region47: #{muti_joint_forward.1} parent=1 // pred_check_branch
      %53 = sbr.rel (0) target = $region49
    $region48: #{muti_joint_forward.1} parent=1 // pred_region
      _
    $region49: #{muti_joint_forward.1} parent=1 // pred_fallthru
      _
    // Predicated region
    $region50: #{muti_joint_forward.1} parent=1 // pred_check
      _
    $region51: #{muti_joint_forward.1} parent=1 // pred_check_branch
      %55 = sbr.rel (0) target = $region53
    $region52: #{muti_joint_forward.1} parent=1 // pred_region
      _
    $region53: #{muti_joint_forward.1} parent=1 // pred_fallthru
      _
    // Predicated region
    $region54: #{muti_joint_forward.1} parent=1 // pred_check
      _
    $region55: #{muti_joint_forward.1} parent=1 // pred_check_branch
      %57 = sbr.rel (0) target = $region57
    $region56: #{muti_joint_forward.1} parent=1 // pred_region
      _
    $region57: #{muti_joint_forward.1} parent=1 // pred_fallthru
      _
    // Predicated region
    $region58: #{muti_joint_forward.1} parent=1 // pred_check
      _
    $region59: #{muti_joint_forward.1} parent=1 // pred_check_branch
      %59 = sbr.rel (0) target = $region61
    $region60: #{muti_joint_forward.1} parent=1 // pred_region
      _
    $region61: #{muti_joint_forward.1} parent=1 // pred_fallthru
      _
    // Predicated region
    $region62: #{muti_joint_forward.1} parent=1 // pred_check
      _
    $region63: #{muti_joint_forward.1} parent=1 // pred_check_branch
      %61 = sbr.rel (0) target = $region65
    $region64: #{muti_joint_forward.1} parent=1 // pred_region
      _
    $region65: #{muti_joint_forward.1} parent=1 // pred_fallthru
      _
    // Predicated region
    $region66: #{muti_joint_forward.1} parent=1 // pred_check
      _
    $region67: #{muti_joint_forward.1} parent=1 // pred_check_branch
      %63 = sbr.rel (0) target = $region69
    $region68: #{muti_joint_forward.1} parent=1 // pred_region
      _
    $region69: #{muti_joint_forward.1} parent=1 // pred_fallthru
      _
    // Predicated region
    $region70: #{muti_joint_forward.1} parent=1 // pred_check
      _
    $region71: #{muti_joint_forward.1} parent=1 // pred_check_branch
      %65 = sbr.rel (0) target = $region73
    $region72: #{muti_joint_forward.1} parent=1 // pred_region
      _
    $region73: #{muti_joint_forward.1} parent=1 // pred_fallthru
      _
    // Predicated region
    $region74: #{muti_joint_forward.1} parent=1 // pred_check
      _
    $region75: #{muti_joint_forward.1} parent=1 // pred_check_branch
      %67 = sbr.rel (0) target = $region77
    $region76: #{muti_joint_forward.1} parent=1 // pred_region
      _
    $region77: #{muti_joint_forward.1} parent=1 // pred_fallthru
      _
    // Predicated region
    $region78: #{muti_joint_forward.1} parent=1 // pred_check
      _
    $region79: #{muti_joint_forward.1} parent=1 // pred_check_branch
      %69 = sbr.rel (0) target = $region81
    $region80: #{muti_joint_forward.1} parent=1 // pred_region
      _
    $region81: #{muti_joint_forward.1} parent=1 // pred_fallthru
      _
    // Predicated region
    $region82: #{muti_joint_forward.1} parent=1 // pred_check
      _
    $region83: #{muti_joint_forward.1} parent=1 // pred_check_branch
      %71 = sbr.rel (0) target = $region85
    $region84: #{muti_joint_forward.1} parent=1 // pred_region
      _
    $region85: #{muti_joint_forward.1} parent=1 // pred_fallthru
      _
    // Predicated region
    $region86: #{muti_joint_forward.1} parent=1 // pred_check
      _
    $region87: #{muti_joint_forward.1} parent=1 // pred_check_branch
      %73 = sbr.rel (0) target = $region89
    $region88: #{muti_joint_forward.1} parent=1 // pred_region
      _
    $region89: #{muti_joint_forward.1} parent=1 // pred_fallthru
      _
    %v74 = vld [vmem:[%s0] sm:$0xff]
    %v75 = vld [vmem:[%s0 + $0x8] sm:$0xff]
    %v76 = vld [vmem:[%s1] sm:$0x3]
    %v77 = vld [vmem:[%s2] sm:$0x1]
    %v78 = vld [vmem:[%s3] sm:$0x1]
    %vm79 = vcmask 261120
    %v80 = vsel %vm79, %v74, 0.0
    %81 = vadd.xlane.f32.xlu0 %v80
    %v82 = vpop.xlane.xlu0 %81
    %v83 = vsel %vm79, %v75, 0.0
    %84 = vadd.xlane.f32.xlu0 %v83
    %v85 = vpop.xlane.xlu0 %84
    %v86 = vrcp.pop 32.0
    %v87 = vmul.f32 %v82, %v86
    %v88 = vmul.f32 %v85, %v86
    %v89 = vsub.f32 %v74, %v87
    %v90 = vsub.f32 %v75, %v88
    %v91 = vmul.f32 %v89, %v89
    %v92 = vmul.f32 %v90, %v90
    %v93 = vsel %vm79, %v91, 0.0
    %94 = vadd.xlane.f32.xlu0 %v93
    %v95 = vpop.xlane.xlu0 %94
    %v96 = vsel %vm79, %v92, 0.0
    %97 = vadd.xlane.f32.xlu0 %v96
    %v98 = vpop.xlane.xlu0 %97
    %v99 = vmul.f32 %v95, %v86
    %v100 = vmul.f32 %v98, %v86
    %v101 = vadd.f32 %v99, 1e-12
    %v102 = vadd.f32 %v100, 1e-12
    %v103 = vrsqrt.pop %v101
    %v104 = vrsqrt.pop %v102
    %v105 = vmul.f32 %v89, %v103
    %v106 = vmul.f32 %v90, %v104
    %v108 = vlaneseq
    %v109 = vshrl.u32 %v108, 7
    %v110 = vsub.s32 0, %v109
    %v111 = vrot.slane %v77, %v110
    %v113 = vmul.f32 %v105, %v111
    %v114 = vmul.f32 %v106, %v111
    %v116 = vlaneseq
    %v117 = vshrl.u32 %v116, 7
    %v118 = vsub.s32 0, %v117
    %v119 = vrot.slane %v78, %v118
    %v121 = vadd.f32 %v113, %v119
    %v122 = vadd.f32 %v114, %v119
    %v123 = vld [vmem:[%s4] sm:$0xff]
    %v124 = vld [vmem:[%s4 + $0x8] sm:$0xff]
    %v125 = vld [vmem:[%s4 + $0x10] sm:$0xff]
    %v126 = vld [vmem:[%s4 + $0x18] sm:$0xff]
    %v127 = vld [vmem:[%s5] sm:$0x1]
    %v129 = vlaneseq
    %v130 = vshrl.u32 %v129, 7
    %v131 = vsub.s32 0, %v130
    %v132 = vrot.slane %v127, %v131
    %v135 = vsel %vm79, %v121, 0
    %v138 = vsel %vm79, %v122, 0
    %140 = vmatprep.subr.mxu0 0.0
    %141 = vmatpush1.msra.mxu0 0.0
    %142 = vmatprep.subr.mxu0 0.0
    %143 = vmatpush1.msra.mxu0 0.0
    %144 = vmatprep.subr.mxu0 0.0
    %145 = vmatpush1.msra.mxu0 0.0
    %146 = vmatprep.subr.mxu0 0.0
    %147 = vmatpush1.msra.mxu0 0.0
    %148 = vmatprep.subr.mxu0 0.0
    %149 = vmatpush1.msra.mxu0 0.0
    %150 = vmatprep.subr.mxu0 0.0
    %151 = vmatpush1.msra.mxu0 0.0
    %152 = vmatprep.subr.mxu0 0.0
    %153 = vmatpush1.msra.mxu0 0.0
    %154 = vmatprep.subr.mxu0 0.0
    %155 = vmatpush1.msra.mxu0 0.0
    %156 = vmatprep.subr.mxu0 0.0
    %157 = vmatpush1.msra.mxu0 0.0
    %158 = vmatprep.subr.mxu0 0.0
    %159 = vmatpush1.msra.mxu0 0.0
    %160 = vmatprep.subr.mxu0 0.0
    %161 = vmatpush1.msra.mxu0 0.0
    %162 = vmatprep.subr.mxu0 0.0
    %163 = vmatpush1.msra.mxu0 0.0
    %164 = vmatprep.subr.mxu0 0.0
    %165 = vmatpush1.msra.mxu0 %v126
    %166 = vmatprep.subr.mxu0 0.0
    %167 = vmatpush1.msra.mxu0 %v125
    %168 = vmatprep.subr.mxu0 0.0
    %169 = vmatpush1.msra.mxu0 %v124
    %170 = vmatprep.subr.mxu0 0.0
    %171 = vmatpush1.msra.mxu0 %v123
    %172 = vmatprep.subr.mxu0 0.0
    %173 = vmatpush2.msra.mxu0 0.0
    %174 = vmatprep.subr.mxu0 0.0
    %175 = vmatpush2.msra.mxu0 0.0
    %176 = vmatprep.subr.mxu0 0.0
    %177 = vmatpush2.msra.mxu0 0.0
    %178 = vmatprep.subr.mxu0 0.0
    %179 = vmatpush2.msra.mxu0 0.0
    %180 = vmatprep.subr.mxu0 0.0
    %181 = vmatpush2.msra.mxu0 0.0
    %182 = vmatprep.subr.mxu0 0.0
    %183 = vmatpush2.msra.mxu0 0.0
    %184 = vmatprep.subr.mxu0 0.0
    %185 = vmatpush2.msra.mxu0 0.0
    %186 = vmatprep.subr.mxu0 0.0
    %187 = vmatpush2.msra.mxu0 0.0
    %188 = vmatprep.subr.mxu0 0.0
    %189 = vmatpush2.msra.mxu0 0.0
    %190 = vmatprep.subr.mxu0 0.0
    %191 = vmatpush2.msra.mxu0 0.0
    %192 = vmatprep.subr.mxu0 0.0
    %193 = vmatpush2.msra.mxu0 0.0
    %194 = vmatprep.subr.mxu0 0.0
    %195 = vmatpush2.msra.mxu0 0.0
    %196 = vmatprep.subr.mxu0 0.0
    %197 = vmatpush2.msra.mxu0 0.0
    %198 = vmatprep.subr.mxu0 0.0
    %199 = vmatpush2.msra.mxu0 0.0
    %200 = vmatprep.subr.mxu0 0.0
    %201 = vmatpush2.msra.mxu0 0.0
    %202 = vmatprep.subr.mxu0 0.0
    %203 = vmatpush2.msra.mxu0 0.0
    %204 = vmatprep.mubr.f32.mxu0 0.0
    %205 = vmatmul.mubr.f32.gmra.mxu0 %v135
    %v206 = vpop.f32.mrf.mxu0
    %v207 = vadd.f32 %v132, %v206
    %v208 = vpop.f32.mrf.mxu0
    %209 = vmatprep.mubr.f32.mxu0 0.0
    %210 = vmatmul.mubr.f32.gmra.mxu0 %v138
    %v211 = vpop.f32.mrf.mxu0
    %v212 = vadd.f32 %v132, %v211
    %v213 = vpop.f32.mrf.mxu0
    %214 = vdwg.mxu0
    %v215 = vlaneseq
    %v216 = vshrl.u32 %v215, 7
    %v217 = vsub.s32 0, %v216
    %v218 = vrot.slane %v76, %v217
    %220 = vrot.lane.b32.xlu0 %v207, 96
    %v221 = vpop.permute.xlu0 %220
    %vm222 = vcmask 130048
    %v223 = vsel %vm222, %v207, 0
    %v225 = vsel %vm222, %v221, 0
    %227 = vmatprep.subr.mxu0 0.0
    %228 = vmatpush1.xpose.msra.mxu0 0.0
    %229 = vmatprep.subr.mxu0 0.0
    %230 = vmatpush1.xpose.msra.mxu0 0.0
    %231 = vmatprep.subr.mxu0 0.0
    %232 = vmatpush1.xpose.msra.mxu0 0.0
    %233 = vmatprep.subr.mxu0 0.0
    %234 = vmatpush1.xpose.msra.mxu0 0.0
    %235 = vmatprep.subr.mxu0 0.0
    %236 = vmatpush1.xpose.msra.mxu0 0.0
    %237 = vmatprep.subr.mxu0 0.0
    %238 = vmatpush1.xpose.msra.mxu0 0.0
    %239 = vmatprep.subr.mxu0 0.0
    %240 = vmatpush1.xpose.msra.mxu0 0.0
    %241 = vmatprep.subr.mxu0 0.0
    %242 = vmatpush1.xpose.msra.mxu0 0.0
    %243 = vmatprep.subr.mxu0 0.0
    %244 = vmatpush1.xpose.msra.mxu0 0.0
    %245 = vmatprep.subr.mxu0 0.0
    %246 = vmatpush1.xpose.msra.mxu0 0.0
    %247 = vmatprep.subr.mxu0 0.0
    %248 = vmatpush1.xpose.msra.mxu0 0.0
    %249 = vmatprep.subr.mxu0 0.0
    %250 = vmatpush1.xpose.msra.mxu0 0.0
    %251 = vmatprep.subr.mxu0 0.0
    %252 = vmatpush1.xpose.msra.mxu0 0.0
    %253 = vmatprep.subr.mxu0 0.0
    %254 = vmatpush1.xpose.msra.mxu0 0.0
    %255 = vmatprep.subr.mxu0 0.0
    %256 = vmatpush1.xpose.msra.mxu0 0.0
    %257 = vmatprep.subr.mxu0 0.0
    %258 = vmatpush1.xpose.msra.mxu0 %v225
    %259 = vmatprep.subr.mxu0 0.0
    %260 = vmatpush2.xpose.msra.mxu0 0.0
    %261 = vmatprep.subr.mxu0 0.0
    %262 = vmatpush2.xpose.msra.mxu0 0.0
    %263 = vmatprep.subr.mxu0 0.0
    %264 = vmatpush2.xpose.msra.mxu0 0.0
    %265 = vmatprep.subr.mxu0 0.0
    %266 = vmatpush2.xpose.msra.mxu0 0.0
    %267 = vmatprep.subr.mxu0 0.0
    %268 = vmatpush2.xpose.msra.mxu0 0.0
    %269 = vmatprep.subr.mxu0 0.0
    %270 = vmatpush2.xpose.msra.mxu0 0.0
    %271 = vmatprep.subr.mxu0 0.0
    %272 = vmatpush2.xpose.msra.mxu0 0.0
    %273 = vmatprep.subr.mxu0 0.0
    %274 = vmatpush2.xpose.msra.mxu0 0.0
    %275 = vmatprep.subr.mxu0 0.0
    %276 = vmatpush2.xpose.msra.mxu0 0.0
    %277 = vmatprep.subr.mxu0 0.0
    %278 = vmatpush2.xpose.msra.mxu0 0.0
    %279 = vmatprep.subr.mxu0 0.0
    %280 = vmatpush2.xpose.msra.mxu0 0.0
    %281 = vmatprep.subr.mxu0 0.0
    %282 = vmatpush2.xpose.msra.mxu0 0.0
    %283 = vmatprep.subr.mxu0 0.0
    %284 = vmatpush2.xpose.msra.mxu0 0.0
    %285 = vmatprep.subr.mxu0 0.0
    %286 = vmatpush2.xpose.msra.mxu0 0.0
    %287 = vmatprep.subr.mxu0 0.0
    %288 = vmatpush2.xpose.msra.mxu0 0.0
    %289 = vmatprep.subr.mxu0 0.0
    %290 = vmatpush2.xpose.msra.mxu0 0.0
    %291 = vmatprep.mubr.f32.mxu0 0.0
    %292 = vmatmul.mubr.f32.gmra.mxu0 %v223
    %v293 = vpop.f32.mrf.mxu0
    %v294 = vadd.f32 %v218, %v293
    %v295 = vpop.f32.mrf.mxu0
    %296 = vdwg.mxu0
    %vm297 = vcmask 64512
    %v298 = vsel %vm297, %v294, -inf
    %299 = vmax.xlane.f32.xlu0 %v298
    %v300 = vpop.xlane.xlu0 %299
    %v301 = vsub.f32 %v294, %v300
    %v302 = vmul.f32 %v301, 1.442695
    %v303 = vpow.pop %v302
    %v304 = vsel %vm297, %v303, 0.0
    %305 = vadd.xlane.f32.xlu0 %v304
    %v306 = vpop.xlane.xlu0 %305
    %v307 = vrcp.pop %v306
    %v308 = vmul.f32 %v303, %v307
    %309 = vrot.lane.b32.xlu0 %v207, 64
    %v310 = vpop.permute.xlu0 %309
    %v313 = vsel %vm297, %v308, 0
    %315 = vmatprep.subr.mxu0 0.0
    %316 = vmatpush1.msra.mxu0 0.0
    %317 = vmatprep.subr.mxu0 0.0
    %318 = vmatpush1.msra.mxu0 0.0
    %319 = vmatprep.subr.mxu0 0.0
    %320 = vmatpush1.msra.mxu0 0.0
    %321 = vmatprep.subr.mxu0 0.0
    %322 = vmatpush1.msra.mxu0 0.0
    %323 = vmatprep.subr.mxu0 0.0
    %324 = vmatpush1.msra.mxu0 0.0
    %325 = vmatprep.subr.mxu0 0.0
    %326 = vmatpush1.msra.mxu0 0.0
    %327 = vmatprep.subr.mxu0 0.0
    %328 = vmatpush1.msra.mxu0 0.0
    %329 = vmatprep.subr.mxu0 0.0
    %330 = vmatpush1.msra.mxu0 0.0
    %331 = vmatprep.subr.mxu0 0.0
    %332 = vmatpush1.msra.mxu0 0.0
    %333 = vmatprep.subr.mxu0 0.0
    %334 = vmatpush1.msra.mxu0 0.0
    %335 = vmatprep.subr.mxu0 0.0
    %336 = vmatpush1.msra.mxu0 0.0
    %337 = vmatprep.subr.mxu0 0.0
    %338 = vmatpush1.msra.mxu0 0.0
    %339 = vmatprep.subr.mxu0 0.0
    %340 = vmatpush1.msra.mxu0 0.0
    %341 = vmatprep.subr.mxu0 0.0
    %342 = vmatpush1.msra.mxu0 0.0
    %343 = vmatprep.subr.mxu0 0.0
    %344 = vmatpush1.msra.mxu0 0.0
    %345 = vmatprep.subr.mxu0 0.0
    %346 = vmatpush1.msra.mxu0 %v310
    %347 = vmatprep.subr.mxu0 0.0
    %348 = vmatpush2.msra.mxu0 0.0
    %349 = vmatprep.subr.mxu0 0.0
    %350 = vmatpush2.msra.mxu0 0.0
    %351 = vmatprep.subr.mxu0 0.0
    %352 = vmatpush2.msra.mxu0 0.0
    %353 = vmatprep.subr.mxu0 0.0
    %354 = vmatpush2.msra.mxu0 0.0
    %355 = vmatprep.subr.mxu0 0.0
    %356 = vmatpush2.msra.mxu0 0.0
    %357 = vmatprep.subr.mxu0 0.0
    %358 = vmatpush2.msra.mxu0 0.0
    %359 = vmatprep.subr.mxu0 0.0
    %360 = vmatpush2.msra.mxu0 0.0
    %361 = vmatprep.subr.mxu0 0.0
    %362 = vmatpush2.msra.mxu0 0.0
    %363 = vmatprep.subr.mxu0 0.0
    %364 = vmatpush2.msra.mxu0 0.0
    %365 = vmatprep.subr.mxu0 0.0
    %366 = vmatpush2.msra.mxu0 0.0
    %367 = vmatprep.subr.mxu0 0.0
    %368 = vmatpush2.msra.mxu0 0.0
    %369 = vmatprep.subr.mxu0 0.0
    %370 = vmatpush2.msra.mxu0 0.0
    %371 = vmatprep.subr.mxu0 0.0
    %372 = vmatpush2.msra.mxu0 0.0
    %373 = vmatprep.subr.mxu0 0.0
    %374 = vmatpush2.msra.mxu0 0.0
    %375 = vmatprep.subr.mxu0 0.0
    %376 = vmatpush2.msra.mxu0 0.0
    %377 = vmatprep.subr.mxu0 0.0
    %378 = vmatpush2.msra.mxu0 0.0
    %379 = vmatprep.mubr.f32.mxu0 0.0
    %380 = vmatmul.mubr.f32.gmra.mxu0 %v313
    %v381 = vpop.f32.mrf.mxu0
    %v382 = vadd.f32 0.0, %v381
    %v383 = vpop.f32.mrf.mxu0
    %384 = vdwg.mxu0
    %385 = vrot.lane.b32.xlu0 %v207, 112
    %v386 = vpop.permute.xlu0 %385
    %387 = vrot.lane.b32.xlu0 %v207, 80
    %v388 = vpop.permute.xlu0 %387
    %v389 = vsel %vm222, %v386, 0
    %v391 = vsel %vm222, %v388, 0
    %393 = vmatprep.subr.mxu0 0.0
    %394 = vmatpush1.xpose.msra.mxu0 0.0
    %395 = vmatprep.subr.mxu0 0.0
    %396 = vmatpush1.xpose.msra.mxu0 0.0
    %397 = vmatprep.subr.mxu0 0.0
    %398 = vmatpush1.xpose.msra.mxu0 0.0
    %399 = vmatprep.subr.mxu0 0.0
    %400 = vmatpush1.xpose.msra.mxu0 0.0
    %401 = vmatprep.subr.mxu0 0.0
    %402 = vmatpush1.xpose.msra.mxu0 0.0
    %403 = vmatprep.subr.mxu0 0.0
    %404 = vmatpush1.xpose.msra.mxu0 0.0
    %405 = vmatprep.subr.mxu0 0.0
    %406 = vmatpush1.xpose.msra.mxu0 0.0
    %407 = vmatprep.subr.mxu0 0.0
    %408 = vmatpush1.xpose.msra.mxu0 0.0
    %409 = vmatprep.subr.mxu0 0.0
    %410 = vmatpush1.xpose.msra.mxu0 0.0
    %411 = vmatprep.subr.mxu0 0.0
    %412 = vmatpush1.xpose.msra.mxu0 0.0
    %413 = vmatprep.subr.mxu0 0.0
    %414 = vmatpush1.xpose.msra.mxu0 0.0
    %415 = vmatprep.subr.mxu0 0.0
    %416 = vmatpush1.xpose.msra.mxu0 0.0
    %417 = vmatprep.subr.mxu0 0.0
    %418 = vmatpush1.xpose.msra.mxu0 0.0
    %419 = vmatprep.subr.mxu0 0.0
    %420 = vmatpush1.xpose.msra.mxu0 0.0
    %421 = vmatprep.subr.mxu0 0.0
    %422 = vmatpush1.xpose.msra.mxu0 0.0
    %423 = vmatprep.subr.mxu0 0.0
    %424 = vmatpush1.xpose.msra.mxu0 %v391
    %425 = vmatprep.subr.mxu0 0.0
    %426 = vmatpush2.xpose.msra.mxu0 0.0
    %427 = vmatprep.subr.mxu0 0.0
    %428 = vmatpush2.xpose.msra.mxu0 0.0
    %429 = vmatprep.subr.mxu0 0.0
    %430 = vmatpush2.xpose.msra.mxu0 0.0
    %431 = vmatprep.subr.mxu0 0.0
    %432 = vmatpush2.xpose.msra.mxu0 0.0
    %433 = vmatprep.subr.mxu0 0.0
    %434 = vmatpush2.xpose.msra.mxu0 0.0
    %435 = vmatprep.subr.mxu0 0.0
    %436 = vmatpush2.xpose.msra.mxu0 0.0
    %437 = vmatprep.subr.mxu0 0.0
    %438 = vmatpush2.xpose.msra.mxu0 0.0
    %439 = vmatprep.subr.mxu0 0.0
    %440 = vmatpush2.xpose.msra.mxu0 0.0
    %441 = vmatprep.subr.mxu0 0.0
    %442 = vmatpush2.xpose.msra.mxu0 0.0
    %443 = vmatprep.subr.mxu0 0.0
    %444 = vmatpush2.xpose.msra.mxu0 0.0
    %445 = vmatprep.subr.mxu0 0.0
    %446 = vmatpush2.xpose.msra.mxu0 0.0
    %447 = vmatprep.subr.mxu0 0.0
    %448 = vmatpush2.xpose.msra.mxu0 0.0
    %449 = vmatprep.subr.mxu0 0.0
    %450 = vmatpush2.xpose.msra.mxu0 0.0
    %451 = vmatprep.subr.mxu0 0.0
    %452 = vmatpush2.xpose.msra.mxu0 0.0
    %453 = vmatprep.subr.mxu0 0.0
    %454 = vmatpush2.xpose.msra.mxu0 0.0
    %455 = vmatprep.subr.mxu0 0.0
    %456 = vmatpush2.xpose.msra.mxu0 0.0
    %457 = vmatprep.mubr.f32.mxu0 0.0
    %458 = vmatmul.mubr.f32.gmra.mxu0 %v389
    %v459 = vpop.f32.mrf.mxu0
    %v460 = vadd.f32 %v218, %v459
    %v461 = vpop.f32.mrf.mxu0
    %462 = vdwg.mxu0
    %v463 = vsel %vm297, %v460, -inf
    %464 = vmax.xlane.f32.xlu0 %v463
    %v465 = vpop.xlane.xlu0 %464
    %v466 = vsub.f32 %v460, %v465
    %v467 = vmul.f32 %v466, 1.442695
    %v468 = vpow.pop %v467
    %v469 = vsel %vm297, %v468, 0.0
    %470 = vadd.xlane.f32.xlu0 %v469
    %v471 = vpop.xlane.xlu0 %470
    %v472 = vrcp.pop %v471
    %v473 = vmul.f32 %v468, %v472
    %474 = vrot.lane.b32.xlu0 %v207, 48
    %v475 = vpop.permute.xlu0 %474
    %v478 = vsel %vm297, %v473, 0
    %480 = vmatprep.subr.mxu0 0.0
    %481 = vmatpush1.msra.mxu0 0.0
    %482 = vmatprep.subr.mxu0 0.0
    %483 = vmatpush1.msra.mxu0 0.0
    %484 = vmatprep.subr.mxu0 0.0
    %485 = vmatpush1.msra.mxu0 0.0
    %486 = vmatprep.subr.mxu0 0.0
    %487 = vmatpush1.msra.mxu0 0.0
    %488 = vmatprep.subr.mxu0 0.0
    %489 = vmatpush1.msra.mxu0 0.0
    %490 = vmatprep.subr.mxu0 0.0
    %491 = vmatpush1.msra.mxu0 0.0
    %492 = vmatprep.subr.mxu0 0.0
    %493 = vmatpush1.msra.mxu0 0.0
    %494 = vmatprep.subr.mxu0 0.0
    %495 = vmatpush1.msra.mxu0 0.0
    %496 = vmatprep.subr.mxu0 0.0
    %497 = vmatpush1.msra.mxu0 0.0
    %498 = vmatprep.subr.mxu0 0.0
    %499 = vmatpush1.msra.mxu0 0.0
    %500 = vmatprep.subr.mxu0 0.0
    %501 = vmatpush1.msra.mxu0 0.0
    %502 = vmatprep.subr.mxu0 0.0
    %503 = vmatpush1.msra.mxu0 0.0
    %504 = vmatprep.subr.mxu0 0.0
    %505 = vmatpush1.msra.mxu0 0.0
    %506 = vmatprep.subr.mxu0 0.0
    %507 = vmatpush1.msra.mxu0 0.0
    %508 = vmatprep.subr.mxu0 0.0
    %509 = vmatpush1.msra.mxu0 0.0
    %510 = vmatprep.subr.mxu0 0.0
    %511 = vmatpush1.msra.mxu0 %v475
    %512 = vmatprep.subr.mxu0 0.0
    %513 = vmatpush2.msra.mxu0 0.0
    %514 = vmatprep.subr.mxu0 0.0
    %515 = vmatpush2.msra.mxu0 0.0
    %516 = vmatprep.subr.mxu0 0.0
    %517 = vmatpush2.msra.mxu0 0.0
    %518 = vmatprep.subr.mxu0 0.0
    %519 = vmatpush2.msra.mxu0 0.0
    %520 = vmatprep.subr.mxu0 0.0
    %521 = vmatpush2.msra.mxu0 0.0
    %522 = vmatprep.subr.mxu0 0.0
    %523 = vmatpush2.msra.mxu0 0.0
    %524 = vmatprep.subr.mxu0 0.0
    %525 = vmatpush2.msra.mxu0 0.0
    %526 = vmatprep.subr.mxu0 0.0
    %527 = vmatpush2.msra.mxu0 0.0
    %528 = vmatprep.subr.mxu0 0.0
    %529 = vmatpush2.msra.mxu0 0.0
    %530 = vmatprep.subr.mxu0 0.0
    %531 = vmatpush2.msra.mxu0 0.0
    %532 = vmatprep.subr.mxu0 0.0
    %533 = vmatpush2.msra.mxu0 0.0
    %534 = vmatprep.subr.mxu0 0.0
    %535 = vmatpush2.msra.mxu0 0.0
    %536 = vmatprep.subr.mxu0 0.0
    %537 = vmatpush2.msra.mxu0 0.0
    %538 = vmatprep.subr.mxu0 0.0
    %539 = vmatpush2.msra.mxu0 0.0
    %540 = vmatprep.subr.mxu0 0.0
    %541 = vmatpush2.msra.mxu0 0.0
    %542 = vmatprep.subr.mxu0 0.0
    %543 = vmatpush2.msra.mxu0 0.0
    %544 = vmatprep.mubr.f32.mxu0 0.0
    %545 = vmatmul.mubr.f32.gmra.mxu0 %v478
    %v546 = vpop.f32.mrf.mxu0
    %v547 = vadd.f32 0.0, %v546
    %v548 = vpop.f32.mrf.mxu0
    %549 = vdwg.mxu0
    %551 = vrot.lane.b32.xlu0 %v547, 16
    %v552 = vpop.permute.xlu0 %551
    %v554 = vsel %vm222, %v382, %v552
    %v555 = vlaneseq
    %v556 = vshrl.u32 %v555, 7
    %v557 = vsub.s32 1, %v556
    %v558 = vrot.slane %v76, %v557
    %560 = vrot.lane.b32.xlu0 %v212, 96
    %v561 = vpop.permute.xlu0 %560
    %v562 = vsel %vm222, %v212, 0
    %v564 = vsel %vm222, %v561, 0
    %566 = vmatprep.subr.mxu0 0.0
    %567 = vmatpush1.xpose.msra.mxu0 0.0
    %568 = vmatprep.subr.mxu0 0.0
    %569 = vmatpush1.xpose.msra.mxu0 0.0
    %570 = vmatprep.subr.mxu0 0.0
    %571 = vmatpush1.xpose.msra.mxu0 0.0
    %572 = vmatprep.subr.mxu0 0.0
    %573 = vmatpush1.xpose.msra.mxu0 0.0
    %574 = vmatprep.subr.mxu0 0.0
    %575 = vmatpush1.xpose.msra.mxu0 0.0
    %576 = vmatprep.subr.mxu0 0.0
    %577 = vmatpush1.xpose.msra.mxu0 0.0
    %578 = vmatprep.subr.mxu0 0.0
    %579 = vmatpush1.xpose.msra.mxu0 0.0
    %580 = vmatprep.subr.mxu0 0.0
    %581 = vmatpush1.xpose.msra.mxu0 0.0
    %582 = vmatprep.subr.mxu0 0.0
    %583 = vmatpush1.xpose.msra.mxu0 0.0
    %584 = vmatprep.subr.mxu0 0.0
    %585 = vmatpush1.xpose.msra.mxu0 0.0
    %586 = vmatprep.subr.mxu0 0.0
    %587 = vmatpush1.xpose.msra.mxu0 0.0
    %588 = vmatprep.subr.mxu0 0.0
    %589 = vmatpush1.xpose.msra.mxu0 0.0
    %590 = vmatprep.subr.mxu0 0.0
    %591 = vmatpush1.xpose.msra.mxu0 0.0
    %592 = vmatprep.subr.mxu0 0.0
    %593 = vmatpush1.xpose.msra.mxu0 0.0
    %594 = vmatprep.subr.mxu0 0.0
    %595 = vmatpush1.xpose.msra.mxu0 0.0
    %596 = vmatprep.subr.mxu0 0.0
    %597 = vmatpush1.xpose.msra.mxu0 %v564
    %598 = vmatprep.subr.mxu0 0.0
    %599 = vmatpush2.xpose.msra.mxu0 0.0
    %600 = vmatprep.subr.mxu0 0.0
    %601 = vmatpush2.xpose.msra.mxu0 0.0
    %602 = vmatprep.subr.mxu0 0.0
    %603 = vmatpush2.xpose.msra.mxu0 0.0
    %604 = vmatprep.subr.mxu0 0.0
    %605 = vmatpush2.xpose.msra.mxu0 0.0
    %606 = vmatprep.subr.mxu0 0.0
    %607 = vmatpush2.xpose.msra.mxu0 0.0
    %608 = vmatprep.subr.mxu0 0.0
    %609 = vmatpush2.xpose.msra.mxu0 0.0
    %610 = vmatprep.subr.mxu0 0.0
    %611 = vmatpush2.xpose.msra.mxu0 0.0
    %612 = vmatprep.subr.mxu0 0.0
    %613 = vmatpush2.xpose.msra.mxu0 0.0
    %614 = vmatprep.subr.mxu0 0.0
    %615 = vmatpush2.xpose.msra.mxu0 0.0
    %616 = vmatprep.subr.mxu0 0.0
    %617 = vmatpush2.xpose.msra.mxu0 0.0
    %618 = vmatprep.subr.mxu0 0.0
    %619 = vmatpush2.xpose.msra.mxu0 0.0
    %620 = vmatprep.subr.mxu0 0.0
    %621 = vmatpush2.xpose.msra.mxu0 0.0
    %622 = vmatprep.subr.mxu0 0.0
    %623 = vmatpush2.xpose.msra.mxu0 0.0
    %624 = vmatprep.subr.mxu0 0.0
    %625 = vmatpush2.xpose.msra.mxu0 0.0
    %626 = vmatprep.subr.mxu0 0.0
    %627 = vmatpush2.xpose.msra.mxu0 0.0
    %628 = vmatprep.subr.mxu0 0.0
    %629 = vmatpush2.xpose.msra.mxu0 0.0
    %630 = vmatprep.mubr.f32.mxu0 0.0
    %631 = vmatmul.mubr.f32.gmra.mxu0 %v562
    %v632 = vpop.f32.mrf.mxu0
    %v633 = vadd.f32 %v558, %v632
    %v634 = vpop.f32.mrf.mxu0
    %635 = vdwg.mxu0
    %v636 = vsel %vm297, %v633, -inf
    %637 = vmax.xlane.f32.xlu0 %v636
    %v638 = vpop.xlane.xlu0 %637
    %v639 = vsub.f32 %v633, %v638
    %v640 = vmul.f32 %v639, 1.442695
    %v641 = vpow.pop %v640
    %v642 = vsel %vm297, %v641, 0.0
    %643 = vadd.xlane.f32.xlu0 %v642
    %v644 = vpop.xlane.xlu0 %643
    %v645 = vrcp.pop %v644
    %v646 = vmul.f32 %v641, %v645
    %647 = vrot.lane.b32.xlu0 %v212, 64
    %v648 = vpop.permute.xlu0 %647
    %v651 = vsel %vm297, %v646, 0
    %653 = vmatprep.subr.mxu0 0.0
    %654 = vmatpush1.msra.mxu0 0.0
    %655 = vmatprep.subr.mxu0 0.0
    %656 = vmatpush1.msra.mxu0 0.0
    %657 = vmatprep.subr.mxu0 0.0
    %658 = vmatpush1.msra.mxu0 0.0
    %659 = vmatprep.subr.mxu0 0.0
    %660 = vmatpush1.msra.mxu0 0.0
    %661 = vmatprep.subr.mxu0 0.0
    %662 = vmatpush1.msra.mxu0 0.0
    %663 = vmatprep.subr.mxu0 0.0
    %664 = vmatpush1.msra.mxu0 0.0
    %665 = vmatprep.subr.mxu0 0.0
    %666 = vmatpush1.msra.mxu0 0.0
    %667 = vmatprep.subr.mxu0 0.0
    %668 = vmatpush1.msra.mxu0 0.0
    %669 = vmatprep.subr.mxu0 0.0
    %670 = vmatpush1.msra.mxu0 0.0
    %671 = vmatprep.subr.mxu0 0.0
    %672 = vmatpush1.msra.mxu0 0.0
    %673 = vmatprep.subr.mxu0 0.0
    %674 = vmatpush1.msra.mxu0 0.0
    %675 = vmatprep.subr.mxu0 0.0
    %676 = vmatpush1.msra.mxu0 0.0
    %677 = vmatprep.subr.mxu0 0.0
    %678 = vmatpush1.msra.mxu0 0.0
    %679 = vmatprep.subr.mxu0 0.0
    %680 = vmatpush1.msra.mxu0 0.0
    %681 = vmatprep.subr.mxu0 0.0
    %682 = vmatpush1.msra.mxu0 0.0
    %683 = vmatprep.subr.mxu0 0.0
    %684 = vmatpush1.msra.mxu0 %v648
    %685 = vmatprep.subr.mxu0 0.0
    %686 = vmatpush2.msra.mxu0 0.0
    %687 = vmatprep.subr.mxu0 0.0
    %688 = vmatpush2.msra.mxu0 0.0
    %689 = vmatprep.subr.mxu0 0.0
    %690 = vmatpush2.msra.mxu0 0.0
    %691 = vmatprep.subr.mxu0 0.0
    %692 = vmatpush2.msra.mxu0 0.0
    %693 = vmatprep.subr.mxu0 0.0
    %694 = vmatpush2.msra.mxu0 0.0
    %695 = vmatprep.subr.mxu0 0.0
    %696 = vmatpush2.msra.mxu0 0.0
    %697 = vmatprep.subr.mxu0 0.0
    %698 = vmatpush2.msra.mxu0 0.0
    %699 = vmatprep.subr.mxu0 0.0
    %700 = vmatpush2.msra.mxu0 0.0
    %701 = vmatprep.subr.mxu0 0.0
    %702 = vmatpush2.msra.mxu0 0.0
    %703 = vmatprep.subr.mxu0 0.0
    %704 = vmatpush2.msra.mxu0 0.0
    %705 = vmatprep.subr.mxu0 0.0
    %706 = vmatpush2.msra.mxu0 0.0
    %707 = vmatprep.subr.mxu0 0.0
    %708 = vmatpush2.msra.mxu0 0.0
    %709 = vmatprep.subr.mxu0 0.0
    %710 = vmatpush2.msra.mxu0 0.0
    %711 = vmatprep.subr.mxu0 0.0
    %712 = vmatpush2.msra.mxu0 0.0
    %713 = vmatprep.subr.mxu0 0.0
    %714 = vmatpush2.msra.mxu0 0.0
    %715 = vmatprep.subr.mxu0 0.0
    %716 = vmatpush2.msra.mxu0 0.0
    %717 = vmatprep.mubr.f32.mxu0 0.0
    %718 = vmatmul.mubr.f32.gmra.mxu0 %v651
    %v719 = vpop.f32.mrf.mxu0
    %v720 = vadd.f32 0.0, %v719
    %v721 = vpop.f32.mrf.mxu0
    %722 = vdwg.mxu0
    %723 = vrot.lane.b32.xlu0 %v212, 112
    %v724 = vpop.permute.xlu0 %723
    %725 = vrot.lane.b32.xlu0 %v212, 80
    %v726 = vpop.permute.xlu0 %725
    %v727 = vsel %vm222, %v724, 0
    %v729 = vsel %vm222, %v726, 0
    %731 = vmatprep.subr.mxu0 0.0
    %732 = vmatpush1.xpose.msra.mxu0 0.0
    %733 = vmatprep.subr.mxu0 0.0
    %734 = vmatpush1.xpose.msra.mxu0 0.0
    %735 = vmatprep.subr.mxu0 0.0
    %736 = vmatpush1.xpose.msra.mxu0 0.0
    %737 = vmatprep.subr.mxu0 0.0
    %738 = vmatpush1.xpose.msra.mxu0 0.0
    %739 = vmatprep.subr.mxu0 0.0
    %740 = vmatpush1.xpose.msra.mxu0 0.0
    %741 = vmatprep.subr.mxu0 0.0
    %742 = vmatpush1.xpose.msra.mxu0 0.0
    %743 = vmatprep.subr.mxu0 0.0
    %744 = vmatpush1.xpose.msra.mxu0 0.0
    %745 = vmatprep.subr.mxu0 0.0
    %746 = vmatpush1.xpose.msra.mxu0 0.0
    %747 = vmatprep.subr.mxu0 0.0
    %748 = vmatpush1.xpose.msra.mxu0 0.0
    %749 = vmatprep.subr.mxu0 0.0
    %750 = vmatpush1.xpose.msra.mxu0 0.0
    %751 = vmatprep.subr.mxu0 0.0
    %752 = vmatpush1.xpose.msra.mxu0 0.0
    %753 = vmatprep.subr.mxu0 0.0
    %754 = vmatpush1.xpose.msra.mxu0 0.0
    %755 = vmatprep.subr.mxu0 0.0
    %756 = vmatpush1.xpose.msra.mxu0 0.0
    %757 = vmatprep.subr.mxu0 0.0
    %758 = vmatpush1.xpose.msra.mxu0 0.0
    %759 = vmatprep.subr.mxu0 0.0
    %760 = vmatpush1.xpose.msra.mxu0 0.0
    %761 = vmatprep.subr.mxu0 0.0
    %762 = vmatpush1.xpose.msra.mxu0 %v729
    %763 = vmatprep.subr.mxu0 0.0
    %764 = vmatpush2.xpose.msra.mxu0 0.0
    %765 = vmatprep.subr.mxu0 0.0
    %766 = vmatpush2.xpose.msra.mxu0 0.0
    %767 = vmatprep.subr.mxu0 0.0
    %768 = vmatpush2.xpose.msra.mxu0 0.0
    %769 = vmatprep.subr.mxu0 0.0
    %770 = vmatpush2.xpose.msra.mxu0 0.0
    %771 = vmatprep.subr.mxu0 0.0
    %772 = vmatpush2.xpose.msra.mxu0 0.0
    %773 = vmatprep.subr.mxu0 0.0
    %774 = vmatpush2.xpose.msra.mxu0 0.0
    %775 = vmatprep.subr.mxu0 0.0
    %776 = vmatpush2.xpose.msra.mxu0 0.0
    %777 = vmatprep.subr.mxu0 0.0
    %778 = vmatpush2.xpose.msra.mxu0 0.0
    %779 = vmatprep.subr.mxu0 0.0
    %780 = vmatpush2.xpose.msra.mxu0 0.0
    %781 = vmatprep.subr.mxu0 0.0
    %782 = vmatpush2.xpose.msra.mxu0 0.0
    %783 = vmatprep.subr.mxu0 0.0
    %784 = vmatpush2.xpose.msra.mxu0 0.0
    %785 = vmatprep.subr.mxu0 0.0
    %786 = vmatpush2.xpose.msra.mxu0 0.0
    %787 = vmatprep.subr.mxu0 0.0
    %788 = vmatpush2.xpose.msra.mxu0 0.0
    %789 = vmatprep.subr.mxu0 0.0
    %790 = vmatpush2.xpose.msra.mxu0 0.0
    %791 = vmatprep.subr.mxu0 0.0
    %792 = vmatpush2.xpose.msra.mxu0 0.0
    %793 = vmatprep.subr.mxu0 0.0
    %794 = vmatpush2.xpose.msra.mxu0 0.0
    %795 = vmatprep.mubr.f32.mxu0 0.0
    %796 = vmatmul.mubr.f32.gmra.mxu0 %v727
    %v797 = vpop.f32.mrf.mxu0
    %v798 = vadd.f32 %v558, %v797
    %v799 = vpop.f32.mrf.mxu0
    %800 = vdwg.mxu0
    %v801 = vsel %vm297, %v798, -inf
    %802 = vmax.xlane.f32.xlu0 %v801
    %v803 = vpop.xlane.xlu0 %802
    %v804 = vsub.f32 %v798, %v803
    %v805 = vmul.f32 %v804, 1.442695
    %v806 = vpow.pop %v805
    %v807 = vsel %vm297, %v806, 0.0
    %808 = vadd.xlane.f32.xlu0 %v807
    %v809 = vpop.xlane.xlu0 %808
    %v810 = vrcp.pop %v809
    %v811 = vmul.f32 %v806, %v810
    %812 = vrot.lane.b32.xlu0 %v212, 48
    %v813 = vpop.permute.xlu0 %812
    %v816 = vsel %vm297, %v811, 0
    %818 = vmatprep.subr.mxu0 0.0
    %819 = vmatpush1.msra.mxu0 0.0
    %820 = vmatprep.subr.mxu0 0.0
    %821 = vmatpush1.msra.mxu0 0.0
    %822 = vmatprep.subr.mxu0 0.0
    %823 = vmatpush1.msra.mxu0 0.0
    %824 = vmatprep.subr.mxu0 0.0
    %825 = vmatpush1.msra.mxu0 0.0
    %826 = vmatprep.subr.mxu0 0.0
    %827 = vmatpush1.msra.mxu0 0.0
    %828 = vmatprep.subr.mxu0 0.0
    %829 = vmatpush1.msra.mxu0 0.0
    %830 = vmatprep.subr.mxu0 0.0
    %831 = vmatpush1.msra.mxu0 0.0
    %832 = vmatprep.subr.mxu0 0.0
    %833 = vmatpush1.msra.mxu0 0.0
    %834 = vmatprep.subr.mxu0 0.0
    %835 = vmatpush1.msra.mxu0 0.0
    %836 = vmatprep.subr.mxu0 0.0
    %837 = vmatpush1.msra.mxu0 0.0
    %838 = vmatprep.subr.mxu0 0.0
    %839 = vmatpush1.msra.mxu0 0.0
    %840 = vmatprep.subr.mxu0 0.0
    %841 = vmatpush1.msra.mxu0 0.0
    %842 = vmatprep.subr.mxu0 0.0
    %843 = vmatpush1.msra.mxu0 0.0
    %844 = vmatprep.subr.mxu0 0.0
    %845 = vmatpush1.msra.mxu0 0.0
    %846 = vmatprep.subr.mxu0 0.0
    %847 = vmatpush1.msra.mxu0 0.0
    %848 = vmatprep.subr.mxu0 0.0
    %849 = vmatpush1.msra.mxu0 %v813
    %850 = vmatprep.subr.mxu0 0.0
    %851 = vmatpush2.msra.mxu0 0.0
    %852 = vmatprep.subr.mxu0 0.0
    %853 = vmatpush2.msra.mxu0 0.0
    %854 = vmatprep.subr.mxu0 0.0
    %855 = vmatpush2.msra.mxu0 0.0
    %856 = vmatprep.subr.mxu0 0.0
    %857 = vmatpush2.msra.mxu0 0.0
    %858 = vmatprep.subr.mxu0 0.0
    %859 = vmatpush2.msra.mxu0 0.0
    %860 = vmatprep.subr.mxu0 0.0
    %861 = vmatpush2.msra.mxu0 0.0
    %862 = vmatprep.subr.mxu0 0.0
    %863 = vmatpush2.msra.mxu0 0.0
    %864 = vmatprep.subr.mxu0 0.0
    %865 = vmatpush2.msra.mxu0 0.0
    %866 = vmatprep.subr.mxu0 0.0
    %867 = vmatpush2.msra.mxu0 0.0
    %868 = vmatprep.subr.mxu0 0.0
    %869 = vmatpush2.msra.mxu0 0.0
    %870 = vmatprep.subr.mxu0 0.0
    %871 = vmatpush2.msra.mxu0 0.0
    %872 = vmatprep.subr.mxu0 0.0
    %873 = vmatpush2.msra.mxu0 0.0
    %874 = vmatprep.subr.mxu0 0.0
    %875 = vmatpush2.msra.mxu0 0.0
    %876 = vmatprep.subr.mxu0 0.0
    %877 = vmatpush2.msra.mxu0 0.0
    %878 = vmatprep.subr.mxu0 0.0
    %879 = vmatpush2.msra.mxu0 0.0
    %880 = vmatprep.subr.mxu0 0.0
    %881 = vmatpush2.msra.mxu0 0.0
    %882 = vmatprep.mubr.f32.mxu0 0.0
    %883 = vmatmul.mubr.f32.gmra.mxu0 %v816
    %v884 = vpop.f32.mrf.mxu0
    %v885 = vadd.f32 0.0, %v884
    %v886 = vpop.f32.mrf.mxu0
    %887 = vdwg.mxu0
    %889 = vrot.lane.b32.xlu0 %v885, 16
    %v890 = vpop.permute.xlu0 %889
    %v892 = vsel %vm222, %v720, %v890
    %v893 = vld [vmem:[%s6] sm:$0xff]
    %v894 = vld [vmem:[%s6 + $0x8] sm:$0xff]
    %v895 = vld [vmem:[%s6 + $0x10] sm:$0xff]
    %v896 = vld [vmem:[%s6 + $0x18] sm:$0xff]
    %v897 = vld [vmem:[%s7] sm:$0x1]
    %v899 = vlaneseq
    %v900 = vshrl.u32 %v899, 7
    %v901 = vsub.s32 0, %v900
    %v902 = vrot.slane %v897, %v901
    %v905 = vsel %vm79, %v554, 0
    %v908 = vsel %vm79, %v892, 0
    %910 = vmatprep.subr.mxu0 0.0
    %911 = vmatpush1.msra.mxu0 0.0
    %912 = vmatprep.subr.mxu0 0.0
    %913 = vmatpush1.msra.mxu0 0.0
    %914 = vmatprep.subr.mxu0 0.0
    %915 = vmatpush1.msra.mxu0 0.0
    %916 = vmatprep.subr.mxu0 0.0
    %917 = vmatpush1.msra.mxu0 0.0
    %918 = vmatprep.subr.mxu0 0.0
    %919 = vmatpush1.msra.mxu0 0.0
    %920 = vmatprep.subr.mxu0 0.0
    %921 = vmatpush1.msra.mxu0 0.0
    %922 = vmatprep.subr.mxu0 0.0
    %923 = vmatpush1.msra.mxu0 0.0
    %924 = vmatprep.subr.mxu0 0.0
    %925 = vmatpush1.msra.mxu0 0.0
    %926 = vmatprep.subr.mxu0 0.0
    %927 = vmatpush1.msra.mxu0 0.0
    %928 = vmatprep.subr.mxu0 0.0
    %929 = vmatpush1.msra.mxu0 0.0
    %930 = vmatprep.subr.mxu0 0.0
    %931 = vmatpush1.msra.mxu0 0.0
    %932 = vmatprep.subr.mxu0 0.0
    %933 = vmatpush1.msra.mxu0 0.0
    %934 = vmatprep.subr.mxu0 0.0
    %935 = vmatpush1.msra.mxu0 %v896
    %936 = vmatprep.subr.mxu0 0.0
    %937 = vmatpush1.msra.mxu0 %v895
    %938 = vmatprep.subr.mxu0 0.0
    %939 = vmatpush1.msra.mxu0 %v894
    %940 = vmatprep.subr.mxu0 0.0
    %941 = vmatpush1.msra.mxu0 %v893
    %942 = vmatprep.subr.mxu0 0.0
    %943 = vmatpush2.msra.mxu0 0.0
    %944 = vmatprep.subr.mxu0 0.0
    %945 = vmatpush2.msra.mxu0 0.0
    %946 = vmatprep.subr.mxu0 0.0
    %947 = vmatpush2.msra.mxu0 0.0
    %948 = vmatprep.subr.mxu0 0.0
    %949 = vmatpush2.msra.mxu0 0.0
    %950 = vmatprep.subr.mxu0 0.0
    %951 = vmatpush2.msra.mxu0 0.0
    %952 = vmatprep.subr.mxu0 0.0
    %953 = vmatpush2.msra.mxu0 0.0
    %954 = vmatprep.subr.mxu0 0.0
    %955 = vmatpush2.msra.mxu0 0.0
    %956 = vmatprep.subr.mxu0 0.0
    %957 = vmatpush2.msra.mxu0 0.0
    %958 = vmatprep.subr.mxu0 0.0
    %959 = vmatpush2.msra.mxu0 0.0
    %960 = vmatprep.subr.mxu0 0.0
    %961 = vmatpush2.msra.mxu0 0.0
    %962 = vmatprep.subr.mxu0 0.0
    %963 = vmatpush2.msra.mxu0 0.0
    %964 = vmatprep.subr.mxu0 0.0
    %965 = vmatpush2.msra.mxu0 0.0
    %966 = vmatprep.subr.mxu0 0.0
    %967 = vmatpush2.msra.mxu0 0.0
    %968 = vmatprep.subr.mxu0 0.0
    %969 = vmatpush2.msra.mxu0 0.0
    %970 = vmatprep.subr.mxu0 0.0
    %971 = vmatpush2.msra.mxu0 0.0
    %972 = vmatprep.subr.mxu0 0.0
    %973 = vmatpush2.msra.mxu0 0.0
    %974 = vmatprep.mubr.f32.mxu0 0.0
    %975 = vmatmul.mubr.f32.gmra.mxu0 %v905
    %v976 = vpop.f32.mrf.mxu0
    %v977 = vadd.f32 %v902, %v976
    %v978 = vpop.f32.mrf.mxu0
    %979 = vmatprep.mubr.f32.mxu0 0.0
    %980 = vmatmul.mubr.f32.gmra.mxu0 %v908
    %v981 = vpop.f32.mrf.mxu0
    %v982 = vadd.f32 %v902, %v981
    %v983 = vpop.f32.mrf.mxu0
    %984 = vdwg.mxu0
    %v985 = vadd.f32 %v977, %v121
    %v986 = vadd.f32 %v982, %v122
    %v987 = vld [vmem:[%s8] sm:$0x1]
    %v988 = vld [vmem:[%s9] sm:$0x1]
    %v989 = vsel %vm79, %v985, 0.0
    %990 = vadd.xlane.f32.xlu0 %v989
    %v991 = vpop.xlane.xlu0 %990
    %v992 = vsel %vm79, %v986, 0.0
    %993 = vadd.xlane.f32.xlu0 %v992
    %v994 = vpop.xlane.xlu0 %993
    %v995 = vmul.f32 %v991, %v86
    %v996 = vmul.f32 %v994, %v86
    %v997 = vsub.f32 %v985, %v995
    %v998 = vsub.f32 %v986, %v996
    %v999 = vmul.f32 %v997, %v997
    %v1000 = vmul.f32 %v998, %v998
    %v1001 = vsel %vm79, %v999, 0.0
    %1002 = vadd.xlane.f32.xlu0 %v1001
    %v1003 = vpop.xlane.xlu0 %1002
    %v1004 = vsel %vm79, %v1000, 0.0
    %1005 = vadd.xlane.f32.xlu0 %v1004
    %v1006 = vpop.xlane.xlu0 %1005
    %v1007 = vmul.f32 %v1003, %v86
    %v1008 = vmul.f32 %v1006, %v86
    %v1009 = vadd.f32 %v1007, 1e-12
    %v1010 = vadd.f32 %v1008, 1e-12
    %v1011 = vrsqrt.pop %v1009
    %v1012 = vrsqrt.pop %v1010
    %v1013 = vmul.f32 %v997, %v1011
    %v1014 = vmul.f32 %v998, %v1012
    %v1016 = vlaneseq
    %v1017 = vshrl.u32 %v1016, 7
    %v1018 = vsub.s32 0, %v1017
    %v1019 = vrot.slane %v987, %v1018
    %v1021 = vmul.f32 %v1013, %v1019
    %v1022 = vmul.f32 %v1014, %v1019
    %v1024 = vlaneseq
    %v1025 = vshrl.u32 %v1024, 7
    %v1026 = vsub.s32 0, %v1025
    %v1027 = vrot.slane %v988, %v1026
    %v1029 = vadd.f32 %v1021, %v1027
    %v1030 = vadd.f32 %v1022, %v1027
    %v1031 = vld [vmem:[%s10] sm:$0xff]
    %v1032 = vld [vmem:[%s10 + $0x8] sm:$0xff]
    %v1033 = vld [vmem:[%s10 + $0x10] sm:$0xff]
    %v1034 = vld [vmem:[%s10 + $0x18] sm:$0xff]
    %v1035 = vld [vmem:[%s11] sm:$0x1]
    %v1037 = vlaneseq
    %v1038 = vshrl.u32 %v1037, 7
    %v1039 = vsub.s32 0, %v1038
    %v1040 = vrot.slane %v1035, %v1039
    %v1043 = vsel %vm79, %v1029, 0
    %v1046 = vsel %vm79, %v1030, 0
    %1048 = vmatprep.subr.mxu0 0.0
    %1049 = vmatpush1.msra.mxu0 0.0
    %1050 = vmatprep.subr.mxu0 0.0
    %1051 = vmatpush1.msra.mxu0 0.0
    %1052 = vmatprep.subr.mxu0 0.0
    %1053 = vmatpush1.msra.mxu0 0.0
    %1054 = vmatprep.subr.mxu0 0.0
    %1055 = vmatpush1.msra.mxu0 0.0
    %1056 = vmatprep.subr.mxu0 0.0
    %1057 = vmatpush1.msra.mxu0 0.0
    %1058 = vmatprep.subr.mxu0 0.0
    %1059 = vmatpush1.msra.mxu0 0.0
    %1060 = vmatprep.subr.mxu0 0.0
    %1061 = vmatpush1.msra.mxu0 0.0
    %1062 = vmatprep.subr.mxu0 0.0
    %1063 = vmatpush1.msra.mxu0 0.0
    %1064 = vmatprep.subr.mxu0 0.0
    %1065 = vmatpush1.msra.mxu0 0.0
    %1066 = vmatprep.subr.mxu0 0.0
    %1067 = vmatpush1.msra.mxu0 0.0
    %1068 = vmatprep.subr.mxu0 0.0
    %1069 = vmatpush1.msra.mxu0 0.0
    %1070 = vmatprep.subr.mxu0 0.0
    %1071 = vmatpush1.msra.mxu0 0.0
    %1072 = vmatprep.subr.mxu0 0.0
    %1073 = vmatpush1.msra.mxu0 %v1034
    %1074 = vmatprep.subr.mxu0 0.0
    %1075 = vmatpush1.msra.mxu0 %v1033
    %1076 = vmatprep.subr.mxu0 0.0
    %1077 = vmatpush1.msra.mxu0 %v1032
    %1078 = vmatprep.subr.mxu0 0.0
    %1079 = vmatpush1.msra.mxu0 %v1031
    %1080 = vmatprep.subr.mxu0 0.0
    %1081 = vmatpush2.msra.mxu0 0.0
    %1082 = vmatprep.subr.mxu0 0.0
    %1083 = vmatpush2.msra.mxu0 0.0
    %1084 = vmatprep.subr.mxu0 0.0
    %1085 = vmatpush2.msra.mxu0 0.0
    %1086 = vmatprep.subr.mxu0 0.0
    %1087 = vmatpush2.msra.mxu0 0.0
    %1088 = vmatprep.subr.mxu0 0.0
    %1089 = vmatpush2.msra.mxu0 0.0
    %1090 = vmatprep.subr.mxu0 0.0
    %1091 = vmatpush2.msra.mxu0 0.0
    %1092 = vmatprep.subr.mxu0 0.0
    %1093 = vmatpush2.msra.mxu0 0.0
    %1094 = vmatprep.subr.mxu0 0.0
    %1095 = vmatpush2.msra.mxu0 0.0
    %1096 = vmatprep.subr.mxu0 0.0
    %1097 = vmatpush2.msra.mxu0 0.0
    %1098 = vmatprep.subr.mxu0 0.0
    %1099 = vmatpush2.msra.mxu0 0.0
    %1100 = vmatprep.subr.mxu0 0.0
    %1101 = vmatpush2.msra.mxu0 0.0
    %1102 = vmatprep.subr.mxu0 0.0
    %1103 = vmatpush2.msra.mxu0 0.0
    %1104 = vmatprep.subr.mxu0 0.0
    %1105 = vmatpush2.msra.mxu0 0.0
    %1106 = vmatprep.subr.mxu0 0.0
    %1107 = vmatpush2.msra.mxu0 0.0
    %1108 = vmatprep.subr.mxu0 0.0
    %1109 = vmatpush2.msra.mxu0 0.0
    %1110 = vmatprep.subr.mxu0 0.0
    %1111 = vmatpush2.msra.mxu0 0.0
    %1112 = vmatprep.mubr.f32.mxu0 0.0
    %1113 = vmatmul.mubr.f32.gmra.mxu0 %v1043
    %v1114 = vpop.f32.mrf.mxu0
    %v1115 = vadd.f32 %v1040, %v1114
    %v1116 = vpop.f32.mrf.mxu0
    %1117 = vmatprep.mubr.f32.mxu0 0.0
    %1118 = vmatmul.mubr.f32.gmra.mxu0 %v1046
    %v1119 = vpop.f32.mrf.mxu0
    %v1120 = vadd.f32 %v1040, %v1119
    %v1121 = vpop.f32.mrf.mxu0
    %1122 = vdwg.mxu0
    %v1123 = vmul.f32 %v1115, 0.5
    %v1124 = vmul.f32 %v1120, 0.5
    %v1125 = vmul.f32 %v1115, 0.044715
    %v1126 = vmul.f32 %v1120, 0.044715
    %v1127 = vmul.f32 %v1125, %v1115
    %v1128 = vmul.f32 %v1126, %v1120
    %v1129 = vmul.f32 %v1127, %v1115
    %v1130 = vmul.f32 %v1128, %v1120
    %v1131 = vadd.f32 %v1115, %v1129
    %v1132 = vadd.f32 %v1120, %v1130
    %v1133 = vmul.f32 %v1131, 0.7978846
    %v1134 = vmul.f32 %v1132, 0.7978846
    %v1135 = vtanh.pop %v1133
    %v1136 = vtanh.pop %v1134
    %v1137 = vadd.f32 %v1135, 1.0
    %v1138 = vadd.f32 %v1136, 1.0
    %v1139 = vmul.f32 %v1123, %v1137
    %v1140 = vmul.f32 %v1124, %v1138
    %v1141 = vld [vmem:[%s12] sm:$0xff]
    %v1142 = vld [vmem:[%s12 + $0x8] sm:$0xff]
    %v1143 = vld [vmem:[%s12 + $0x10] sm:$0xff]
    %v1144 = vld [vmem:[%s12 + $0x18] sm:$0xff]
    %v1145 = vld [vmem:[%s12 + $0x20] sm:$0xff]
    %v1146 = vld [vmem:[%s12 + $0x28] sm:$0xff]
    %v1147 = vld [vmem:[%s12 + $0x30] sm:$0xff]
    %v1148 = vld [vmem:[%s12 + $0x38] sm:$0xff]
    %v1149 = vld [vmem:[%s13] sm:$0x1]
    %v1151 = vlaneseq
    %v1152 = vshrl.u32 %v1151, 7
    %v1153 = vsub.s32 0, %v1152
    %v1154 = vrot.slane %v1149, %v1153
    %vm1156 = vcmask 523264
    %v1158 = vsel %vm1156, %v1139, 0
    %v1161 = vsel %vm1156, %v1140, 0
    %1163 = vmatprep.subr.mxu0 0.0
    %1164 = vmatpush1.msra.mxu0 0.0
    %1165 = vmatprep.subr.mxu0 0.0
    %1166 = vmatpush1.msra.mxu0 0.0
    %1167 = vmatprep.subr.mxu0 0.0
    %1168 = vmatpush1.msra.mxu0 0.0
    %1169 = vmatprep.subr.mxu0 0.0
    %1170 = vmatpush1.msra.mxu0 0.0
    %1171 = vmatprep.subr.mxu0 0.0
    %1172 = vmatpush1.msra.mxu0 0.0
    %1173 = vmatprep.subr.mxu0 0.0
    %1174 = vmatpush1.msra.mxu0 0.0
    %1175 = vmatprep.subr.mxu0 0.0
    %1176 = vmatpush1.msra.mxu0 0.0
    %1177 = vmatprep.subr.mxu0 0.0
    %1178 = vmatpush1.msra.mxu0 0.0
    %1179 = vmatprep.subr.mxu0 0.0
    %1180 = vmatpush1.msra.mxu0 %v1148
    %1181 = vmatprep.subr.mxu0 0.0
    %1182 = vmatpush1.msra.mxu0 %v1147
    %1183 = vmatprep.subr.mxu0 0.0
    %1184 = vmatpush1.msra.mxu0 %v1146
    %1185 = vmatprep.subr.mxu0 0.0
    %1186 = vmatpush1.msra.mxu0 %v1145
    %1187 = vmatprep.subr.mxu0 0.0
    %1188 = vmatpush1.msra.mxu0 %v1144
    %1189 = vmatprep.subr.mxu0 0.0
    %1190 = vmatpush1.msra.mxu0 %v1143
    %1191 = vmatprep.subr.mxu0 0.0
    %1192 = vmatpush1.msra.mxu0 %v1142
    %1193 = vmatprep.subr.mxu0 0.0
    %1194 = vmatpush1.msra.mxu0 %v1141
    %1195 = vmatprep.subr.mxu0 0.0
    %1196 = vmatpush2.msra.mxu0 0.0
    %1197 = vmatprep.subr.mxu0 0.0
    %1198 = vmatpush2.msra.mxu0 0.0
    %1199 = vmatprep.subr.mxu0 0.0
    %1200 = vmatpush2.msra.mxu0 0.0
    %1201 = vmatprep.subr.mxu0 0.0
    %1202 = vmatpush2.msra.mxu0 0.0
    %1203 = vmatprep.subr.mxu0 0.0
    %1204 = vmatpush2.msra.mxu0 0.0
    %1205 = vmatprep.subr.mxu0 0.0
    %1206 = vmatpush2.msra.mxu0 0.0
    %1207 = vmatprep.subr.mxu0 0.0
    %1208 = vmatpush2.msra.mxu0 0.0
    %1209 = vmatprep.subr.mxu0 0.0
    %1210 = vmatpush2.msra.mxu0 0.0
    %1211 = vmatprep.subr.mxu0 0.0
    %1212 = vmatpush2.msra.mxu0 0.0
    %1213 = vmatprep.subr.mxu0 0.0
    %1214 = vmatpush2.msra.mxu0 0.0
    %1215 = vmatprep.subr.mxu0 0.0
    %1216 = vmatpush2.msra.mxu0 0.0
    %1217 = vmatprep.subr.mxu0 0.0
    %1218 = vmatpush2.msra.mxu0 0.0
    %1219 = vmatprep.subr.mxu0 0.0
    %1220 = vmatpush2.msra.mxu0 0.0
    %1221 = vmatprep.subr.mxu0 0.0
    %1222 = vmatpush2.msra.mxu0 0.0
    %1223 = vmatprep.subr.mxu0 0.0
    %1224 = vmatpush2.msra.mxu0 0.0
    %1225 = vmatprep.subr.mxu0 0.0
    %1226 = vmatpush2.msra.mxu0 0.0
    %1227 = vmatprep.mubr.f32.mxu0 0.0
    %1228 = vmatmul.mubr.f32.gmra.mxu0 %v1158
    %v1229 = vpop.f32.mrf.mxu0
    %v1230 = vadd.f32 %v1154, %v1229
    %v1231 = vpop.f32.mrf.mxu0
    %1232 = vmatprep.mubr.f32.mxu0 0.0
    %1233 = vmatmul.mubr.f32.gmra.mxu0 %v1161
    %v1234 = vpop.f32.mrf.mxu0
    %v1235 = vadd.f32 %v1154, %v1234
    %v1236 = vpop.f32.mrf.mxu0
    %1237 = vdwg.mxu0
    %v1238 = vadd.f32 %v1230, %v1029
    %v1239 = vadd.f32 %v1235, %v1030
    %v1240 = vld [vmem:[%s14] sm:$0x1]
    %v1241 = vld [vmem:[%s15] sm:$0x1]
    %v1242 = vsel %vm79, %v1238, 0.0
    %1243 = vadd.xlane.f32.xlu0 %v1242
    %v1244 = vpop.xlane.xlu0 %1243
    %v1245 = vsel %vm79, %v1239, 0.0
    %1246 = vadd.xlane.f32.xlu0 %v1245
    %v1247 = vpop.xlane.xlu0 %1246
    %v1248 = vmul.f32 %v1244, %v86
    %v1249 = vmul.f32 %v1247, %v86
    %v1250 = vsub.f32 %v1238, %v1248
    %v1251 = vsub.f32 %v1239, %v1249
    %v1252 = vmul.f32 %v1250, %v1250
    %v1253 = vmul.f32 %v1251, %v1251
    %v1254 = vsel %vm79, %v1252, 0.0
    %1255 = vadd.xlane.f32.xlu0 %v1254
    %v1256 = vpop.xlane.xlu0 %1255
    %v1257 = vsel %vm79, %v1253, 0.0
    %1258 = vadd.xlane.f32.xlu0 %v1257
    %v1259 = vpop.xlane.xlu0 %1258
    %v1260 = vmul.f32 %v1256, %v86
    %v1261 = vmul.f32 %v1259, %v86
    %v1262 = vadd.f32 %v1260, 1e-12
    %v1263 = vadd.f32 %v1261, 1e-12
    %v1264 = vrsqrt.pop %v1262
    %v1265 = vrsqrt.pop %v1263
    %v1266 = vmul.f32 %v1250, %v1264
    %v1267 = vmul.f32 %v1251, %v1265
    %v1269 = vlaneseq
    %v1270 = vshrl.u32 %v1269, 7
    %v1271 = vsub.s32 0, %v1270
    %v1272 = vrot.slane %v1240, %v1271
    %v1274 = vmul.f32 %v1266, %v1272
    %v1275 = vmul.f32 %v1267, %v1272
    %v1277 = vlaneseq
    %v1278 = vshrl.u32 %v1277, 7
    %v1279 = vsub.s32 0, %v1278
    %v1280 = vrot.slane %v1241, %v1279
    %v1282 = vadd.f32 %v1274, %v1280
    %v1283 = vadd.f32 %v1275, %v1280
    %s1284 = scalar_lea.vmem %s4, 32
    %v1285 = vld [vmem:[%s1284] sm:$0xff]
    %v1286 = vld [vmem:[%s1284 + $0x8] sm:$0xff]
    %v1287 = vld [vmem:[%s1284 + $0x10] sm:$0xff]
    %v1288 = vld [vmem:[%s1284 + $0x18] sm:$0xff]
    %s1289 = scalar_lea.vmem %s5, 1
    %v1290 = vld [vmem:[%s1289] sm:$0x1]
    %v1292 = vlaneseq
    %v1293 = vshrl.u32 %v1292, 7
    %v1294 = vsub.s32 0, %v1293
    %v1295 = vrot.slane %v1290, %v1294
    %v1298 = vsel %vm79, %v1282, 0
    %v1301 = vsel %vm79, %v1283, 0
    %1303 = vmatprep.subr.mxu0 0.0
    %1304 = vmatpush1.msra.mxu0 0.0
    %1305 = vmatprep.subr.mxu0 0.0
    %1306 = vmatpush1.msra.mxu0 0.0
    %1307 = vmatprep.subr.mxu0 0.0
    %1308 = vmatpush1.msra.mxu0 0.0
    %1309 = vmatprep.subr.mxu0 0.0
    %1310 = vmatpush1.msra.mxu0 0.0
    %1311 = vmatprep.subr.mxu0 0.0
    %1312 = vmatpush1.msra.mxu0 0.0
    %1313 = vmatprep.subr.mxu0 0.0
    %1314 = vmatpush1.msra.mxu0 0.0
    %1315 = vmatprep.subr.mxu0 0.0
    %1316 = vmatpush1.msra.mxu0 0.0
    %1317 = vmatprep.subr.mxu0 0.0
    %1318 = vmatpush1.msra.mxu0 0.0
    %1319 = vmatprep.subr.mxu0 0.0
    %1320 = vmatpush1.msra.mxu0 0.0
    %1321 = vmatprep.subr.mxu0 0.0
    %1322 = vmatpush1.msra.mxu0 0.0
    %1323 = vmatprep.subr.mxu0 0.0
    %1324 = vmatpush1.msra.mxu0 0.0
    %1325 = vmatprep.subr.mxu0 0.0
    %1326 = vmatpush1.msra.mxu0 0.0
    %1327 = vmatprep.subr.mxu0 0.0
    %1328 = vmatpush1.msra.mxu0 %v1288
    %1329 = vmatprep.subr.mxu0 0.0
    %1330 = vmatpush1.msra.mxu0 %v1287
    %1331 = vmatprep.subr.mxu0 0.0
    %1332 = vmatpush1.msra.mxu0 %v1286
    %1333 = vmatprep.subr.mxu0 0.0
    %1334 = vmatpush1.msra.mxu0 %v1285
    %1335 = vmatprep.subr.mxu0 0.0
    %1336 = vmatpush2.msra.mxu0 0.0
    %1337 = vmatprep.subr.mxu0 0.0
    %1338 = vmatpush2.msra.mxu0 0.0
    %1339 = vmatprep.subr.mxu0 0.0
    %1340 = vmatpush2.msra.mxu0 0.0
    %1341 = vmatprep.subr.mxu0 0.0
    %1342 = vmatpush2.msra.mxu0 0.0
    %1343 = vmatprep.subr.mxu0 0.0
    %1344 = vmatpush2.msra.mxu0 0.0
    %1345 = vmatprep.subr.mxu0 0.0
    %1346 = vmatpush2.msra.mxu0 0.0
    %1347 = vmatprep.subr.mxu0 0.0
    %1348 = vmatpush2.msra.mxu0 0.0
    %1349 = vmatprep.subr.mxu0 0.0
    %1350 = vmatpush2.msra.mxu0 0.0
    %1351 = vmatprep.subr.mxu0 0.0
    %1352 = vmatpush2.msra.mxu0 0.0
    %1353 = vmatprep.subr.mxu0 0.0
    %1354 = vmatpush2.msra.mxu0 0.0
    %1355 = vmatprep.subr.mxu0 0.0
    %1356 = vmatpush2.msra.mxu0 0.0
    %1357 = vmatprep.subr.mxu0 0.0
    %1358 = vmatpush2.msra.mxu0 0.0
    %1359 = vmatprep.subr.mxu0 0.0
    %1360 = vmatpush2.msra.mxu0 0.0
    %1361 = vmatprep.subr.mxu0 0.0
    %1362 = vmatpush2.msra.mxu0 0.0
    %1363 = vmatprep.subr.mxu0 0.0
    %1364 = vmatpush2.msra.mxu0 0.0
    %1365 = vmatprep.subr.mxu0 0.0
    %1366 = vmatpush2.msra.mxu0 0.0
    %1367 = vmatprep.mubr.f32.mxu0 0.0
    %1368 = vmatmul.mubr.f32.gmra.mxu0 %v1298
    %v1369 = vpop.f32.mrf.mxu0
    %v1370 = vadd.f32 %v1295, %v1369
    %v1371 = vpop.f32.mrf.mxu0
    %1372 = vmatprep.mubr.f32.mxu0 0.0
    %1373 = vmatmul.mubr.f32.gmra.mxu0 %v1301
    %v1374 = vpop.f32.mrf.mxu0
    %v1375 = vadd.f32 %v1295, %v1374
    %v1376 = vpop.f32.mrf.mxu0
    %1377 = vdwg.mxu0
    %1379 = vrot.lane.b32.xlu0 %v1370, 96
    %v1380 = vpop.permute.xlu0 %1379
    %v1381 = vsel %vm222, %v1370, 0
    %v1383 = vsel %vm222, %v1380, 0
    %1385 = vmatprep.subr.mxu0 0.0
    %1386 = vmatpush1.xpose.msra.mxu0 0.0
    %1387 = vmatprep.subr.mxu0 0.0
    %1388 = vmatpush1.xpose.msra.mxu0 0.0
    %1389 = vmatprep.subr.mxu0 0.0
    %1390 = vmatpush1.xpose.msra.mxu0 0.0
    %1391 = vmatprep.subr.mxu0 0.0
    %1392 = vmatpush1.xpose.msra.mxu0 0.0
    %1393 = vmatprep.subr.mxu0 0.0
    %1394 = vmatpush1.xpose.msra.mxu0 0.0
    %1395 = vmatprep.subr.mxu0 0.0
    %1396 = vmatpush1.xpose.msra.mxu0 0.0
    %1397 = vmatprep.subr.mxu0 0.0
    %1398 = vmatpush1.xpose.msra.mxu0 0.0
    %1399 = vmatprep.subr.mxu0 0.0
    %1400 = vmatpush1.xpose.msra.mxu0 0.0
    %1401 = vmatprep.subr.mxu0 0.0
    %1402 = vmatpush1.xpose.msra.mxu0 0.0
    %1403 = vmatprep.subr.mxu0 0.0
    %1404 = vmatpush1.xpose.msra.mxu0 0.0
    %1405 = vmatprep.subr.mxu0 0.0
    %1406 = vmatpush1.xpose.msra.mxu0 0.0
    %1407 = vmatprep.subr.mxu0 0.0
    %1408 = vmatpush1.xpose.msra.mxu0 0.0
    %1409 = vmatprep.subr.mxu0 0.0
    %1410 = vmatpush1.xpose.msra.mxu0 0.0
    %1411 = vmatprep.subr.mxu0 0.0
    %1412 = vmatpush1.xpose.msra.mxu0 0.0
    %1413 = vmatprep.subr.mxu0 0.0
    %1414 = vmatpush1.xpose.msra.mxu0 0.0
    %1415 = vmatprep.subr.mxu0 0.0
    %1416 = vmatpush1.xpose.msra.mxu0 %v1383
    %1417 = vmatprep.subr.mxu0 0.0
    %1418 = vmatpush2.xpose.msra.mxu0 0.0
    %1419 = vmatprep.subr.mxu0 0.0
    %1420 = vmatpush2.xpose.msra.mxu0 0.0
    %1421 = vmatprep.subr.mxu0 0.0
    %1422 = vmatpush2.xpose.msra.mxu0 0.0
    %1423 = vmatprep.subr.mxu0 0.0
    %1424 = vmatpush2.xpose.msra.mxu0 0.0
    %1425 = vmatprep.subr.mxu0 0.0
    %1426 = vmatpush2.xpose.msra.mxu0 0.0
    %1427 = vmatprep.subr.mxu0 0.0
    %1428 = vmatpush2.xpose.msra.mxu0 0.0
    %1429 = vmatprep.subr.mxu0 0.0
    %1430 = vmatpush2.xpose.msra.mxu0 0.0
    %1431 = vmatprep.subr.mxu0 0.0
    %1432 = vmatpush2.xpose.msra.mxu0 0.0
    %1433 = vmatprep.subr.mxu0 0.0
    %1434 = vmatpush2.xpose.msra.mxu0 0.0
    %1435 = vmatprep.subr.mxu0 0.0
    %1436 = vmatpush2.xpose.msra.mxu0 0.0
    %1437 = vmatprep.subr.mxu0 0.0
    %1438 = vmatpush2.xpose.msra.mxu0 0.0
    %1439 = vmatprep.subr.mxu0 0.0
    %1440 = vmatpush2.xpose.msra.mxu0 0.0
    %1441 = vmatprep.subr.mxu0 0.0
    %1442 = vmatpush2.xpose.msra.mxu0 0.0
    %1443 = vmatprep.subr.mxu0 0.0
    %1444 = vmatpush2.xpose.msra.mxu0 0.0
    %1445 = vmatprep.subr.mxu0 0.0
    %1446 = vmatpush2.xpose.msra.mxu0 0.0
    %1447 = vmatprep.subr.mxu0 0.0
    %1448 = vmatpush2.xpose.msra.mxu0 0.0
    %1449 = vmatprep.mubr.f32.mxu0 0.0
    %1450 = vmatmul.mubr.f32.gmra.mxu0 %v1381
    %v1451 = vpop.f32.mrf.mxu0
    %v1452 = vadd.f32 %v218, %v1451
    %v1453 = vpop.f32.mrf.mxu0
    %1454 = vdwg.mxu0
    %v1455 = vsel %vm297, %v1452, -inf
    %1456 = vmax.xlane.f32.xlu0 %v1455
    %v1457 = vpop.xlane.xlu0 %1456
    %v1458 = vsub.f32 %v1452, %v1457
    %v1459 = vmul.f32 %v1458, 1.442695
    %v1460 = vpow.pop %v1459
    %v1461 = vsel %vm297, %v1460, 0.0
    %1462 = vadd.xlane.f32.xlu0 %v1461
    %v1463 = vpop.xlane.xlu0 %1462
    %v1464 = vrcp.pop %v1463
    %v1465 = vmul.f32 %v1460, %v1464
    %1466 = vrot.lane.b32.xlu0 %v1370, 64
    %v1467 = vpop.permute.xlu0 %1466
    %v1470 = vsel %vm297, %v1465, 0
    %1472 = vmatprep.subr.mxu0 0.0
    %1473 = vmatpush1.msra.mxu0 0.0
    %1474 = vmatprep.subr.mxu0 0.0
    %1475 = vmatpush1.msra.mxu0 0.0
    %1476 = vmatprep.subr.mxu0 0.0
    %1477 = vmatpush1.msra.mxu0 0.0
    %1478 = vmatprep.subr.mxu0 0.0
    %1479 = vmatpush1.msra.mxu0 0.0
    %1480 = vmatprep.subr.mxu0 0.0
    %1481 = vmatpush1.msra.mxu0 0.0
    %1482 = vmatprep.subr.mxu0 0.0
    %1483 = vmatpush1.msra.mxu0 0.0
    %1484 = vmatprep.subr.mxu0 0.0
    %1485 = vmatpush1.msra.mxu0 0.0
    %1486 = vmatprep.subr.mxu0 0.0
    %1487 = vmatpush1.msra.mxu0 0.0
    %1488 = vmatprep.subr.mxu0 0.0
    %1489 = vmatpush1.msra.mxu0 0.0
    %1490 = vmatprep.subr.mxu0 0.0
    %1491 = vmatpush1.msra.mxu0 0.0
    %1492 = vmatprep.subr.mxu0 0.0
    %1493 = vmatpush1.msra.mxu0 0.0
    %1494 = vmatprep.subr.mxu0 0.0
    %1495 = vmatpush1.msra.mxu0 0.0
    %1496 = vmatprep.subr.mxu0 0.0
    %1497 = vmatpush1.msra.mxu0 0.0
    %1498 = vmatprep.subr.mxu0 0.0
    %1499 = vmatpush1.msra.mxu0 0.0
    %1500 = vmatprep.subr.mxu0 0.0
    %1501 = vmatpush1.msra.mxu0 0.0
    %1502 = vmatprep.subr.mxu0 0.0
    %1503 = vmatpush1.msra.mxu0 %v1467
    %1504 = vmatprep.subr.mxu0 0.0
    %1505 = vmatpush2.msra.mxu0 0.0
    %1506 = vmatprep.subr.mxu0 0.0
    %1507 = vmatpush2.msra.mxu0 0.0
    %1508 = vmatprep.subr.mxu0 0.0
    %1509 = vmatpush2.msra.mxu0 0.0
    %1510 = vmatprep.subr.mxu0 0.0
    %1511 = vmatpush2.msra.mxu0 0.0
    %1512 = vmatprep.subr.mxu0 0.0
    %1513 = vmatpush2.msra.mxu0 0.0
    %1514 = vmatprep.subr.mxu0 0.0
    %1515 = vmatpush2.msra.mxu0 0.0
    %1516 = vmatprep.subr.mxu0 0.0
    %1517 = vmatpush2.msra.mxu0 0.0
    %1518 = vmatprep.subr.mxu0 0.0
    %1519 = vmatpush2.msra.mxu0 0.0
    %1520 = vmatprep.subr.mxu0 0.0
    %1521 = vmatpush2.msra.mxu0 0.0
    %1522 = vmatprep.subr.mxu0 0.0
    %1523 = vmatpush2.msra.mxu0 0.0
    %1524 = vmatprep.subr.mxu0 0.0
    %1525 = vmatpush2.msra.mxu0 0.0
    %1526 = vmatprep.subr.mxu0 0.0
    %1527 = vmatpush2.msra.mxu0 0.0
    %1528 = vmatprep.subr.mxu0 0.0
    %1529 = vmatpush2.msra.mxu0 0.0
    %1530 = vmatprep.subr.mxu0 0.0
    %1531 = vmatpush2.msra.mxu0 0.0
    %1532 = vmatprep.subr.mxu0 0.0
    %1533 = vmatpush2.msra.mxu0 0.0
    %1534 = vmatprep.subr.mxu0 0.0
    %1535 = vmatpush2.msra.mxu0 0.0
    %1536 = vmatprep.mubr.f32.mxu0 0.0
    %1537 = vmatmul.mubr.f32.gmra.mxu0 %v1470
    %v1538 = vpop.f32.mrf.mxu0
    %v1539 = vadd.f32 0.0, %v1538
    %v1540 = vpop.f32.mrf.mxu0
    %1541 = vdwg.mxu0
    %1542 = vrot.lane.b32.xlu0 %v1370, 112
    %v1543 = vpop.permute.xlu0 %1542
    %1544 = vrot.lane.b32.xlu0 %v1370, 80
    %v1545 = vpop.permute.xlu0 %1544
    %v1546 = vsel %vm222, %v1543, 0
    %v1548 = vsel %vm222, %v1545, 0
    %1550 = vmatprep.subr.mxu0 0.0
    %1551 = vmatpush1.xpose.msra.mxu0 0.0
    %1552 = vmatprep.subr.mxu0 0.0
    %1553 = vmatpush1.xpose.msra.mxu0 0.0
    %1554 = vmatprep.subr.mxu0 0.0
    %1555 = vmatpush1.xpose.msra.mxu0 0.0
    %1556 = vmatprep.subr.mxu0 0.0
    %1557 = vmatpush1.xpose.msra.mxu0 0.0
    %1558 = vmatprep.subr.mxu0 0.0
    %1559 = vmatpush1.xpose.msra.mxu0 0.0
    %1560 = vmatprep.subr.mxu0 0.0
    %1561 = vmatpush1.xpose.msra.mxu0 0.0
    %1562 = vmatprep.subr.mxu0 0.0
    %1563 = vmatpush1.xpose.msra.mxu0 0.0
    %1564 = vmatprep.subr.mxu0 0.0
    %1565 = vmatpush1.xpose.msra.mxu0 0.0
    %1566 = vmatprep.subr.mxu0 0.0
    %1567 = vmatpush1.xpose.msra.mxu0 0.0
    %1568 = vmatprep.subr.mxu0 0.0
    %1569 = vmatpush1.xpose.msra.mxu0 0.0
    %1570 = vmatprep.subr.mxu0 0.0
    %1571 = vmatpush1.xpose.msra.mxu0 0.0
    %1572 = vmatprep.subr.mxu0 0.0
    %1573 = vmatpush1.xpose.msra.mxu0 0.0
    %1574 = vmatprep.subr.mxu0 0.0
    %1575 = vmatpush1.xpose.msra.mxu0 0.0
    %1576 = vmatprep.subr.mxu0 0.0
    %1577 = vmatpush1.xpose.msra.mxu0 0.0
    %1578 = vmatprep.subr.mxu0 0.0
    %1579 = vmatpush1.xpose.msra.mxu0 0.0
    %1580 = vmatprep.subr.mxu0 0.0
    %1581 = vmatpush1.xpose.msra.mxu0 %v1548
    %1582 = vmatprep.subr.mxu0 0.0
    %1583 = vmatpush2.xpose.msra.mxu0 0.0
    %1584 = vmatprep.subr.mxu0 0.0
    %1585 = vmatpush2.xpose.msra.mxu0 0.0
    %1586 = vmatprep.subr.mxu0 0.0
    %1587 = vmatpush2.xpose.msra.mxu0 0.0
    %1588 = vmatprep.subr.mxu0 0.0
    %1589 = vmatpush2.xpose.msra.mxu0 0.0
    %1590 = vmatprep.subr.mxu0 0.0
    %1591 = vmatpush2.xpose.msra.mxu0 0.0
    %1592 = vmatprep.subr.mxu0 0.0
    %1593 = vmatpush2.xpose.msra.mxu0 0.0
    %1594 = vmatprep.subr.mxu0 0.0
    %1595 = vmatpush2.xpose.msra.mxu0 0.0
    %1596 = vmatprep.subr.mxu0 0.0
    %1597 = vmatpush2.xpose.msra.mxu0 0.0
    %1598 = vmatprep.subr.mxu0 0.0
    %1599 = vmatpush2.xpose.msra.mxu0 0.0
    %1600 = vmatprep.subr.mxu0 0.0
    %1601 = vmatpush2.xpose.msra.mxu0 0.0
    %1602 = vmatprep.subr.mxu0 0.0
    %1603 = vmatpush2.xpose.msra.mxu0 0.0
    %1604 = vmatprep.subr.mxu0 0.0
    %1605 = vmatpush2.xpose.msra.mxu0 0.0
    %1606 = vmatprep.subr.mxu0 0.0
    %1607 = vmatpush2.xpose.msra.mxu0 0.0
    %1608 = vmatprep.subr.mxu0 0.0
    %1609 = vmatpush2.xpose.msra.mxu0 0.0
    %1610 = vmatprep.subr.mxu0 0.0
    %1611 = vmatpush2.xpose.msra.mxu0 0.0
    %1612 = vmatprep.subr.mxu0 0.0
    %1613 = vmatpush2.xpose.msra.mxu0 0.0
    %1614 = vmatprep.mubr.f32.mxu0 0.0
    %1615 = vmatmul.mubr.f32.gmra.mxu0 %v1546
    %v1616 = vpop.f32.mrf.mxu0
    %v1617 = vadd.f32 %v218, %v1616
    %v1618 = vpop.f32.mrf.mxu0
    %1619 = vdwg.mxu0
    %v1620 = vsel %vm297, %v1617, -inf
    %1621 = vmax.xlane.f32.xlu0 %v1620
    %v1622 = vpop.xlane.xlu0 %1621
    %v1623 = vsub.f32 %v1617, %v1622
    %v1624 = vmul.f32 %v1623, 1.442695
    %v1625 = vpow.pop %v1624
    %v1626 = vsel %vm297, %v1625, 0.0
    %1627 = vadd.xlane.f32.xlu0 %v1626
    %v1628 = vpop.xlane.xlu0 %1627
    %v1629 = vrcp.pop %v1628
    %v1630 = vmul.f32 %v1625, %v1629
    %1631 = vrot.lane.b32.xlu0 %v1370, 48
    %v1632 = vpop.permute.xlu0 %1631
    %v1635 = vsel %vm297, %v1630, 0
    %1637 = vmatprep.subr.mxu0 0.0
    %1638 = vmatpush1.msra.mxu0 0.0
    %1639 = vmatprep.subr.mxu0 0.0
    %1640 = vmatpush1.msra.mxu0 0.0
    %1641 = vmatprep.subr.mxu0 0.0
    %1642 = vmatpush1.msra.mxu0 0.0
    %1643 = vmatprep.subr.mxu0 0.0
    %1644 = vmatpush1.msra.mxu0 0.0
    %1645 = vmatprep.subr.mxu0 0.0
    %1646 = vmatpush1.msra.mxu0 0.0
    %1647 = vmatprep.subr.mxu0 0.0
    %1648 = vmatpush1.msra.mxu0 0.0
    %1649 = vmatprep.subr.mxu0 0.0
    %1650 = vmatpush1.msra.mxu0 0.0
    %1651 = vmatprep.subr.mxu0 0.0
    %1652 = vmatpush1.msra.mxu0 0.0
    %1653 = vmatprep.subr.mxu0 0.0
    %1654 = vmatpush1.msra.mxu0 0.0
    %1655 = vmatprep.subr.mxu0 0.0
    %1656 = vmatpush1.msra.mxu0 0.0
    %1657 = vmatprep.subr.mxu0 0.0
    %1658 = vmatpush1.msra.mxu0 0.0
    %1659 = vmatprep.subr.mxu0 0.0
    %1660 = vmatpush1.msra.mxu0 0.0
    %1661 = vmatprep.subr.mxu0 0.0
    %1662 = vmatpush1.msra.mxu0 0.0
    %1663 = vmatprep.subr.mxu0 0.0
    %1664 = vmatpush1.msra.mxu0 0.0
    %1665 = vmatprep.subr.mxu0 0.0
    %1666 = vmatpush1.msra.mxu0 0.0
    %1667 = vmatprep.subr.mxu0 0.0
    %1668 = vmatpush1.msra.mxu0 %v1632
    %1669 = vmatprep.subr.mxu0 0.0
    %1670 = vmatpush2.msra.mxu0 0.0
    %1671 = vmatprep.subr.mxu0 0.0
    %1672 = vmatpush2.msra.mxu0 0.0
    %1673 = vmatprep.subr.mxu0 0.0
    %1674 = vmatpush2.msra.mxu0 0.0
    %1675 = vmatprep.subr.mxu0 0.0
    %1676 = vmatpush2.msra.mxu0 0.0
    %1677 = vmatprep.subr.mxu0 0.0
    %1678 = vmatpush2.msra.mxu0 0.0
    %1679 = vmatprep.subr.mxu0 0.0
    %1680 = vmatpush2.msra.mxu0 0.0
    %1681 = vmatprep.subr.mxu0 0.0
    %1682 = vmatpush2.msra.mxu0 0.0
    %1683 = vmatprep.subr.mxu0 0.0
    %1684 = vmatpush2.msra.mxu0 0.0
    %1685 = vmatprep.subr.mxu0 0.0
    %1686 = vmatpush2.msra.mxu0 0.0
    %1687 = vmatprep.subr.mxu0 0.0
    %1688 = vmatpush2.msra.mxu0 0.0
    %1689 = vmatprep.subr.mxu0 0.0
    %1690 = vmatpush2.msra.mxu0 0.0
    %1691 = vmatprep.subr.mxu0 0.0
    %1692 = vmatpush2.msra.mxu0 0.0
    %1693 = vmatprep.subr.mxu0 0.0
    %1694 = vmatpush2.msra.mxu0 0.0
    %1695 = vmatprep.subr.mxu0 0.0
    %1696 = vmatpush2.msra.mxu0 0.0
    %1697 = vmatprep.subr.mxu0 0.0
    %1698 = vmatpush2.msra.mxu0 0.0
    %1699 = vmatprep.subr.mxu0 0.0
    %1700 = vmatpush2.msra.mxu0 0.0
    %1701 = vmatprep.mubr.f32.mxu0 0.0
    %1702 = vmatmul.mubr.f32.gmra.mxu0 %v1635
    %v1703 = vpop.f32.mrf.mxu0
    %v1704 = vadd.f32 0.0, %v1703
    %v1705 = vpop.f32.mrf.mxu0
    %1706 = vdwg.mxu0
    %1708 = vrot.lane.b32.xlu0 %v1704, 16
    %v1709 = vpop.permute.xlu0 %1708
    %v1711 = vsel %vm222, %v1539, %v1709
    %1713 = vrot.lane.b32.xlu0 %v1375, 96
    %v1714 = vpop.permute.xlu0 %1713
    %v1715 = vsel %vm222, %v1375, 0
    %v1717 = vsel %vm222, %v1714, 0
    %1719 = vmatprep.subr.mxu0 0.0
    %1720 = vmatpush1.xpose.msra.mxu0 0.0
    %1721 = vmatprep.subr.mxu0 0.0
    %1722 = vmatpush1.xpose.msra.mxu0 0.0
    %1723 = vmatprep.subr.mxu0 0.0
    %1724 = vmatpush1.xpose.msra.mxu0 0.0
    %1725 = vmatprep.subr.mxu0 0.0
    %1726 = vmatpush1.xpose.msra.mxu0 0.0
    %1727 = vmatprep.subr.mxu0 0.0
    %1728 = vmatpush1.xpose.msra.mxu0 0.0
    %1729 = vmatprep.subr.mxu0 0.0
    %1730 = vmatpush1.xpose.msra.mxu0 0.0
    %1731 = vmatprep.subr.mxu0 0.0
    %1732 = vmatpush1.xpose.msra.mxu0 0.0
    %1733 = vmatprep.subr.mxu0 0.0
    %1734 = vmatpush1.xpose.msra.mxu0 0.0
    %1735 = vmatprep.subr.mxu0 0.0
    %1736 = vmatpush1.xpose.msra.mxu0 0.0
    %1737 = vmatprep.subr.mxu0 0.0
    %1738 = vmatpush1.xpose.msra.mxu0 0.0
    %1739 = vmatprep.subr.mxu0 0.0
    %1740 = vmatpush1.xpose.msra.mxu0 0.0
    %1741 = vmatprep.subr.mxu0 0.0
    %1742 = vmatpush1.xpose.msra.mxu0 0.0
    %1743 = vmatprep.subr.mxu0 0.0
    %1744 = vmatpush1.xpose.msra.mxu0 0.0
    %1745 = vmatprep.subr.mxu0 0.0
    %1746 = vmatpush1.xpose.msra.mxu0 0.0
    %1747 = vmatprep.subr.mxu0 0.0
    %1748 = vmatpush1.xpose.msra.mxu0 0.0
    %1749 = vmatprep.subr.mxu0 0.0
    %1750 = vmatpush1.xpose.msra.mxu0 %v1717
    %1751 = vmatprep.subr.mxu0 0.0
    %1752 = vmatpush2.xpose.msra.mxu0 0.0
    %1753 = vmatprep.subr.mxu0 0.0
    %1754 = vmatpush2.xpose.msra.mxu0 0.0
    %1755 = vmatprep.subr.mxu0 0.0
    %1756 = vmatpush2.xpose.msra.mxu0 0.0
    %1757 = vmatprep.subr.mxu0 0.0
    %1758 = vmatpush2.xpose.msra.mxu0 0.0
    %1759 = vmatprep.subr.mxu0 0.0
    %1760 = vmatpush2.xpose.msra.mxu0 0.0
    %1761 = vmatprep.subr.mxu0 0.0
    %1762 = vmatpush2.xpose.msra.mxu0 0.0
    %1763 = vmatprep.subr.mxu0 0.0
    %1764 = vmatpush2.xpose.msra.mxu0 0.0
    %1765 = vmatprep.subr.mxu0 0.0
    %1766 = vmatpush2.xpose.msra.mxu0 0.0
    %1767 = vmatprep.subr.mxu0 0.0
    %1768 = vmatpush2.xpose.msra.mxu0 0.0
    %1769 = vmatprep.subr.mxu0 0.0
    %1770 = vmatpush2.xpose.msra.mxu0 0.0
    %1771 = vmatprep.subr.mxu0 0.0
    %1772 = vmatpush2.xpose.msra.mxu0 0.0
    %1773 = vmatprep.subr.mxu0 0.0
    %1774 = vmatpush2.xpose.msra.mxu0 0.0
    %1775 = vmatprep.subr.mxu0 0.0
    %1776 = vmatpush2.xpose.msra.mxu0 0.0
    %1777 = vmatprep.subr.mxu0 0.0
    %1778 = vmatpush2.xpose.msra.mxu0 0.0
    %1779 = vmatprep.subr.mxu0 0.0
    %1780 = vmatpush2.xpose.msra.mxu0 0.0
    %1781 = vmatprep.subr.mxu0 0.0
    %1782 = vmatpush2.xpose.msra.mxu0 0.0
    %1783 = vmatprep.mubr.f32.mxu0 0.0
    %1784 = vmatmul.mubr.f32.gmra.mxu0 %v1715
    %v1785 = vpop.f32.mrf.mxu0
    %v1786 = vadd.f32 %v558, %v1785
    %v1787 = vpop.f32.mrf.mxu0
    %1788 = vdwg.mxu0
    %v1789 = vsel %vm297, %v1786, -inf
    %1790 = vmax.xlane.f32.xlu0 %v1789
    %v1791 = vpop.xlane.xlu0 %1790
    %v1792 = vsub.f32 %v1786, %v1791
    %v1793 = vmul.f32 %v1792, 1.442695
    %v1794 = vpow.pop %v1793
    %v1795 = vsel %vm297, %v1794, 0.0
    %1796 = vadd.xlane.f32.xlu0 %v1795
    %v1797 = vpop.xlane.xlu0 %1796
    %v1798 = vrcp.pop %v1797
    %v1799 = vmul.f32 %v1794, %v1798
    %1800 = vrot.lane.b32.xlu0 %v1375, 64
    %v1801 = vpop.permute.xlu0 %1800
    %v1804 = vsel %vm297, %v1799, 0
    %1806 = vmatprep.subr.mxu0 0.0
    %1807 = vmatpush1.msra.mxu0 0.0
    %1808 = vmatprep.subr.mxu0 0.0
    %1809 = vmatpush1.msra.mxu0 0.0
    %1810 = vmatprep.subr.mxu0 0.0
    %1811 = vmatpush1.msra.mxu0 0.0
    %1812 = vmatprep.subr.mxu0 0.0
    %1813 = vmatpush1.msra.mxu0 0.0
    %1814 = vmatprep.subr.mxu0 0.0
    %1815 = vmatpush1.msra.mxu0 0.0
    %1816 = vmatprep.subr.mxu0 0.0
    %1817 = vmatpush1.msra.mxu0 0.0
    %1818 = vmatprep.subr.mxu0 0.0
    %1819 = vmatpush1.msra.mxu0 0.0
    %1820 = vmatprep.subr.mxu0 0.0
    %1821 = vmatpush1.msra.mxu0 0.0
    %1822 = vmatprep.subr.mxu0 0.0
    %1823 = vmatpush1.msra.mxu0 0.0
    %1824 = vmatprep.subr.mxu0 0.0
    %1825 = vmatpush1.msra.mxu0 0.0
    %1826 = vmatprep.subr.mxu0 0.0
    %1827 = vmatpush1.msra.mxu0 0.0
    %1828 = vmatprep.subr.mxu0 0.0
    %1829 = vmatpush1.msra.mxu0 0.0
    %1830 = vmatprep.subr.mxu0 0.0
    %1831 = vmatpush1.msra.mxu0 0.0
    %1832 = vmatprep.subr.mxu0 0.0
    %1833 = vmatpush1.msra.mxu0 0.0
    %1834 = vmatprep.subr.mxu0 0.0
    %1835 = vmatpush1.msra.mxu0 0.0
    %1836 = vmatprep.subr.mxu0 0.0
    %1837 = vmatpush1.msra.mxu0 %v1801
    %1838 = vmatprep.subr.mxu0 0.0
    %1839 = vmatpush2.msra.mxu0 0.0
    %1840 = vmatprep.subr.mxu0 0.0
    %1841 = vmatpush2.msra.mxu0 0.0
    %1842 = vmatprep.subr.mxu0 0.0
    %1843 = vmatpush2.msra.mxu0 0.0
    %1844 = vmatprep.subr.mxu0 0.0
    %1845 = vmatpush2.msra.mxu0 0.0
    %1846 = vmatprep.subr.mxu0 0.0
    %1847 = vmatpush2.msra.mxu0 0.0
    %1848 = vmatprep.subr.mxu0 0.0
    %1849 = vmatpush2.msra.mxu0 0.0
    %1850 = vmatprep.subr.mxu0 0.0
    %1851 = vmatpush2.msra.mxu0 0.0
    %1852 = vmatprep.subr.mxu0 0.0
    %1853 = vmatpush2.msra.mxu0 0.0
    %1854 = vmatprep.subr.mxu0 0.0
    %1855 = vmatpush2.msra.mxu0 0.0
    %1856 = vmatprep.subr.mxu0 0.0
    %1857 = vmatpush2.msra.mxu0 0.0
    %1858 = vmatprep.subr.mxu0 0.0
    %1859 = vmatpush2.msra.mxu0 0.0
    %1860 = vmatprep.subr.mxu0 0.0
    %1861 = vmatpush2.msra.mxu0 0.0
    %1862 = vmatprep.subr.mxu0 0.0
    %1863 = vmatpush2.msra.mxu0 0.0
    %1864 = vmatprep.subr.mxu0 0.0
    %1865 = vmatpush2.msra.mxu0 0.0
    %1866 = vmatprep.subr.mxu0 0.0
    %1867 = vmatpush2.msra.mxu0 0.0
    %1868 = vmatprep.subr.mxu0 0.0
    %1869 = vmatpush2.msra.mxu0 0.0
    %1870 = vmatprep.mubr.f32.mxu0 0.0
    %1871 = vmatmul.mubr.f32.gmra.mxu0 %v1804
    %v1872 = vpop.f32.mrf.mxu0
    %v1873 = vadd.f32 0.0, %v1872
    %v1874 = vpop.f32.mrf.mxu0
    %1875 = vdwg.mxu0
    %1876 = vrot.lane.b32.xlu0 %v1375, 112
    %v1877 = vpop.permute.xlu0 %1876
    %1878 = vrot.lane.b32.xlu0 %v1375, 80
    %v1879 = vpop.permute.xlu0 %1878
    %v1880 = vsel %vm222, %v1877, 0
    %v1882 = vsel %vm222, %v1879, 0
    %1884 = vmatprep.subr.mxu0 0.0
    %1885 = vmatpush1.xpose.msra.mxu0 0.0
    %1886 = vmatprep.subr.mxu0 0.0
    %1887 = vmatpush1.xpose.msra.mxu0 0.0
    %1888 = vmatprep.subr.mxu0 0.0
    %1889 = vmatpush1.xpose.msra.mxu0 0.0
    %1890 = vmatprep.subr.mxu0 0.0
    %1891 = vmatpush1.xpose.msra.mxu0 0.0
    %1892 = vmatprep.subr.mxu0 0.0
    %1893 = vmatpush1.xpose.msra.mxu0 0.0
    %1894 = vmatprep.subr.mxu0 0.0
    %1895 = vmatpush1.xpose.msra.mxu0 0.0
    %1896 = vmatprep.subr.mxu0 0.0
    %1897 = vmatpush1.xpose.msra.mxu0 0.0
    %1898 = vmatprep.subr.mxu0 0.0
    %1899 = vmatpush1.xpose.msra.mxu0 0.0
    %1900 = vmatprep.subr.mxu0 0.0
    %1901 = vmatpush1.xpose.msra.mxu0 0.0
    %1902 = vmatprep.subr.mxu0 0.0
    %1903 = vmatpush1.xpose.msra.mxu0 0.0
    %1904 = vmatprep.subr.mxu0 0.0
    %1905 = vmatpush1.xpose.msra.mxu0 0.0
    %1906 = vmatprep.subr.mxu0 0.0
    %1907 = vmatpush1.xpose.msra.mxu0 0.0
    %1908 = vmatprep.subr.mxu0 0.0
    %1909 = vmatpush1.xpose.msra.mxu0 0.0
    %1910 = vmatprep.subr.mxu0 0.0
    %1911 = vmatpush1.xpose.msra.mxu0 0.0
    %1912 = vmatprep.subr.mxu0 0.0
    %1913 = vmatpush1.xpose.msra.mxu0 0.0
    %1914 = vmatprep.subr.mxu0 0.0
    %1915 = vmatpush1.xpose.msra.mxu0 %v1882
    %1916 = vmatprep.subr.mxu0 0.0
    %1917 = vmatpush2.xpose.msra.mxu0 0.0
    %1918 = vmatprep.subr.mxu0 0.0
    %1919 = vmatpush2.xpose.msra.mxu0 0.0
    %1920 = vmatprep.subr.mxu0 0.0
    %1921 = vmatpush2.xpose.msra.mxu0 0.0
    %1922 = vmatprep.subr.mxu0 0.0
    %1923 = vmatpush2.xpose.msra.mxu0 0.0
    %1924 = vmatprep.subr.mxu0 0.0
    %1925 = vmatpush2.xpose.msra.mxu0 0.0
    %1926 = vmatprep.subr.mxu0 0.0
    %1927 = vmatpush2.xpose.msra.mxu0 0.0
    %1928 = vmatprep.subr.mxu0 0.0
    %1929 = vmatpush2.xpose.msra.mxu0 0.0
    %1930 = vmatprep.subr.mxu0 0.0
    %1931 = vmatpush2.xpose.msra.mxu0 0.0
    %1932 = vmatprep.subr.mxu0 0.0
    %1933 = vmatpush2.xpose.msra.mxu0 0.0
    %1934 = vmatprep.subr.mxu0 0.0
    %1935 = vmatpush2.xpose.msra.mxu0 0.0
    %1936 = vmatprep.subr.mxu0 0.0
    %1937 = vmatpush2.xpose.msra.mxu0 0.0
    %1938 = vmatprep.subr.mxu0 0.0
    %1939 = vmatpush2.xpose.msra.mxu0 0.0
    %1940 = vmatprep.subr.mxu0 0.0
    %1941 = vmatpush2.xpose.msra.mxu0 0.0
    %1942 = vmatprep.subr.mxu0 0.0
    %1943 = vmatpush2.xpose.msra.mxu0 0.0
    %1944 = vmatprep.subr.mxu0 0.0
    %1945 = vmatpush2.xpose.msra.mxu0 0.0
    %1946 = vmatprep.subr.mxu0 0.0
    %1947 = vmatpush2.xpose.msra.mxu0 0.0
    %1948 = vmatprep.mubr.f32.mxu0 0.0
    %1949 = vmatmul.mubr.f32.gmra.mxu0 %v1880
    %v1950 = vpop.f32.mrf.mxu0
    %v1951 = vadd.f32 %v558, %v1950
    %v1952 = vpop.f32.mrf.mxu0
    %1953 = vdwg.mxu0
    %v1954 = vsel %vm297, %v1951, -inf
    %1955 = vmax.xlane.f32.xlu0 %v1954
    %v1956 = vpop.xlane.xlu0 %1955
    %v1957 = vsub.f32 %v1951, %v1956
    %v1958 = vmul.f32 %v1957, 1.442695
    %v1959 = vpow.pop %v1958
    %v1960 = vsel %vm297, %v1959, 0.0
    %1961 = vadd.xlane.f32.xlu0 %v1960
    %v1962 = vpop.xlane.xlu0 %1961
    %v1963 = vrcp.pop %v1962
    %v1964 = vmul.f32 %v1959, %v1963
    %1965 = vrot.lane.b32.xlu0 %v1375, 48
    %v1966 = vpop.permute.xlu0 %1965
    %v1969 = vsel %vm297, %v1964, 0
    %1971 = vmatprep.subr.mxu0 0.0
    %1972 = vmatpush1.msra.mxu0 0.0
    %1973 = vmatprep.subr.mxu0 0.0
    %1974 = vmatpush1.msra.mxu0 0.0
    %1975 = vmatprep.subr.mxu0 0.0
    %1976 = vmatpush1.msra.mxu0 0.0
    %1977 = vmatprep.subr.mxu0 0.0
    %1978 = vmatpush1.msra.mxu0 0.0
    %1979 = vmatprep.subr.mxu0 0.0
    %1980 = vmatpush1.msra.mxu0 0.0
    %1981 = vmatprep.subr.mxu0 0.0
    %1982 = vmatpush1.msra.mxu0 0.0
    %1983 = vmatprep.subr.mxu0 0.0
    %1984 = vmatpush1.msra.mxu0 0.0
    %1985 = vmatprep.subr.mxu0 0.0
    %1986 = vmatpush1.msra.mxu0 0.0
    %1987 = vmatprep.subr.mxu0 0.0
    %1988 = vmatpush1.msra.mxu0 0.0
    %1989 = vmatprep.subr.mxu0 0.0
    %1990 = vmatpush1.msra.mxu0 0.0
    %1991 = vmatprep.subr.mxu0 0.0
    %1992 = vmatpush1.msra.mxu0 0.0
    %1993 = vmatprep.subr.mxu0 0.0
    %1994 = vmatpush1.msra.mxu0 0.0
    %1995 = vmatprep.subr.mxu0 0.0
    %1996 = vmatpush1.msra.mxu0 0.0
    %1997 = vmatprep.subr.mxu0 0.0
    %1998 = vmatpush1.msra.mxu0 0.0
    %1999 = vmatprep.subr.mxu0 0.0
    %2000 = vmatpush1.msra.mxu0 0.0
    %2001 = vmatprep.subr.mxu0 0.0
    %2002 = vmatpush1.msra.mxu0 %v1966
    %2003 = vmatprep.subr.mxu0 0.0
    %2004 = vmatpush2.msra.mxu0 0.0
    %2005 = vmatprep.subr.mxu0 0.0
    %2006 = vmatpush2.msra.mxu0 0.0
    %2007 = vmatprep.subr.mxu0 0.0
    %2008 = vmatpush2.msra.mxu0 0.0
    %2009 = vmatprep.subr.mxu0 0.0
    %2010 = vmatpush2.msra.mxu0 0.0
    %2011 = vmatprep.subr.mxu0 0.0
    %2012 = vmatpush2.msra.mxu0 0.0
    %2013 = vmatprep.subr.mxu0 0.0
    %2014 = vmatpush2.msra.mxu0 0.0
    %2015 = vmatprep.subr.mxu0 0.0
    %2016 = vmatpush2.msra.mxu0 0.0
    %2017 = vmatprep.subr.mxu0 0.0
    %2018 = vmatpush2.msra.mxu0 0.0
    %2019 = vmatprep.subr.mxu0 0.0
    %2020 = vmatpush2.msra.mxu0 0.0
    %2021 = vmatprep.subr.mxu0 0.0
    %2022 = vmatpush2.msra.mxu0 0.0
    %2023 = vmatprep.subr.mxu0 0.0
    %2024 = vmatpush2.msra.mxu0 0.0
    %2025 = vmatprep.subr.mxu0 0.0
    %2026 = vmatpush2.msra.mxu0 0.0
    %2027 = vmatprep.subr.mxu0 0.0
    %2028 = vmatpush2.msra.mxu0 0.0
    %2029 = vmatprep.subr.mxu0 0.0
    %2030 = vmatpush2.msra.mxu0 0.0
    %2031 = vmatprep.subr.mxu0 0.0
    %2032 = vmatpush2.msra.mxu0 0.0
    %2033 = vmatprep.subr.mxu0 0.0
    %2034 = vmatpush2.msra.mxu0 0.0
    %2035 = vmatprep.mubr.f32.mxu0 0.0
    %2036 = vmatmul.mubr.f32.gmra.mxu0 %v1969
    %v2037 = vpop.f32.mrf.mxu0
    %v2038 = vadd.f32 0.0, %v2037
    %v2039 = vpop.f32.mrf.mxu0
    %2040 = vdwg.mxu0
    %2042 = vrot.lane.b32.xlu0 %v2038, 16
    %v2043 = vpop.permute.xlu0 %2042
    %v2045 = vsel %vm222, %v1873, %v2043
    %s2046 = scalar_lea.vmem %s6, 32
    %v2047 = vld [vmem:[%s2046] sm:$0xff]
    %v2048 = vld [vmem:[%s2046 + $0x8] sm:$0xff]
    %v2049 = vld [vmem:[%s2046 + $0x10] sm:$0xff]
    %v2050 = vld [vmem:[%s2046 + $0x18] sm:$0xff]
    %s2051 = scalar_lea.vmem %s7, 1
    %v2052 = vld [vmem:[%s2051] sm:$0x1]
    %v2054 = vlaneseq
    %v2055 = vshrl.u32 %v2054, 7
    %v2056 = vsub.s32 0, %v2055
    %v2057 = vrot.slane %v2052, %v2056
    %v2060 = vsel %vm79, %v1711, 0
    %v2063 = vsel %vm79, %v2045, 0
    %2065 = vmatprep.subr.mxu0 0.0
    %2066 = vmatpush1.msra.mxu0 0.0
    %2067 = vmatprep.subr.mxu0 0.0
    %2068 = vmatpush1.msra.mxu0 0.0
    %2069 = vmatprep.subr.mxu0 0.0
    %2070 = vmatpush1.msra.mxu0 0.0
    %2071 = vmatprep.subr.mxu0 0.0
    %2072 = vmatpush1.msra.mxu0 0.0
    %2073 = vmatprep.subr.mxu0 0.0
    %2074 = vmatpush1.msra.mxu0 0.0
    %2075 = vmatprep.subr.mxu0 0.0
    %2076 = vmatpush1.msra.mxu0 0.0
    %2077 = vmatprep.subr.mxu0 0.0
    %2078 = vmatpush1.msra.mxu0 0.0
    %2079 = vmatprep.subr.mxu0 0.0
    %2080 = vmatpush1.msra.mxu0 0.0
    %2081 = vmatprep.subr.mxu0 0.0
    %2082 = vmatpush1.msra.mxu0 0.0
    %2083 = vmatprep.subr.mxu0 0.0
    %2084 = vmatpush1.msra.mxu0 0.0
    %2085 = vmatprep.subr.mxu0 0.0
    %2086 = vmatpush1.msra.mxu0 0.0
    %2087 = vmatprep.subr.mxu0 0.0
    %2088 = vmatpush1.msra.mxu0 0.0
    %2089 = vmatprep.subr.mxu0 0.0
    %2090 = vmatpush1.msra.mxu0 %v2050
    %2091 = vmatprep.subr.mxu0 0.0
    %2092 = vmatpush1.msra.mxu0 %v2049
    %2093 = vmatprep.subr.mxu0 0.0
    %2094 = vmatpush1.msra.mxu0 %v2048
    %2095 = vmatprep.subr.mxu0 0.0
    %2096 = vmatpush1.msra.mxu0 %v2047
    %2097 = vmatprep.subr.mxu0 0.0
    %2098 = vmatpush2.msra.mxu0 0.0
    %2099 = vmatprep.subr.mxu0 0.0
    %2100 = vmatpush2.msra.mxu0 0.0
    %2101 = vmatprep.subr.mxu0 0.0
    %2102 = vmatpush2.msra.mxu0 0.0
    %2103 = vmatprep.subr.mxu0 0.0
    %2104 = vmatpush2.msra.mxu0 0.0
    %2105 = vmatprep.subr.mxu0 0.0
    %2106 = vmatpush2.msra.mxu0 0.0
    %2107 = vmatprep.subr.mxu0 0.0
    %2108 = vmatpush2.msra.mxu0 0.0
    %2109 = vmatprep.subr.mxu0 0.0
    %2110 = vmatpush2.msra.mxu0 0.0
    %2111 = vmatprep.subr.mxu0 0.0
    %2112 = vmatpush2.msra.mxu0 0.0
    %2113 = vmatprep.subr.mxu0 0.0
    %2114 = vmatpush2.msra.mxu0 0.0
    %2115 = vmatprep.subr.mxu0 0.0
    %2116 = vmatpush2.msra.mxu0 0.0
    %2117 = vmatprep.subr.mxu0 0.0
    %2118 = vmatpush2.msra.mxu0 0.0
    %2119 = vmatprep.subr.mxu0 0.0
    %2120 = vmatpush2.msra.mxu0 0.0
    %2121 = vmatprep.subr.mxu0 0.0
    %2122 = vmatpush2.msra.mxu0 0.0
    %2123 = vmatprep.subr.mxu0 0.0
    %2124 = vmatpush2.msra.mxu0 0.0
    %2125 = vmatprep.subr.mxu0 0.0
    %2126 = vmatpush2.msra.mxu0 0.0
    %2127 = vmatprep.subr.mxu0 0.0
    %2128 = vmatpush2.msra.mxu0 0.0
    %2129 = vmatprep.mubr.f32.mxu0 0.0
    %2130 = vmatmul.mubr.f32.gmra.mxu0 %v2060
    %v2131 = vpop.f32.mrf.mxu0
    %v2132 = vadd.f32 %v2057, %v2131
    %v2133 = vpop.f32.mrf.mxu0
    %2134 = vmatprep.mubr.f32.mxu0 0.0
    %2135 = vmatmul.mubr.f32.gmra.mxu0 %v2063
    %v2136 = vpop.f32.mrf.mxu0
    %v2137 = vadd.f32 %v2057, %v2136
    %v2138 = vpop.f32.mrf.mxu0
    %2139 = vdwg.mxu0
    %v2140 = vadd.f32 %v2132, %v1282
    %v2141 = vadd.f32 %v2137, %v1283
    %s2142 = scalar_lea.vmem %s8, 1
    %v2143 = vld [vmem:[%s2142] sm:$0x1]
    %s2144 = scalar_lea.vmem %s9, 1
    %v2145 = vld [vmem:[%s2144] sm:$0x1]
    %v2146 = vsel %vm79, %v2140, 0.0
    %2147 = vadd.xlane.f32.xlu0 %v2146
    %v2148 = vpop.xlane.xlu0 %2147
    %v2149 = vsel %vm79, %v2141, 0.0
    %2150 = vadd.xlane.f32.xlu0 %v2149
    %v2151 = vpop.xlane.xlu0 %2150
    %v2152 = vmul.f32 %v2148, %v86
    %v2153 = vmul.f32 %v2151, %v86
    %v2154 = vsub.f32 %v2140, %v2152
    %v2155 = vsub.f32 %v2141, %v2153
    %v2156 = vmul.f32 %v2154, %v2154
    %v2157 = vmul.f32 %v2155, %v2155
    %v2158 = vsel %vm79, %v2156, 0.0
    %2159 = vadd.xlane.f32.xlu0 %v2158
    %v2160 = vpop.xlane.xlu0 %2159
    %v2161 = vsel %vm79, %v2157, 0.0
    %2162 = vadd.xlane.f32.xlu0 %v2161
    %v2163 = vpop.xlane.xlu0 %2162
    %v2164 = vmul.f32 %v2160, %v86
    %v2165 = vmul.f32 %v2163, %v86
    %v2166 = vadd.f32 %v2164, 1e-12
    %v2167 = vadd.f32 %v2165, 1e-12
    %v2168 = vrsqrt.pop %v2166
    %v2169 = vrsqrt.pop %v2167
    %v2170 = vmul.f32 %v2154, %v2168
    %v2171 = vmul.f32 %v2155, %v2169
    %v2173 = vlaneseq
    %v2174 = vshrl.u32 %v2173, 7
    %v2175 = vsub.s32 0, %v2174
    %v2176 = vrot.slane %v2143, %v2175
    %v2178 = vmul.f32 %v2170, %v2176
    %v2179 = vmul.f32 %v2171, %v2176
    %v2181 = vlaneseq
    %v2182 = vshrl.u32 %v2181, 7
    %v2183 = vsub.s32 0, %v2182
    %v2184 = vrot.slane %v2145, %v2183
    %v2186 = vadd.f32 %v2178, %v2184
    %v2187 = vadd.f32 %v2179, %v2184
    %s2188 = scalar_lea.vmem %s10, 32
    %v2189 = vld [vmem:[%s2188] sm:$0xff]
    %v2190 = vld [vmem:[%s2188 + $0x8] sm:$0xff]
    %v2191 = vld [vmem:[%s2188 + $0x10] sm:$0xff]
    %v2192 = vld [vmem:[%s2188 + $0x18] sm:$0xff]
    %s2193 = scalar_lea.vmem %s11, 1
    %v2194 = vld [vmem:[%s2193] sm:$0x1]
    %v2196 = vlaneseq
    %v2197 = vshrl.u32 %v2196, 7
    %v2198 = vsub.s32 0, %v2197
    %v2199 = vrot.slane %v2194, %v2198
    %v2202 = vsel %vm79, %v2186, 0
    %v2205 = vsel %vm79, %v2187, 0
    %2207 = vmatprep.subr.mxu0 0.0
    %2208 = vmatpush1.msra.mxu0 0.0
    %2209 = vmatprep.subr.mxu0 0.0
    %2210 = vmatpush1.msra.mxu0 0.0
    %2211 = vmatprep.subr.mxu0 0.0
    %2212 = vmatpush1.msra.mxu0 0.0
    %2213 = vmatprep.subr.mxu0 0.0
    %2214 = vmatpush1.msra.mxu0 0.0
    %2215 = vmatprep.subr.mxu0 0.0
    %2216 = vmatpush1.msra.mxu0 0.0
    %2217 = vmatprep.subr.mxu0 0.0
    %2218 = vmatpush1.msra.mxu0 0.0
    %2219 = vmatprep.subr.mxu0 0.0
    %2220 = vmatpush1.msra.mxu0 0.0
    %2221 = vmatprep.subr.mxu0 0.0
    %2222 = vmatpush1.msra.mxu0 0.0
    %2223 = vmatprep.subr.mxu0 0.0
    %2224 = vmatpush1.msra.mxu0 0.0
    %2225 = vmatprep.subr.mxu0 0.0
    %2226 = vmatpush1.msra.mxu0 0.0
    %2227 = vmatprep.subr.mxu0 0.0
    %2228 = vmatpush1.msra.mxu0 0.0
    %2229 = vmatprep.subr.mxu0 0.0
    %2230 = vmatpush1.msra.mxu0 0.0
    %2231 = vmatprep.subr.mxu0 0.0
    %2232 = vmatpush1.msra.mxu0 %v2192
    %2233 = vmatprep.subr.mxu0 0.0
    %2234 = vmatpush1.msra.mxu0 %v2191
    %2235 = vmatprep.subr.mxu0 0.0
    %2236 = vmatpush1.msra.mxu0 %v2190
    %2237 = vmatprep.subr.mxu0 0.0
    %2238 = vmatpush1.msra.mxu0 %v2189
    %2239 = vmatprep.subr.mxu0 0.0
    %2240 = vmatpush2.msra.mxu0 0.0
    %2241 = vmatprep.subr.mxu0 0.0
    %2242 = vmatpush2.msra.mxu0 0.0
    %2243 = vmatprep.subr.mxu0 0.0
    %2244 = vmatpush2.msra.mxu0 0.0
    %2245 = vmatprep.subr.mxu0 0.0
    %2246 = vmatpush2.msra.mxu0 0.0
    %2247 = vmatprep.subr.mxu0 0.0
    %2248 = vmatpush2.msra.mxu0 0.0
    %2249 = vmatprep.subr.mxu0 0.0
    %2250 = vmatpush2.msra.mxu0 0.0
    %2251 = vmatprep.subr.mxu0 0.0
    %2252 = vmatpush2.msra.mxu0 0.0
    %2253 = vmatprep.subr.mxu0 0.0
    %2254 = vmatpush2.msra.mxu0 0.0
    %2255 = vmatprep.subr.mxu0 0.0
    %2256 = vmatpush2.msra.mxu0 0.0
    %2257 = vmatprep.subr.mxu0 0.0
    %2258 = vmatpush2.msra.mxu0 0.0
    %2259 = vmatprep.subr.mxu0 0.0
    %2260 = vmatpush2.msra.mxu0 0.0
    %2261 = vmatprep.subr.mxu0 0.0
    %2262 = vmatpush2.msra.mxu0 0.0
    %2263 = vmatprep.subr.mxu0 0.0
    %2264 = vmatpush2.msra.mxu0 0.0
    %2265 = vmatprep.subr.mxu0 0.0
    %2266 = vmatpush2.msra.mxu0 0.0
    %2267 = vmatprep.subr.mxu0 0.0
    %2268 = vmatpush2.msra.mxu0 0.0
    %2269 = vmatprep.subr.mxu0 0.0
    %2270 = vmatpush2.msra.mxu0 0.0
    %2271 = vmatprep.mubr.f32.mxu0 0.0
    %2272 = vmatmul.mubr.f32.gmra.mxu0 %v2202
    %v2273 = vpop.f32.mrf.mxu0
    %v2274 = vadd.f32 %v2199, %v2273
    %v2275 = vpop.f32.mrf.mxu0
    %2276 = vmatprep.mubr.f32.mxu0 0.0
    %2277 = vmatmul.mubr.f32.gmra.mxu0 %v2205
    %v2278 = vpop.f32.mrf.mxu0
    %v2279 = vadd.f32 %v2199, %v2278
    %v2280 = vpop.f32.mrf.mxu0
    %2281 = vdwg.mxu0
    %v2282 = vmul.f32 %v2274, 0.5
    %v2283 = vmul.f32 %v2279, 0.5
    %v2284 = vmul.f32 %v2274, 0.044715
    %v2285 = vmul.f32 %v2279, 0.044715
    %v2286 = vmul.f32 %v2284, %v2274
    %v2287 = vmul.f32 %v2285, %v2279
    %v2288 = vmul.f32 %v2286, %v2274
    %v2289 = vmul.f32 %v2287, %v2279
    %v2290 = vadd.f32 %v2274, %v2288
    %v2291 = vadd.f32 %v2279, %v2289
    %v2292 = vmul.f32 %v2290, 0.7978846
    %v2293 = vmul.f32 %v2291, 0.7978846
    %v2294 = vtanh.pop %v2292
    %v2295 = vtanh.pop %v2293
    %v2296 = vadd.f32 %v2294, 1.0
    %v2297 = vadd.f32 %v2295, 1.0
    %v2298 = vmul.f32 %v2282, %v2296
    %v2299 = vmul.f32 %v2283, %v2297
    %s2300 = scalar_lea.vmem %s12, 64
    %v2301 = vld [vmem:[%s2300] sm:$0xff]
    %v2302 = vld [vmem:[%s2300 + $0x8] sm:$0xff]
    %v2303 = vld [vmem:[%s2300 + $0x10] sm:$0xff]
    %v2304 = vld [vmem:[%s2300 + $0x18] sm:$0xff]
    %v2305 = vld [vmem:[%s2300 + $0x20] sm:$0xff]
    %v2306 = vld [vmem:[%s2300 + $0x28] sm:$0xff]
    %v2307 = vld [vmem:[%s2300 + $0x30] sm:$0xff]
    %v2308 = vld [vmem:[%s2300 + $0x38] sm:$0xff]
    %s2309 = scalar_lea.vmem %s13, 1
    %v2310 = vld [vmem:[%s2309] sm:$0x1]
    %v2312 = vlaneseq
    %v2313 = vshrl.u32 %v2312, 7
    %v2314 = vsub.s32 0, %v2313
    %v2315 = vrot.slane %v2310, %v2314
    %v2318 = vsel %vm1156, %v2298, 0
    %v2321 = vsel %vm1156, %v2299, 0
    %2323 = vmatprep.subr.mxu0 0.0
    %2324 = vmatpush1.msra.mxu0 0.0
    %2325 = vmatprep.subr.mxu0 0.0
    %2326 = vmatpush1.msra.mxu0 0.0
    %2327 = vmatprep.subr.mxu0 0.0
    %2328 = vmatpush1.msra.mxu0 0.0
    %2329 = vmatprep.subr.mxu0 0.0
    %2330 = vmatpush1.msra.mxu0 0.0
    %2331 = vmatprep.subr.mxu0 0.0
    %2332 = vmatpush1.msra.mxu0 0.0
    %2333 = vmatprep.subr.mxu0 0.0
    %2334 = vmatpush1.msra.mxu0 0.0
    %2335 = vmatprep.subr.mxu0 0.0
    %2336 = vmatpush1.msra.mxu0 0.0
    %2337 = vmatprep.subr.mxu0 0.0
    %2338 = vmatpush1.msra.mxu0 0.0
    %2339 = vmatprep.subr.mxu0 0.0
    %2340 = vmatpush1.msra.mxu0 %v2308
    %2341 = vmatprep.subr.mxu0 0.0
    %2342 = vmatpush1.msra.mxu0 %v2307
    %2343 = vmatprep.subr.mxu0 0.0
    %2344 = vmatpush1.msra.mxu0 %v2306
    %2345 = vmatprep.subr.mxu0 0.0
    %2346 = vmatpush1.msra.mxu0 %v2305
    %2347 = vmatprep.subr.mxu0 0.0
    %2348 = vmatpush1.msra.mxu0 %v2304
    %2349 = vmatprep.subr.mxu0 0.0
    %2350 = vmatpush1.msra.mxu0 %v2303
    %2351 = vmatprep.subr.mxu0 0.0
    %2352 = vmatpush1.msra.mxu0 %v2302
    %2353 = vmatprep.subr.mxu0 0.0
    %2354 = vmatpush1.msra.mxu0 %v2301
    %2355 = vmatprep.subr.mxu0 0.0
    %2356 = vmatpush2.msra.mxu0 0.0
    %2357 = vmatprep.subr.mxu0 0.0
    %2358 = vmatpush2.msra.mxu0 0.0
    %2359 = vmatprep.subr.mxu0 0.0
    %2360 = vmatpush2.msra.mxu0 0.0
    %2361 = vmatprep.subr.mxu0 0.0
    %2362 = vmatpush2.msra.mxu0 0.0
    %2363 = vmatprep.subr.mxu0 0.0
    %2364 = vmatpush2.msra.mxu0 0.0
    %2365 = vmatprep.subr.mxu0 0.0
    %2366 = vmatpush2.msra.mxu0 0.0
    %2367 = vmatprep.subr.mxu0 0.0
    %2368 = vmatpush2.msra.mxu0 0.0
    %2369 = vmatprep.subr.mxu0 0.0
    %2370 = vmatpush2.msra.mxu0 0.0
    %2371 = vmatprep.subr.mxu0 0.0
    %2372 = vmatpush2.msra.mxu0 0.0
    %2373 = vmatprep.subr.mxu0 0.0
    %2374 = vmatpush2.msra.mxu0 0.0
    %2375 = vmatprep.subr.mxu0 0.0
    %2376 = vmatpush2.msra.mxu0 0.0
    %2377 = vmatprep.subr.mxu0 0.0
    %2378 = vmatpush2.msra.mxu0 0.0
    %2379 = vmatprep.subr.mxu0 0.0
    %2380 = vmatpush2.msra.mxu0 0.0
    %2381 = vmatprep.subr.mxu0 0.0
    %2382 = vmatpush2.msra.mxu0 0.0
    %2383 = vmatprep.subr.mxu0 0.0
    %2384 = vmatpush2.msra.mxu0 0.0
    %2385 = vmatprep.subr.mxu0 0.0
    %2386 = vmatpush2.msra.mxu0 0.0
    %2387 = vmatprep.mubr.f32.mxu0 0.0
    %2388 = vmatmul.mubr.f32.gmra.mxu0 %v2318
    %v2389 = vpop.f32.mrf.mxu0
    %v2390 = vadd.f32 %v2315, %v2389
    %v2391 = vpop.f32.mrf.mxu0
    %2392 = vmatprep.mubr.f32.mxu0 0.0
    %2393 = vmatmul.mubr.f32.gmra.mxu0 %v2321
    %v2394 = vpop.f32.mrf.mxu0
    %v2395 = vadd.f32 %v2315, %v2394
    %v2396 = vpop.f32.mrf.mxu0
    %2397 = vdwg.mxu0
    %v2398 = vadd.f32 %v2390, %v2186
    %v2399 = vadd.f32 %v2395, %v2187
    %s2400 = scalar_lea.vmem %s14, 1
    %v2401 = vld [vmem:[%s2400] sm:$0x1]
    %s2402 = scalar_lea.vmem %s15, 1
    %v2403 = vld [vmem:[%s2402] sm:$0x1]
    %v2404 = vsel %vm79, %v2398, 0.0
    %2405 = vadd.xlane.f32.xlu0 %v2404
    %v2406 = vpop.xlane.xlu0 %2405
    %v2407 = vsel %vm79, %v2399, 0.0
    %2408 = vadd.xlane.f32.xlu0 %v2407
    %v2409 = vpop.xlane.xlu0 %2408
    %v2410 = vmul.f32 %v2406, %v86
    %v2411 = vmul.f32 %v2409, %v86
    %v2412 = vsub.f32 %v2398, %v2410
    %v2413 = vsub.f32 %v2399, %v2411
    %v2414 = vmul.f32 %v2412, %v2412
    %v2415 = vmul.f32 %v2413, %v2413
    %v2416 = vsel %vm79, %v2414, 0.0
    %2417 = vadd.xlane.f32.xlu0 %v2416
    %v2418 = vpop.xlane.xlu0 %2417
    %v2419 = vsel %vm79, %v2415, 0.0
    %2420 = vadd.xlane.f32.xlu0 %v2419
    %v2421 = vpop.xlane.xlu0 %2420
    %v2422 = vmul.f32 %v2418, %v86
    %v2423 = vmul.f32 %v2421, %v86
    %v2424 = vadd.f32 %v2422, 1e-12
    %v2425 = vadd.f32 %v2423, 1e-12
    %v2426 = vrsqrt.pop %v2424
    %v2427 = vrsqrt.pop %v2425
    %v2428 = vmul.f32 %v2412, %v2426
    %v2429 = vmul.f32 %v2413, %v2427
    %v2431 = vlaneseq
    %v2432 = vshrl.u32 %v2431, 7
    %v2433 = vsub.s32 0, %v2432
    %v2434 = vrot.slane %v2401, %v2433
    %v2436 = vmul.f32 %v2428, %v2434
    %v2437 = vmul.f32 %v2429, %v2434
    %v2439 = vlaneseq
    %v2440 = vshrl.u32 %v2439, 7
    %v2441 = vsub.s32 0, %v2440
    %v2442 = vrot.slane %v2403, %v2441
    %v2444 = vadd.f32 %v2436, %v2442
    %v2445 = vadd.f32 %v2437, %v2442
    %v2447 = vrot.slane %v2445, 7
    %vm2449 = vcmask 1040384
    %v2450 = vsel %vm2449, %v2444, %v2447
    %v2451 = vld [vmem:[%s16] sm:$0xff]
    %v2452 = vld [vmem:[%s16 + $0x8] sm:$0xff]
    %v2453 = vld [vmem:[%s16 + $0x10] sm:$0xff]
    %v2454 = vld [vmem:[%s16 + $0x18] sm:$0xff]
    %v2455 = vld [vmem:[%s17] sm:$0x1]
    %v2457 = vlaneseq
    %v2458 = vshrl.u32 %v2457, 7
    %v2459 = vsub.s32 0, %v2458
    %v2460 = vrot.slane %v2455, %v2459
    %v2463 = vsel %vm79, %v2450, 0
    %2465 = vmatprep.subr.mxu0 0.0
    %2466 = vmatpush1.msra.mxu0 0.0
    %2467 = vmatprep.subr.mxu0 0.0
    %2468 = vmatpush1.msra.mxu0 0.0
    %2469 = vmatprep.subr.mxu0 0.0
    %2470 = vmatpush1.msra.mxu0 0.0
    %2471 = vmatprep.subr.mxu0 0.0
    %2472 = vmatpush1.msra.mxu0 0.0
    %2473 = vmatprep.subr.mxu0 0.0
    %2474 = vmatpush1.msra.mxu0 0.0
    %2475 = vmatprep.subr.mxu0 0.0
    %2476 = vmatpush1.msra.mxu0 0.0
    %2477 = vmatprep.subr.mxu0 0.0
    %2478 = vmatpush1.msra.mxu0 0.0
    %2479 = vmatprep.subr.mxu0 0.0
    %2480 = vmatpush1.msra.mxu0 0.0
    %2481 = vmatprep.subr.mxu0 0.0
    %2482 = vmatpush1.msra.mxu0 0.0
    %2483 = vmatprep.subr.mxu0 0.0
    %2484 = vmatpush1.msra.mxu0 0.0
    %2485 = vmatprep.subr.mxu0 0.0
    %2486 = vmatpush1.msra.mxu0 0.0
    %2487 = vmatprep.subr.mxu0 0.0
    %2488 = vmatpush1.msra.mxu0 0.0
    %2489 = vmatprep.subr.mxu0 0.0
    %2490 = vmatpush1.msra.mxu0 %v2454
    %2491 = vmatprep.subr.mxu0 0.0
    %2492 = vmatpush1.msra.mxu0 %v2453
    %2493 = vmatprep.subr.mxu0 0.0
    %2494 = vmatpush1.msra.mxu0 %v2452
    %2495 = vmatprep.subr.mxu0 0.0
    %2496 = vmatpush1.msra.mxu0 %v2451
    %2497 = vmatprep.subr.mxu0 0.0
    %2498 = vmatpush2.msra.mxu0 0.0
    %2499 = vmatprep.subr.mxu0 0.0
    %2500 = vmatpush2.msra.mxu0 0.0
    %2501 = vmatprep.subr.mxu0 0.0
    %2502 = vmatpush2.msra.mxu0 0.0
    %2503 = vmatprep.subr.mxu0 0.0
    %2504 = vmatpush2.msra.mxu0 0.0
    %2505 = vmatprep.subr.mxu0 0.0
    %2506 = vmatpush2.msra.mxu0 0.0
    %2507 = vmatprep.subr.mxu0 0.0
    %2508 = vmatpush2.msra.mxu0 0.0
    %2509 = vmatprep.subr.mxu0 0.0
    %2510 = vmatpush2.msra.mxu0 0.0
    %2511 = vmatprep.subr.mxu0 0.0
    %2512 = vmatpush2.msra.mxu0 0.0
    %2513 = vmatprep.subr.mxu0 0.0
    %2514 = vmatpush2.msra.mxu0 0.0
    %2515 = vmatprep.subr.mxu0 0.0
    %2516 = vmatpush2.msra.mxu0 0.0
    %2517 = vmatprep.subr.mxu0 0.0
    %2518 = vmatpush2.msra.mxu0 0.0
    %2519 = vmatprep.subr.mxu0 0.0
    %2520 = vmatpush2.msra.mxu0 0.0
    %2521 = vmatprep.subr.mxu0 0.0
    %2522 = vmatpush2.msra.mxu0 0.0
    %2523 = vmatprep.subr.mxu0 0.0
    %2524 = vmatpush2.msra.mxu0 0.0
    %2525 = vmatprep.subr.mxu0 0.0
    %2526 = vmatpush2.msra.mxu0 0.0
    %2527 = vmatprep.subr.mxu0 0.0
    %2528 = vmatpush2.msra.mxu0 0.0
    %2529 = vmatprep.mubr.f32.mxu0 0.0
    %2530 = vmatmul.mubr.f32.gmra.mxu0 %v2463
    %v2531 = vpop.f32.mrf.mxu0
    %v2532 = vadd.f32 %v2460, %v2531
    %v2533 = vpop.f32.mrf.mxu0
    %2534 = vdwg.mxu0
    %v2535 = vtanh.pop %v2532
    %v2536 = vld [vmem:[%s18] sm:$0xff]
    %v2537 = vld [vmem:[%s18 + $0x8] sm:$0xff]
    %v2538 = vld [vmem:[%s18 + $0x10] sm:$0xff]
    %v2539 = vld [vmem:[%s18 + $0x18] sm:$0xff]
    %v2540 = vld [vmem:[%s19] sm:$0x1]
    %v2542 = vlaneseq
    %v2543 = vshrl.u32 %v2542, 7
    %v2544 = vsub.s32 0, %v2543
    %v2545 = vrot.slane %v2540, %v2544
    %v2548 = vsel %vm79, %v2535, 0
    %2550 = vmatprep.subr.mxu0 0.0
    %2551 = vmatpush1.msra.mxu0 0.0
    %2552 = vmatprep.subr.mxu0 0.0
    %2553 = vmatpush1.msra.mxu0 0.0
    %2554 = vmatprep.subr.mxu0 0.0
    %2555 = vmatpush1.msra.mxu0 0.0
    %2556 = vmatprep.subr.mxu0 0.0
    %2557 = vmatpush1.msra.mxu0 0.0
    %2558 = vmatprep.subr.mxu0 0.0
    %2559 = vmatpush1.msra.mxu0 0.0
    %2560 = vmatprep.subr.mxu0 0.0
    %2561 = vmatpush1.msra.mxu0 0.0
    %2562 = vmatprep.subr.mxu0 0.0
    %2563 = vmatpush1.msra.mxu0 0.0
    %2564 = vmatprep.subr.mxu0 0.0
    %2565 = vmatpush1.msra.mxu0 0.0
    %2566 = vmatprep.subr.mxu0 0.0
    %2567 = vmatpush1.msra.mxu0 0.0
    %2568 = vmatprep.subr.mxu0 0.0
    %2569 = vmatpush1.msra.mxu0 0.0
    %2570 = vmatprep.subr.mxu0 0.0
    %2571 = vmatpush1.msra.mxu0 0.0
    %2572 = vmatprep.subr.mxu0 0.0
    %2573 = vmatpush1.msra.mxu0 0.0
    %2574 = vmatprep.subr.mxu0 0.0
    %2575 = vmatpush1.msra.mxu0 %v2539
    %2576 = vmatprep.subr.mxu0 0.0
    %2577 = vmatpush1.msra.mxu0 %v2538
    %2578 = vmatprep.subr.mxu0 0.0
    %2579 = vmatpush1.msra.mxu0 %v2537
    %2580 = vmatprep.subr.mxu0 0.0
    %2581 = vmatpush1.msra.mxu0 %v2536
    %2582 = vmatprep.subr.mxu0 0.0
    %2583 = vmatpush2.msra.mxu0 0.0
    %2584 = vmatprep.subr.mxu0 0.0
    %2585 = vmatpush2.msra.mxu0 0.0
    %2586 = vmatprep.subr.mxu0 0.0
    %2587 = vmatpush2.msra.mxu0 0.0
    %2588 = vmatprep.subr.mxu0 0.0
    %2589 = vmatpush2.msra.mxu0 0.0
    %2590 = vmatprep.subr.mxu0 0.0
    %2591 = vmatpush2.msra.mxu0 0.0
    %2592 = vmatprep.subr.mxu0 0.0
    %2593 = vmatpush2.msra.mxu0 0.0
    %2594 = vmatprep.subr.mxu0 0.0
    %2595 = vmatpush2.msra.mxu0 0.0
    %2596 = vmatprep.subr.mxu0 0.0
    %2597 = vmatpush2.msra.mxu0 0.0
    %2598 = vmatprep.subr.mxu0 0.0
    %2599 = vmatpush2.msra.mxu0 0.0
    %2600 = vmatprep.subr.mxu0 0.0
    %2601 = vmatpush2.msra.mxu0 0.0
    %2602 = vmatprep.subr.mxu0 0.0
    %2603 = vmatpush2.msra.mxu0 0.0
    %2604 = vmatprep.subr.mxu0 0.0
    %2605 = vmatpush2.msra.mxu0 0.0
    %2606 = vmatprep.subr.mxu0 0.0
    %2607 = vmatpush2.msra.mxu0 0.0
    %2608 = vmatprep.subr.mxu0 0.0
    %2609 = vmatpush2.msra.mxu0 0.0
    %2610 = vmatprep.subr.mxu0 0.0
    %2611 = vmatpush2.msra.mxu0 0.0
    %2612 = vmatprep.subr.mxu0 0.0
    %2613 = vmatpush2.msra.mxu0 0.0
    %2614 = vmatprep.mubr.f32.mxu0 0.0
    %2615 = vmatmul.mubr.f32.gmra.mxu0 %v2548
    %v2616 = vpop.f32.mrf.mxu0
    %v2617 = vadd.f32 %v2545, %v2616
    %v2618 = vpop.f32.mrf.mxu0
    %2619 = vdwg.mxu0
    %v2620 = vmul.f32 %v2617, 0.5
    %v2621 = vtanh.pop %v2620
    %v2622 = vadd.f32 %v2621, 1.0
    %v2623 = vmul.f32 %v2622, 0.5
    %2624 = vst [vmem:[#allocation2] sm:$0x3] %v2623
    %v2625 = vld [vmem:[%s20] sm:$0xff]
    %v2626 = vld [vmem:[%s20 + $0x8] sm:$0xff]
    %v2627 = vld [vmem:[%s20 + $0x10] sm:$0xff]
    %v2628 = vld [vmem:[%s20 + $0x18] sm:$0xff]
    %v2629 = vld [vmem:[%s21] sm:$0x1]
    %v2631 = vlaneseq
    %v2632 = vshrl.u32 %v2631, 7
    %v2633 = vsub.s32 0, %v2632
    %v2634 = vrot.slane %v2629, %v2633
    %v2637 = vsel %vm79, %v2444, 0
    %v2639 = vsel %vm79, %v2445, 0
    %2641 = vmatprep.subr.mxu0 0.0
    %2642 = vmatpush1.msra.mxu0 0.0
    %2643 = vmatprep.subr.mxu0 0.0
    %2644 = vmatpush1.msra.mxu0 0.0
    %2645 = vmatprep.subr.mxu0 0.0
    %2646 = vmatpush1.msra.mxu0 0.0
    %2647 = vmatprep.subr.mxu0 0.0
    %2648 = vmatpush1.msra.mxu0 0.0
    %2649 = vmatprep.subr.mxu0 0.0
    %2650 = vmatpush1.msra.mxu0 0.0
    %2651 = vmatprep.subr.mxu0 0.0
    %2652 = vmatpush1.msra.mxu0 0.0
    %2653 = vmatprep.subr.mxu0 0.0
    %2654 = vmatpush1.msra.mxu0 0.0
    %2655 = vmatprep.subr.mxu0 0.0
    %2656 = vmatpush1.msra.mxu0 0.0
    %2657 = vmatprep.subr.mxu0 0.0
    %2658 = vmatpush1.msra.mxu0 0.0
    %2659 = vmatprep.subr.mxu0 0.0
    %2660 = vmatpush1.msra.mxu0 0.0
    %2661 = vmatprep.subr.mxu0 0.0
    %2662 = vmatpush1.msra.mxu0 0.0
    %2663 = vmatprep.subr.mxu0 0.0
    %2664 = vmatpush1.msra.mxu0 0.0
    %2665 = vmatprep.subr.mxu0 0.0
    %2666 = vmatpush1.msra.mxu0 %v2628
    %2667 = vmatprep.subr.mxu0 0.0
    %2668 = vmatpush1.msra.mxu0 %v2627
    %2669 = vmatprep.subr.mxu0 0.0
    %2670 = vmatpush1.msra.mxu0 %v2626
    %2671 = vmatprep.subr.mxu0 0.0
    %2672 = vmatpush1.msra.mxu0 %v2625
    %2673 = vmatprep.subr.mxu0 0.0
    %2674 = vmatpush2.msra.mxu0 0.0
    %2675 = vmatprep.subr.mxu0 0.0
    %2676 = vmatpush2.msra.mxu0 0.0
    %2677 = vmatprep.subr.mxu0 0.0
    %2678 = vmatpush2.msra.mxu0 0.0
    %2679 = vmatprep.subr.mxu0 0.0
    %2680 = vmatpush2.msra.mxu0 0.0
    %2681 = vmatprep.subr.mxu0 0.0
    %2682 = vmatpush2.msra.mxu0 0.0
    %2683 = vmatprep.subr.mxu0 0.0
    %2684 = vmatpush2.msra.mxu0 0.0
    %2685 = vmatprep.subr.mxu0 0.0
    %2686 = vmatpush2.msra.mxu0 0.0
    %2687 = vmatprep.subr.mxu0 0.0
    %2688 = vmatpush2.msra.mxu0 0.0
    %2689 = vmatprep.subr.mxu0 0.0
    %2690 = vmatpush2.msra.mxu0 0.0
    %2691 = vmatprep.subr.mxu0 0.0
    %2692 = vmatpush2.msra.mxu0 0.0
    %2693 = vmatprep.subr.mxu0 0.0
    %2694 = vmatpush2.msra.mxu0 0.0
    %2695 = vmatprep.subr.mxu0 0.0
    %2696 = vmatpush2.msra.mxu0 0.0
    %2697 = vmatprep.subr.mxu0 0.0
    %2698 = vmatpush2.msra.mxu0 0.0
    %2699 = vmatprep.subr.mxu0 0.0
    %2700 = vmatpush2.msra.mxu0 0.0
    %2701 = vmatprep.subr.mxu0 0.0
    %2702 = vmatpush2.msra.mxu0 0.0
    %2703 = vmatprep.subr.mxu0 0.0
    %2704 = vmatpush2.msra.mxu0 0.0
    %2705 = vmatprep.mubr.f32.mxu0 0.0
    %2706 = vmatmul.mubr.f32.gmra.mxu0 %v2637
    %v2707 = vpop.f32.mrf.mxu0
    %v2708 = vadd.f32 %v2634, %v2707
    %v2709 = vpop.f32.mrf.mxu0
    %2710 = vmatprep.mubr.f32.mxu0 0.0
    %2711 = vmatmul.mubr.f32.gmra.mxu0 %v2639
    %v2712 = vpop.f32.mrf.mxu0
    %v2713 = vadd.f32 %v2634, %v2712
    %v2714 = vpop.f32.mrf.mxu0
    %2715 = vdwg.mxu0
    %2716 = vmax.xlane.f32.xlu0 %v2708
    %v2717 = vpop.xlane.xlu0 %2716
    %2718 = vmax.xlane.f32.xlu0 %v2713
    %v2719 = vpop.xlane.xlu0 %2718
    %v2720 = vsub.f32 %v2708, %v2717
    %v2721 = vsub.f32 %v2713, %v2719
    %v2722 = vmul.f32 %v2720, 1.442695
    %v2723 = vpow.pop %v2722
    %v2724 = vmul.f32 %v2721, 1.442695
    %v2725 = vpow.pop %v2724
    %2726 = vadd.xlane.f32.xlu0 %v2723
    %v2727 = vpop.xlane.xlu0 %2726
    %2728 = vadd.xlane.f32.xlu0 %v2725
    %v2729 = vpop.xlane.xlu0 %2728
    %v2730 = vrcp.pop %v2727
    %v2731 = vmul.f32 %v2723, %v2730
    %v2732 = vrcp.pop %v2729
    %v2733 = vmul.f32 %v2725, %v2732
    %2734 = vst [vmem:[%s23] sm:$0xff] %v2731
    %2735 = vst [vmem:[%s23 + $0x8] sm:$0xff] %v2733
    // Predicated region
    $region90: #{muti_joint_forward.1} parent=1 // pred_check
      _
    $region91: #{muti_joint_forward.1} parent=1 // pred_check_branch
      %2737 = sbr.rel (0) target = $region93
    $region92: #{muti_joint_forward.1} parent=1 // pred_region
      %s2739 = ssub.s32 32, 32
      %2740 = vsyncadd [#allocation3], %s2739
      %s2742 = sshll.u32 [#allocation2], 4
      %s2743 = int_to_ptr.vmem [resolvable:$true] %s2742
      %2745 = dma.vmem_to_hbm [thread:$0]  %s2743, 32, %s22, [#allocation3]
    $region93: #{muti_joint_forward.1} parent=1 // pred_fallthru
      _
    // Predicated region
    $region94: #{muti_joint_forward.1} parent=1 // pred_check
      _
    $region95: #{muti_joint_forward.1} parent=1 // pred_check_branch
      %2747 = sbr.rel (0) target = $region97
    $region96: #{muti_joint_forward.1} parent=1 // pred_region
      _
    $region97: #{muti_joint_forward.1} parent=1 // pred_fallthru
      _
    // Predicated region
    $region98: #{muti_joint_forward.1} parent=1 // pred_check
      _
    $region99: #{muti_joint_forward.1} parent=1 // pred_check_branch
      %2749 = sbr.rel (0) target = $region101
    $region100: #{muti_joint_forward.1} parent=1 // pred_region
      %2750 = dma.done [#allocation3], 32
    $region101: #{muti_joint_forward.1} parent=1 // pred_fallthru
      _
    // Predicated region
    $region102: #{muti_joint_forward.1} parent=1 // pred_check
      _
    $region103: #{muti_joint_forward.1} parent=1 // pred_check_branch
      %2752 = sbr.rel (0) target = $region105
    $region104: #{muti_joint_forward.1} parent=1 // pred_region
      _
    $region105: #{muti_joint_forward.1} parent=1 // pred_fallthru
      _
    %2753 = vsyncpa [#allocation3], 1

</llo_original>
